<compile_context>
chip_gen: v7x
topology: tpu7x:2x2x1
jax: 0.10.0
libtpu: 0.0.40
codegen_flags: <defaults>
</compile_context>

<pallas_src>
import jax
import jax.numpy as jnp
from jax.experimental import pallas as pl
from jax.experimental.pallas import tpu as pltpu

NUM_CLASSES = 12
OUT_LANES = 128          # lane-dense padded class dim for the final store
BN_EPS = 1e-5


def _round_up(a, b):
    return ((a + b - 1) // b) * b


# --------------------------------------------------------------------------
# Pallas kernel: TN whole samples per grid step, everything else resident.
# --------------------------------------------------------------------------
def cnn_net_v1_kernel(x_ref,                    # (TN*L1, Cin) f32  NLC rows, 2 zero rows/sample
                      w1_ref, sh1_ref,          # (3*Cin, 64)   bf16 / (1, 64)  f32
                      w2_ref, sh2_ref,          # (3*64, 128)   bf16 / (1, 128) f32
                      w3_ref, sh3_ref,          # (3*128, 256)  bf16 / (1, 256) f32
                      wb_ref, shb_ref,          # (L_pool*256, 64) bf16 / (1, 64) f32
                      wo_ref, bo_ref,           # (64, 128)     bf16 / (1, 128) f32
                      nf_ref, nl_ref,           # (TN*L1, 1) f32 per-sample boundary masks
                      out_ref):                 # (TN, 128) f32
    f32, bf16 = jnp.float32, jnp.bfloat16
    TN = out_ref.shape[0]
    M, Cin = x_ref.shape
    L1 = M // TN
    C3 = w3_ref.shape[1]
    L_pool = wb_ref.shape[0] // C3

    def shift_rows(v, s):
        # out[r] = v[(r - s) % M]  (jnp.roll semantics along the row/sublane axis).
        s = s % v.shape[0]
        if s == 0:
            return v
        return jnp.concatenate([v[-s:, :], v[:-s, :]], axis=0)

    # ---- cnn1 + bncnn1 + relu --------------------------------------------------------
    # padding=2 is encoded by the two zero rows the wrapper appends to every sample, so
    # the cyclic row shifts bring in zeros at every sample boundary: no mask needed.
    x = x_ref[...]
    acc = jnp.dot(shift_rows(x, 2).astype(bf16), w1_ref[0:Cin, :],
                  preferred_element_type=f32)
    acc = acc + jnp.dot(shift_rows(x, 1).astype(bf16), w1_ref[Cin:2 * Cin, :],
                        preferred_element_type=f32)
    acc = acc + jnp.dot(x.astype(bf16), w1_ref[2 * Cin:3 * Cin, :],
                        preferred_element_type=f32)
    h = jnp.maximum(acc + sh1_ref[...], 0.0)                       # (M, 64) f32

    nf = nf_ref[...]          # 0.0 on the first row of each sample, else 1.0
    nl = nl_ref[...]          # 0.0 on the last  row of each sample, else 1.0

    # ---- cnn2 / cnn3 (padding=1) + bn + relu: 3-tap row-shifted matmuls ---------------
    def conv_k3_pad1(h, w_ref, sh_ref):
        C = h.shape[-1]
        left = shift_rows(h, 1) * nf                               # h[l-1], zeroed at l==0
        right = shift_rows(h, -1) * nl                             # h[l+1], zeroed at l==L1-1
        acc = jnp.dot(left.astype(bf16), w_ref[0:C, :], preferred_element_type=f32)
        acc = acc + jnp.dot(h.astype(bf16), w_ref[C:2 * C, :],
                            preferred_element_type=f32)
        acc = acc + jnp.dot(right.astype(bf16), w_ref[2 * C:3 * C, :],
                            preferred_element_type=f32)
        return jnp.maximum(acc + sh_ref[...], 0.0)

    h = conv_k3_pad1(h, w2_ref, sh2_ref)                           # (M, 128)
    h = conv_k3_pad1(h, w3_ref, sh3_ref)                           # (M, 256)

    # ---- avgpool(3) + flatten + linbout + bnbout + relu ------------------------------
    # pool sum stays f32; /3 and BN scale are folded into wb; per-pool partial matmuls
    # against static weight slices avoid any flatten concat.
    h3d = h.reshape(TN, L1, C3)
    zb = jnp.zeros((TN, wb_ref.shape[1]), f32)
    for p in range(L_pool):
        pool_p = h3d[:, 3 * p, :] + h3d[:, 3 * p + 1, :] + h3d[:, 3 * p + 2, :]
        zb = zb + jnp.dot(pool_p.astype(bf16), wb_ref[p * C3:(p + 1) * C3, :],
                          preferred_element_type=f32)
    zb = jnp.maximum(zb + shb_ref[...], 0.0)                       # (TN, 64)
    # TODO(synk): Dropout(0.5) / training-mode BatchNorm (RNG mask, batch stats) not
    # implemented; eval-mode semantics used.

    # ---- linout + softmax over 128 padded classes, one lane-dense full-block store ----
    logits = jnp.dot(zb.astype(bf16), wo_ref[...],
                     preferred_element_type=f32) + bo_ref[...]     # (TN, 128)
    logits = logits - jnp.max(logits, axis=-1, keepdims=True)
    e = jnp.exp(logits)                                            # padded classes -> 0
    out_ref[...] = e * pl.reciprocal(jnp.sum(e, axis=-1, keepdims=True), approx=False)


# --------------------------------------------------------------------------
# Parameter setup / re-layout (glue)
# --------------------------------------------------------------------------
def make_params(key, time_length):
    """Deterministic synthetic parameters with the module's shapes (PyTorch layout)."""
    ks = jax.random.split(key, 14)
    s = 0.1

    def nrm(k, shape):
        return s * jax.random.normal(k, shape, jnp.float32)

    def bn(k, c):
        k1, k2, k3, k4 = jax.random.split(k, 4)
        gamma = 1.0 + 0.1 * jax.random.normal(k1, (c,), jnp.float32)
        beta = 0.1 * jax.random.normal(k2, (c,), jnp.float32)
        rmean = 0.1 * jax.random.normal(k3, (c,), jnp.float32)
        rvar = 1.0 + 0.1 * jax.random.uniform(k4, (c,), jnp.float32)
        return (gamma, beta, rmean, rvar)

    return dict(
        w1=nrm(ks[0], (64, time_length, 3)), b1=nrm(ks[1], (64,)),
        w2=nrm(ks[2], (128, 64, 3)),         b2=nrm(ks[3], (128,)),
        w3=nrm(ks[4], (256, 128, 3)),        b3=nrm(ks[5], (256,)),
        wb=nrm(ks[6], (64, 512)),            bb=nrm(ks[7], (64,)),
        wo=nrm(ks[8], (12, 64)),             bo=nrm(ks[9], (12,)),
        bn1=bn(ks[10], 64), bn2=bn(ks[11], 128),
        bn3=bn(ks[12], 256), bnb=bn(ks[13], 64),
    )


def pack_kernel_params(P, L_pool):
    """Fold BN (eval) + biases + avgpool/3 into weights/shifts; bf16 weights, f32 shifts."""
    def bn_fold(stats, b):
        g, beta, rm, rv = stats
        sc = g / jnp.sqrt(rv + BN_EPS)
        return sc, (b - rm) * sc + beta

    sc1, sh1 = bn_fold(P['bn1'], P['b1'])
    sc2, sh2 = bn_fold(P['bn2'], P['b2'])
    sc3, sh3 = bn_fold(P['bn3'], P['b3'])
    scb, shb = bn_fold(P['bnb'], P['bb'])

    def conv_w(w, sc):
        # torch (Cout, Cin, K) -> (K*Cin, Cout); row = k*Cin + c (tap-major, matching the
        # kernel's w_ref[k*C:(k+1)*C] slices), BN scale folded into output channels.
        K, Cin, Cout = w.shape[2], w.shape[1], w.shape[0]
        wk = jnp.transpose(w, (2, 1, 0)).reshape(K * Cin, Cout)
        return (wk * sc[None, :]).astype(jnp.bfloat16)

    w1 = conv_w(P['w1'], sc1)
    w2 = conv_w(P['w2'], sc2)
    w3 = conv_w(P['w3'], sc3)

    C3 = P['w3'].shape[0]                                   # 256
    # torch.flatten order is flat[c*L_pool + p]; the kernel's pool-p weight slab is rows
    # p*C3 + c; the avgpool /3 and the BN scale are folded into the weight.
    wb = jnp.transpose(P['wb'].reshape(P['wb'].shape[0], C3, L_pool), (2, 1, 0))
    wb = (wb.reshape(L_pool * C3, -1) * (scb[None, :] / 3.0)).astype(jnp.bfloat16)

    # linout padded to a lane-dense 128-class tile: zero weights + -1e30 (finite) bias on
    # the 116 padding classes -> exp() == 0, softmax over the 12 real classes is exact.
    Cb = P['wo'].shape[1]                                   # 64
    wo = jnp.zeros((Cb, OUT_LANES), jnp.float32).at[:, :NUM_CLASSES].set(P['wo'].T)
    bo = jnp.full((OUT_LANES,), -1e30, jnp.float32).at[:NUM_CLASSES].set(P['bo'])

    return [w1, sh1[None, :], w2, sh2[None, :], w3, sh3[None, :],
            wb, shb[None, :], wo.astype(jnp.bfloat16), bo[None, :]]


def cnn_net_v1_forward(x, P, *, min_rows=256):
    """x: (N, C_in=time_length, L0) — PyTorch Conv1d NCL layout.  Returns (N, 12)."""
    N, Cin, L0 = x.shape
    K = P['w1'].shape[2]                                    # 3
    L1 = L0 + 2 * 2 - K + 1                                 # conv1 (padding=2) output length
    L_pool = L1 // 3                                        # AvgPool1d(3)
    C3 = P['w3'].shape[0]
    assert C3 * L_pool == P['wb'].shape[1], "flatten size must match Linear(512, 64)"
    kparams = pack_kernel_params(P, L_pool)

    # Batch tile: TN samples so the conv matmuls see >= min_rows MXU rows per grid step
    # (256 fills the 256-wide MXU of v6e/v7x; 128 is already full width on v5e), and TN
    # is a multiple of 8 so the (TN, 128) output block is sublane-aligned.
    TN = _round_up(-(-min_rows // L1), 8)
    N_pad = _round_up(max(N, 1), TN)
    num_tiles = N_pad // TN
    M = TN * L1

    # Wrapper-side layout plumbing only: NCL -> NLC; the two zero rows appended per
    # sample encode conv1's padding=2 for the in-kernel row-shift taps; batch padded to
    # whole tiles (padded samples are zero and sliced off below).
    x_nlc = jnp.transpose(x.astype(jnp.float32), (0, 2, 1))                # (N, L0, Cin)
    x_nlc = jnp.pad(x_nlc, ((0, N_pad - N), (0, L1 - L0), (0, 0)))
    x_rows = x_nlc.reshape(N_pad * L1, Cin)

    pos = jnp.arange(M, dtype=jnp.int32) % L1
    not_first = (pos != 0).astype(jnp.float32)[:, None]                    # (M, 1)
    not_last = (pos != L1 - 1).astype(jnp.float32)[:, None]                # (M, 1)

    def resident(shape):
        # constant block index -> buffer stays resident in VMEM across grid steps
        return pl.BlockSpec(shape, lambda i: (0,) * len(shape))

    out = pl.pallas_call(
        cnn_net_v1_kernel,
        out_shape=jax.ShapeDtypeStruct((N_pad, OUT_LANES), jnp.float32),
        grid=(num_tiles,),
        in_specs=([pl.BlockSpec((M, Cin), lambda i: (i, 0))]
                  + [resident(p.shape) for p in kparams]
                  + [resident((M, 1)), resident((M, 1))]),
        out_specs=pl.BlockSpec((TN, OUT_LANES), lambda i: (i, 0)),
        compiler_params=pltpu.CompilerParams(
            # batch tiles are independent -> megacore/2-TC sharding on v7x
            dimension_semantics=("parallel",),
            # per-tile footprint (double-buffered (M,Cin) input + resident weights +
            # temps) is ~1.5 MiB, far under v7x's 32 MiB scoped / 64 MiB physical VMEM.
            vmem_limit_bytes=32 * 1024 * 1024,
        ),
    )(x_rows, *kparams, not_first, not_last)
    return out[:N, :NUM_CLASSES]


# --------------------------------------------------------------------------
# Pure-JAX reference (mirrors the PyTorch forward, NCL layout, eval mode)
# --------------------------------------------------------------------------
def reference_forward(x, P):
    def conv1d(x, w, b, pad):
        Nb, Ci, L = x.shape
        Co, _, K = w.shape
        xp = jnp.pad(x, ((0, 0), (0, 0), (pad, pad)))
        Lo = L + 2 * pad - K + 1
        out = jnp.zeros((Nb, Co, Lo), jnp.float32)
        for k in range(K):
            out = out + jnp.einsum('ncl,oc->nol', xp[:, :, k:k + Lo], w[:, :, k])
        return out + b[None, :, None]

    def bn(x, stats):
        g, b, rm, rv = stats
        if x.ndim == 3:
            g, b, rm, rv = (t[None, :, None] for t in (g, b, rm, rv))
        else:
            g, b, rm, rv = (t[None, :] for t in (g, b, rm, rv))
        return (x - rm) / jnp.sqrt(rv + BN_EPS) * g + b

    h = jax.nn.relu(bn(conv1d(x, P['w1'], P['b1'], 2), P['bn1']))
    h = jax.nn.relu(bn(conv1d(h, P['w2'], P['b2'], 1), P['bn2']))
    h = jax.nn.relu(bn(conv1d(h, P['w3'], P['b3'], 1), P['bn3']))
    Nb, C, L = h.shape
    Lp = L // 3
    h = h[:, :, :Lp * 3].reshape(Nb, C, Lp, 3).mean(-1)               # AvgPool1d(3)
    flat = h.reshape(Nb, C * Lp)                                      # torch.flatten(x, 1)
    z = flat @ P['wb'].T + P['bb']
    z = jax.nn.relu(bn(z, P['bnb']))                                  # dropout: eval identity
    y = z @ P['wo'].T + P['bo']
    return jax.nn.softmax(y, axis=1)


if __name__ == "__main__":
    TIME_LENGTH = 16   # constructor arg (module default is 200) -> cnn1 in_channels
    L0 = 6             # spatial length so flatten == 512, matching Linear(512, 64)
    N = 40             # small batch; pads to 2 tiles of 32 samples -> grid=(2,)

    root = jax.random.PRNGKey(0)
    k_params, k_x = jax.random.split(root)
    params = make_params(k_params, TIME_LENGTH)
    x = jax.random.normal(k_x, (N, TIME_LENGTH, L0), jnp.float32)     # PyTorch NCL layout

    out = jax.block_until_ready(cnn_net_v1_forward(x, params))
    ref = reference_forward(x, params)

    assert out.shape == (N, NUM_CLASSES)
    assert bool(jnp.allclose(jnp.sum(out, axis=1), 1.0, atol=1e-3))
    assert bool(jnp.allclose(out, ref, atol=2e-2)), (out, ref)
    print("KERNEL_OK")
</pallas_src>

<mosaic_0001>
module attributes {stable_mosaic.version = 11 : i64} {
  func.func @cnn_net_v1_kernel(%arg0: i32, %arg1: memref<256x16xf32, #tpu.memory_space<vmem>>, %arg2: memref<48x64xbf16, #tpu.memory_space<vmem>>, %arg3: memref<1x64xf32, #tpu.memory_space<vmem>>, %arg4: memref<192x128xbf16, #tpu.memory_space<vmem>>, %arg5: memref<1x128xf32, #tpu.memory_space<vmem>>, %arg6: memref<384x256xbf16, #tpu.memory_space<vmem>>, %arg7: memref<1x256xf32, #tpu.memory_space<vmem>>, %arg8: memref<512x64xbf16, #tpu.memory_space<vmem>>, %arg9: memref<1x64xf32, #tpu.memory_space<vmem>>, %arg10: memref<64x128xbf16, #tpu.memory_space<vmem>>, %arg11: memref<1x128xf32, #tpu.memory_space<vmem>>, %arg12: memref<256x1xf32, #tpu.memory_space<vmem>>, %arg13: memref<256x1xf32, #tpu.memory_space<vmem>>, %arg14: memref<32x128xf32, #tpu.memory_space<vmem>>) attributes {dimension_semantics = [#tpu.dimension_semantics<parallel>], iteration_bounds = array<i64: 2>, scalar_prefetch = 0 : i64, scratch_operands = 0 : i64, tpu.core_type = #tpu.core_type<tc>, window_params = [{transform_indices = @transform_0, window_bounds = array<i64: 256, 16>}, {pipeline_mode = #tpu.pipeline_mode<synchronous>, transform_indices = @transform_1, window_bounds = array<i64: 48, 64>}, {pipeline_mode = #tpu.pipeline_mode<synchronous>, transform_indices = @transform_2, window_bounds = array<i64: 1, 64>}, {pipeline_mode = #tpu.pipeline_mode<synchronous>, transform_indices = @transform_3, window_bounds = array<i64: 192, 128>}, {pipeline_mode = #tpu.pipeline_mode<synchronous>, transform_indices = @transform_4, window_bounds = array<i64: 1, 128>}, {pipeline_mode = #tpu.pipeline_mode<synchronous>, transform_indices = @transform_5, window_bounds = array<i64: 384, 256>}, {pipeline_mode = #tpu.pipeline_mode<synchronous>, transform_indices = @transform_6, window_bounds = array<i64: 1, 256>}, {pipeline_mode = #tpu.pipeline_mode<synchronous>, transform_indices = @transform_7, window_bounds = array<i64: 512, 64>}, {pipeline_mode = #tpu.pipeline_mode<synchronous>, transform_indices = @transform_8, window_bounds = array<i64: 1, 64>}, {pipeline_mode = #tpu.pipeline_mode<synchronous>, transform_indices = @transform_9, window_bounds = array<i64: 64, 128>}, {pipeline_mode = #tpu.pipeline_mode<synchronous>, transform_indices = @transform_10, window_bounds = array<i64: 1, 128>}, {pipeline_mode = #tpu.pipeline_mode<synchronous>, transform_indices = @transform_11, window_bounds = array<i64: 256, 1>}, {pipeline_mode = #tpu.pipeline_mode<synchronous>, transform_indices = @transform_12, window_bounds = array<i64: 256, 1>}, {transform_indices = @transform_13, window_bounds = array<i64: 32, 128>}]} {
    %c0 = arith.constant 0 : index
    %c0_0 = arith.constant 0 : index
    %0 = vector.load %arg1[%c0, %c0_0] : memref<256x16xf32, #tpu.memory_space<vmem>>, vector<256x16xf32>
    %1 = vector.extract_strided_slice %0 {offsets = [254, 0], sizes = [2, 16], strides = [1, 1]} : vector<256x16xf32> to vector<2x16xf32>
    %2 = vector.extract_strided_slice %0 {offsets = [0, 0], sizes = [254, 16], strides = [1, 1]} : vector<256x16xf32> to vector<254x16xf32>
    %3 = tpu.concatenate %1, %2 in 0 : vector<2x16xf32>, vector<254x16xf32> -> vector<256x16xf32>
    %4 = arith.truncf %3 : vector<256x16xf32> to vector<256x16xbf16>
    %c0_1 = arith.constant 0 : index
    %c0_2 = arith.constant 0 : index
    %5 = vector.load %arg2[%c0_1, %c0_2] : memref<48x64xbf16, #tpu.memory_space<vmem>>, vector<16x64xbf16>
    %cst = arith.constant dense<0.000000e+00> : vector<256x64xf32>
    %6 = tpu.matmul %4, %5, %cst {dimension_numbers = #tpu.dot_dimension_numbers<[1], [0], [0], [1], [0, 0, 1, 1], [], []>} : vector<256x16xbf16>, vector<16x64xbf16>, vector<256x64xf32> -> vector<256x64xf32>
    %7 = vector.extract_strided_slice %0 {offsets = [255, 0], sizes = [1, 16], strides = [1, 1]} : vector<256x16xf32> to vector<1x16xf32>
    %8 = vector.extract_strided_slice %0 {offsets = [0, 0], sizes = [255, 16], strides = [1, 1]} : vector<256x16xf32> to vector<255x16xf32>
    %9 = tpu.concatenate %7, %8 in 0 : vector<1x16xf32>, vector<255x16xf32> -> vector<256x16xf32>
    %10 = arith.truncf %9 : vector<256x16xf32> to vector<256x16xbf16>
    %c16 = arith.constant 16 : index
    %c0_3 = arith.constant 0 : index
    %11 = vector.load %arg2[%c16, %c0_3] : memref<48x64xbf16, #tpu.memory_space<vmem>>, vector<16x64xbf16>
    %cst_4 = arith.constant dense<0.000000e+00> : vector<256x64xf32>
    %12 = tpu.matmul %10, %11, %cst_4 {dimension_numbers = #tpu.dot_dimension_numbers<[1], [0], [0], [1], [0, 0, 1, 1], [], []>} : vector<256x16xbf16>, vector<16x64xbf16>, vector<256x64xf32> -> vector<256x64xf32>
    %13 = arith.addf %6, %12 : vector<256x64xf32>
    %14 = arith.truncf %0 : vector<256x16xf32> to vector<256x16xbf16>
    %c32 = arith.constant 32 : index
    %c0_5 = arith.constant 0 : index
    %15 = vector.load %arg2[%c32, %c0_5] : memref<48x64xbf16, #tpu.memory_space<vmem>>, vector<16x64xbf16>
    %cst_6 = arith.constant dense<0.000000e+00> : vector<256x64xf32>
    %16 = tpu.matmul %14, %15, %cst_6 {dimension_numbers = #tpu.dot_dimension_numbers<[1], [0], [0], [1], [0, 0, 1, 1], [], []>} : vector<256x16xbf16>, vector<16x64xbf16>, vector<256x64xf32> -> vector<256x64xf32>
    %17 = arith.addf %13, %16 : vector<256x64xf32>
    %c0_7 = arith.constant 0 : index
    %c0_8 = arith.constant 0 : index
    %18 = vector.load %arg3[%c0_7, %c0_8] : memref<1x64xf32, #tpu.memory_space<vmem>>, vector<1x64xf32>
    %19 = vector.broadcast %18 : vector<1x64xf32> to vector<256x64xf32>
    %20 = arith.addf %17, %19 : vector<256x64xf32>
    %cst_9 = arith.constant 0.000000e+00 : f32
    %21 = vector.broadcast %cst_9 : f32 to vector<256x64xf32>
    %22 = arith.maximumf %20, %21 : vector<256x64xf32>
    %c0_10 = arith.constant 0 : index
    %c0_11 = arith.constant 0 : index
    %23 = vector.load %arg12[%c0_10, %c0_11] : memref<256x1xf32, #tpu.memory_space<vmem>>, vector<256x1xf32>
    %c0_12 = arith.constant 0 : index
    %c0_13 = arith.constant 0 : index
    %24 = vector.load %arg13[%c0_12, %c0_13] : memref<256x1xf32, #tpu.memory_space<vmem>>, vector<256x1xf32>
    %25 = vector.extract_strided_slice %22 {offsets = [255, 0], sizes = [1, 64], strides = [1, 1]} : vector<256x64xf32> to vector<1x64xf32>
    %26 = vector.extract_strided_slice %22 {offsets = [0, 0], sizes = [255, 64], strides = [1, 1]} : vector<256x64xf32> to vector<255x64xf32>
    %27 = tpu.concatenate %25, %26 in 0 : vector<1x64xf32>, vector<255x64xf32> -> vector<256x64xf32>
    %28 = vector.broadcast %23 : vector<256x1xf32> to vector<256x64xf32>
    %29 = arith.mulf %27, %28 : vector<256x64xf32>
    %30 = vector.extract_strided_slice %22 {offsets = [1, 0], sizes = [255, 64], strides = [1, 1]} : vector<256x64xf32> to vector<255x64xf32>
    %31 = vector.extract_strided_slice %22 {offsets = [0, 0], sizes = [1, 64], strides = [1, 1]} : vector<256x64xf32> to vector<1x64xf32>
    %32 = tpu.concatenate %30, %31 in 0 : vector<255x64xf32>, vector<1x64xf32> -> vector<256x64xf32>
    %33 = vector.broadcast %24 : vector<256x1xf32> to vector<256x64xf32>
    %34 = arith.mulf %32, %33 : vector<256x64xf32>
    %35 = arith.truncf %29 : vector<256x64xf32> to vector<256x64xbf16>
    %c0_14 = arith.constant 0 : index
    %c0_15 = arith.constant 0 : index
    %36 = vector.load %arg4[%c0_14, %c0_15] : memref<192x128xbf16, #tpu.memory_space<vmem>>, vector<64x128xbf16>
    %cst_16 = arith.constant dense<0.000000e+00> : vector<256x128xf32>
    %37 = tpu.matmul %35, %36, %cst_16 {dimension_numbers = #tpu.dot_dimension_numbers<[1], [0], [0], [1], [0, 0, 1, 1], [], []>} : vector<256x64xbf16>, vector<64x128xbf16>, vector<256x128xf32> -> vector<256x128xf32>
    %38 = arith.truncf %22 : vector<256x64xf32> to vector<256x64xbf16>
    %c64 = arith.constant 64 : index
    %c0_17 = arith.constant 0 : index
    %39 = vector.load %arg4[%c64, %c0_17] : memref<192x128xbf16, #tpu.memory_space<vmem>>, vector<64x128xbf16>
    %cst_18 = arith.constant dense<0.000000e+00> : vector<256x128xf32>
    %40 = tpu.matmul %38, %39, %cst_18 {dimension_numbers = #tpu.dot_dimension_numbers<[1], [0], [0], [1], [0, 0, 1, 1], [], []>} : vector<256x64xbf16>, vector<64x128xbf16>, vector<256x128xf32> -> vector<256x128xf32>
    %41 = arith.addf %37, %40 : vector<256x128xf32>
    %42 = arith.truncf %34 : vector<256x64xf32> to vector<256x64xbf16>
    %c128 = arith.constant 128 : index
    %c0_19 = arith.constant 0 : index
    %43 = vector.load %arg4[%c128, %c0_19] : memref<192x128xbf16, #tpu.memory_space<vmem>>, vector<64x128xbf16>
    %cst_20 = arith.constant dense<0.000000e+00> : vector<256x128xf32>
    %44 = tpu.matmul %42, %43, %cst_20 {dimension_numbers = #tpu.dot_dimension_numbers<[1], [0], [0], [1], [0, 0, 1, 1], [], []>} : vector<256x64xbf16>, vector<64x128xbf16>, vector<256x128xf32> -> vector<256x128xf32>
    %45 = arith.addf %41, %44 : vector<256x128xf32>
    %c0_21 = arith.constant 0 : index
    %c0_22 = arith.constant 0 : index
    %46 = vector.load %arg5[%c0_21, %c0_22] : memref<1x128xf32, #tpu.memory_space<vmem>>, vector<1x128xf32>
    %47 = vector.broadcast %46 : vector<1x128xf32> to vector<256x128xf32>
    %48 = arith.addf %45, %47 : vector<256x128xf32>
    %cst_23 = arith.constant 0.000000e+00 : f32
    %49 = vector.broadcast %cst_23 : f32 to vector<256x128xf32>
    %50 = arith.maximumf %48, %49 : vector<256x128xf32>
    %51 = vector.extract_strided_slice %50 {offsets = [255, 0], sizes = [1, 128], strides = [1, 1]} : vector<256x128xf32> to vector<1x128xf32>
    %52 = vector.extract_strided_slice %50 {offsets = [0, 0], sizes = [255, 128], strides = [1, 1]} : vector<256x128xf32> to vector<255x128xf32>
    %53 = tpu.concatenate %51, %52 in 0 : vector<1x128xf32>, vector<255x128xf32> -> vector<256x128xf32>
    %54 = vector.broadcast %23 : vector<256x1xf32> to vector<256x128xf32>
    %55 = arith.mulf %53, %54 : vector<256x128xf32>
    %56 = vector.extract_strided_slice %50 {offsets = [1, 0], sizes = [255, 128], strides = [1, 1]} : vector<256x128xf32> to vector<255x128xf32>
    %57 = vector.extract_strided_slice %50 {offsets = [0, 0], sizes = [1, 128], strides = [1, 1]} : vector<256x128xf32> to vector<1x128xf32>
    %58 = tpu.concatenate %56, %57 in 0 : vector<255x128xf32>, vector<1x128xf32> -> vector<256x128xf32>
    %59 = vector.broadcast %24 : vector<256x1xf32> to vector<256x128xf32>
    %60 = arith.mulf %58, %59 : vector<256x128xf32>
    %61 = arith.truncf %55 : vector<256x128xf32> to vector<256x128xbf16>
    %c0_24 = arith.constant 0 : index
    %c0_25 = arith.constant 0 : index
    %62 = vector.load %arg6[%c0_24, %c0_25] : memref<384x256xbf16, #tpu.memory_space<vmem>>, vector<128x256xbf16>
    %cst_26 = arith.constant dense<0.000000e+00> : vector<256x256xf32>
    %63 = tpu.matmul %61, %62, %cst_26 {dimension_numbers = #tpu.dot_dimension_numbers<[1], [0], [0], [1], [0, 0, 1, 1], [], []>} : vector<256x128xbf16>, vector<128x256xbf16>, vector<256x256xf32> -> vector<256x256xf32>
    %64 = arith.truncf %50 : vector<256x128xf32> to vector<256x128xbf16>
    %c128_27 = arith.constant 128 : index
    %c0_28 = arith.constant 0 : index
    %65 = vector.load %arg6[%c128_27, %c0_28] : memref<384x256xbf16, #tpu.memory_space<vmem>>, vector<128x256xbf16>
    %cst_29 = arith.constant dense<0.000000e+00> : vector<256x256xf32>
    %66 = tpu.matmul %64, %65, %cst_29 {dimension_numbers = #tpu.dot_dimension_numbers<[1], [0], [0], [1], [0, 0, 1, 1], [], []>} : vector<256x128xbf16>, vector<128x256xbf16>, vector<256x256xf32> -> vector<256x256xf32>
    %67 = arith.addf %63, %66 : vector<256x256xf32>
    %68 = arith.truncf %60 : vector<256x128xf32> to vector<256x128xbf16>
    %c256 = arith.constant 256 : index
    %c0_30 = arith.constant 0 : index
    %69 = vector.load %arg6[%c256, %c0_30] : memref<384x256xbf16, #tpu.memory_space<vmem>>, vector<128x256xbf16>
    %cst_31 = arith.constant dense<0.000000e+00> : vector<256x256xf32>
    %70 = tpu.matmul %68, %69, %cst_31 {dimension_numbers = #tpu.dot_dimension_numbers<[1], [0], [0], [1], [0, 0, 1, 1], [], []>} : vector<256x128xbf16>, vector<128x256xbf16>, vector<256x256xf32> -> vector<256x256xf32>
    %71 = arith.addf %67, %70 : vector<256x256xf32>
    %c0_32 = arith.constant 0 : index
    %c0_33 = arith.constant 0 : index
    %72 = vector.load %arg7[%c0_32, %c0_33] : memref<1x256xf32, #tpu.memory_space<vmem>>, vector<1x256xf32>
    %73 = vector.broadcast %72 : vector<1x256xf32> to vector<256x256xf32>
    %74 = arith.addf %71, %73 : vector<256x256xf32>
    %cst_34 = arith.constant 0.000000e+00 : f32
    %75 = vector.broadcast %cst_34 : f32 to vector<256x256xf32>
    %76 = arith.maximumf %74, %75 : vector<256x256xf32>
    %77 = vector.shape_cast %76 : vector<256x256xf32> to vector<32x8x256xf32>
    %cst_35 = arith.constant 0.000000e+00 : f32
    %78 = vector.broadcast %cst_35 : f32 to vector<32x64xf32>
    %79 = vector.extract_strided_slice %77 {offsets = [0, 0, 0], sizes = [32, 1, 256], strides = [1, 1, 1]} : vector<32x8x256xf32> to vector<32x1x256xf32>
    %80 = vector.shape_cast %79 : vector<32x1x256xf32> to vector<32x256xf32>
    %81 = vector.extract_strided_slice %77 {offsets = [0, 1, 0], sizes = [32, 1, 256], strides = [1, 1, 1]} : vector<32x8x256xf32> to vector<32x1x256xf32>
    %82 = vector.shape_cast %81 : vector<32x1x256xf32> to vector<32x256xf32>
    %83 = arith.addf %80, %82 : vector<32x256xf32>
    %84 = vector.extract_strided_slice %77 {offsets = [0, 2, 0], sizes = [32, 1, 256], strides = [1, 1, 1]} : vector<32x8x256xf32> to vector<32x1x256xf32>
    %85 = vector.shape_cast %84 : vector<32x1x256xf32> to vector<32x256xf32>
    %86 = arith.addf %83, %85 : vector<32x256xf32>
    %87 = arith.truncf %86 : vector<32x256xf32> to vector<32x256xbf16>
    %c0_36 = arith.constant 0 : index
    %c0_37 = arith.constant 0 : index
    %88 = vector.load %arg8[%c0_36, %c0_37] : memref<512x64xbf16, #tpu.memory_space<vmem>>, vector<256x64xbf16>
    %cst_38 = arith.constant dense<0.000000e+00> : vector<32x64xf32>
    %89 = tpu.matmul %87, %88, %cst_38 {dimension_numbers = #tpu.dot_dimension_numbers<[1], [0], [0], [1], [0, 0, 1, 1], [], []>} : vector<32x256xbf16>, vector<256x64xbf16>, vector<32x64xf32> -> vector<32x64xf32>
    %90 = arith.addf %78, %89 : vector<32x64xf32>
    %91 = vector.extract_strided_slice %77 {offsets = [0, 3, 0], sizes = [32, 1, 256], strides = [1, 1, 1]} : vector<32x8x256xf32> to vector<32x1x256xf32>
    %92 = vector.shape_cast %91 : vector<32x1x256xf32> to vector<32x256xf32>
    %93 = vector.extract_strided_slice %77 {offsets = [0, 4, 0], sizes = [32, 1, 256], strides = [1, 1, 1]} : vector<32x8x256xf32> to vector<32x1x256xf32>
    %94 = vector.shape_cast %93 : vector<32x1x256xf32> to vector<32x256xf32>
    %95 = arith.addf %92, %94 : vector<32x256xf32>
    %96 = vector.extract_strided_slice %77 {offsets = [0, 5, 0], sizes = [32, 1, 256], strides = [1, 1, 1]} : vector<32x8x256xf32> to vector<32x1x256xf32>
    %97 = vector.shape_cast %96 : vector<32x1x256xf32> to vector<32x256xf32>
    %98 = arith.addf %95, %97 : vector<32x256xf32>
    %99 = arith.truncf %98 : vector<32x256xf32> to vector<32x256xbf16>
    %c256_39 = arith.constant 256 : index
    %c0_40 = arith.constant 0 : index
    %100 = vector.load %arg8[%c256_39, %c0_40] : memref<512x64xbf16, #tpu.memory_space<vmem>>, vector<256x64xbf16>
    %cst_41 = arith.constant dense<0.000000e+00> : vector<32x64xf32>
    %101 = tpu.matmul %99, %100, %cst_41 {dimension_numbers = #tpu.dot_dimension_numbers<[1], [0], [0], [1], [0, 0, 1, 1], [], []>} : vector<32x256xbf16>, vector<256x64xbf16>, vector<32x64xf32> -> vector<32x64xf32>
    %102 = arith.addf %90, %101 : vector<32x64xf32>
    %c0_42 = arith.constant 0 : index
    %c0_43 = arith.constant 0 : index
    %103 = vector.load %arg9[%c0_42, %c0_43] : memref<1x64xf32, #tpu.memory_space<vmem>>, vector<1x64xf32>
    %104 = vector.broadcast %103 : vector<1x64xf32> to vector<32x64xf32>
    %105 = arith.addf %102, %104 : vector<32x64xf32>
    %cst_44 = arith.constant 0.000000e+00 : f32
    %106 = vector.broadcast %cst_44 : f32 to vector<32x64xf32>
    %107 = arith.maximumf %105, %106 : vector<32x64xf32>
    %108 = arith.truncf %107 : vector<32x64xf32> to vector<32x64xbf16>
    %c0_45 = arith.constant 0 : index
    %c0_46 = arith.constant 0 : index
    %109 = vector.load %arg10[%c0_45, %c0_46] : memref<64x128xbf16, #tpu.memory_space<vmem>>, vector<64x128xbf16>
    %cst_47 = arith.constant dense<0.000000e+00> : vector<32x128xf32>
    %110 = tpu.matmul %108, %109, %cst_47 {dimension_numbers = #tpu.dot_dimension_numbers<[1], [0], [0], [1], [0, 0, 1, 1], [], []>} : vector<32x64xbf16>, vector<64x128xbf16>, vector<32x128xf32> -> vector<32x128xf32>
    %c0_48 = arith.constant 0 : index
    %c0_49 = arith.constant 0 : index
    %111 = vector.load %arg11[%c0_48, %c0_49] : memref<1x128xf32, #tpu.memory_space<vmem>>, vector<1x128xf32>
    %112 = vector.broadcast %111 : vector<1x128xf32> to vector<32x128xf32>
    %113 = arith.addf %110, %112 : vector<32x128xf32>
    %cst_50 = arith.constant dense<0xFF800000> : vector<32xf32>
    %114 = vector.multi_reduction <maximumf>, %113, %cst_50 [1] : vector<32x128xf32> to vector<32xf32>
    %115 = vector.shape_cast %114 : vector<32xf32> to vector<32x1xf32>
    %116 = vector.broadcast %115 : vector<32x1xf32> to vector<32x128xf32>
    %117 = arith.subf %113, %116 : vector<32x128xf32>
    %118 = math.exp %117 : vector<32x128xf32>
    %cst_51 = arith.constant dense<0.000000e+00> : vector<32xf32>
    %119 = vector.multi_reduction <add>, %118, %cst_51 [1] : vector<32x128xf32> to vector<32xf32>
    %120 = vector.shape_cast %119 : vector<32xf32> to vector<32x1xf32>
    %121 = tpu.reciprocal %120 : vector<32x1xf32> -> vector<32x1xf32>
    %122 = vector.broadcast %121 : vector<32x1xf32> to vector<32x128xf32>
    %123 = arith.mulf %118, %122 : vector<32x128xf32>
    %c0_52 = arith.constant 0 : index
    %c0_53 = arith.constant 0 : index
    %124 = vector.load %arg14[%c0_52, %c0_53] : memref<32x128xf32, #tpu.memory_space<vmem>>, vector<32x128xf32>
    tpu.vector_store %arg14[%c0_52, %c0_53], %123 {strides = array<i32>} : memref<32x128xf32, #tpu.memory_space<vmem>>, vector<32x128xf32>,
    return
  }
  func.func @transform_0(%arg0: i32) -> (i32, i32) {
    %c0_i32 = arith.constant 0 : i32
    %c0_i32_0 = arith.constant 0 : i32
    return %arg0, %c0_i32 : i32, i32
  }
  func.func @transform_1(%arg0: i32) -> (i32, i32) {
    %c0_i32 = arith.constant 0 : i32
    %c0_i32_0 = arith.constant 0 : i32
    %c0_i32_1 = arith.constant 0 : i32
    return %c0_i32, %c0_i32_0 : i32, i32
  }
  func.func @transform_2(%arg0: i32) -> (i32, i32) {
    %c0_i32 = arith.constant 0 : i32
    %c0_i32_0 = arith.constant 0 : i32
    %c0_i32_1 = arith.constant 0 : i32
    return %c0_i32, %c0_i32_0 : i32, i32
  }
  func.func @transform_3(%arg0: i32) -> (i32, i32) {
    %c0_i32 = arith.constant 0 : i32
    %c0_i32_0 = arith.constant 0 : i32
    %c0_i32_1 = arith.constant 0 : i32
    return %c0_i32, %c0_i32_0 : i32, i32
  }
  func.func @transform_4(%arg0: i32) -> (i32, i32) {
    %c0_i32 = arith.constant 0 : i32
    %c0_i32_0 = arith.constant 0 : i32
    %c0_i32_1 = arith.constant 0 : i32
    return %c0_i32, %c0_i32_0 : i32, i32
  }
  func.func @transform_5(%arg0: i32) -> (i32, i32) {
    %c0_i32 = arith.constant 0 : i32
    %c0_i32_0 = arith.constant 0 : i32
    %c0_i32_1 = arith.constant 0 : i32
    return %c0_i32, %c0_i32_0 : i32, i32
  }
  func.func @transform_6(%arg0: i32) -> (i32, i32) {
    %c0_i32 = arith.constant 0 : i32
    %c0_i32_0 = arith.constant 0 : i32
    %c0_i32_1 = arith.constant 0 : i32
    return %c0_i32, %c0_i32_0 : i32, i32
  }
  func.func @transform_7(%arg0: i32) -> (i32, i32) {
    %c0_i32 = arith.constant 0 : i32
    %c0_i32_0 = arith.constant 0 : i32
    %c0_i32_1 = arith.constant 0 : i32
    return %c0_i32, %c0_i32_0 : i32, i32
  }
  func.func @transform_8(%arg0: i32) -> (i32, i32) {
    %c0_i32 = arith.constant 0 : i32
    %c0_i32_0 = arith.constant 0 : i32
    %c0_i32_1 = arith.constant 0 : i32
    return %c0_i32, %c0_i32_0 : i32, i32
  }
  func.func @transform_9(%arg0: i32) -> (i32, i32) {
    %c0_i32 = arith.constant 0 : i32
    %c0_i32_0 = arith.constant 0 : i32
    %c0_i32_1 = arith.constant 0 : i32
    return %c0_i32, %c0_i32_0 : i32, i32
  }
  func.func @transform_10(%arg0: i32) -> (i32, i32) {
    %c0_i32 = arith.constant 0 : i32
    %c0_i32_0 = arith.constant 0 : i32
    %c0_i32_1 = arith.constant 0 : i32
    return %c0_i32, %c0_i32_0 : i32, i32
  }
  func.func @transform_11(%arg0: i32) -> (i32, i32) {
    %c0_i32 = arith.constant 0 : i32
    %c0_i32_0 = arith.constant 0 : i32
    %c0_i32_1 = arith.constant 0 : i32
    return %c0_i32, %c0_i32_0 : i32, i32
  }
  func.func @transform_12(%arg0: i32) -> (i32, i32) {
    %c0_i32 = arith.constant 0 : i32
    %c0_i32_0 = arith.constant 0 : i32
    %c0_i32_1 = arith.constant 0 : i32
    return %c0_i32, %c0_i32_0 : i32, i32
  }
  func.func @transform_13(%arg0: i32) -> (i32, i32) {
    %c0_i32 = arith.constant 0 : i32
    %c0_i32_0 = arith.constant 0 : i32
    return %arg0, %c0_i32 : i32, i32
  }
}

</mosaic_0001>

<llo_original>
// kernel: tpu_custom_call.1
$region0: #{tpu_custom_call.1}
  #allocation0 [shape = 'u32[]', space=smem, size = 0x4, offset = 0x4, fixed_abs, tag = 'smem constant byte address 0x4 - core index']
  #allocation1 [shape = 'u32[144,128]{1,0:T(1,128)}', space=vmem, size = 0x12000, scoped, tag = 'internal scratch']
  %s0 = inlined_call_operand.vmem [shape: f32[512,16], index: 0, kind: input, shape index: {}]
  %s1 = inlined_call_operand.vmem [shape: bf16[48,64], index: 1, kind: input, shape index: {}]
  %s2 = inlined_call_operand.vmem [shape: f32[1,64], index: 2, kind: input, shape index: {}]
  %s3 = inlined_call_operand.vmem [shape: bf16[192,128], index: 3, kind: input, shape index: {}]
  %s4 = inlined_call_operand.vmem [shape: f32[1,128], index: 4, kind: input, shape index: {}]
  %s5 = inlined_call_operand.vmem [shape: bf16[384,256], index: 5, kind: input, shape index: {}]
  %s6 = inlined_call_operand.vmem [shape: f32[1,256], index: 6, kind: input, shape index: {}]
  %s7 = inlined_call_operand.vmem [shape: bf16[512,64], index: 7, kind: input, shape index: {}]
  %s8 = inlined_call_operand.vmem [shape: f32[1,64], index: 8, kind: input, shape index: {}]
  %s9 = inlined_call_operand.vmem [shape: bf16[64,128], index: 9, kind: input, shape index: {}]
  %s10 = inlined_call_operand.vmem [shape: f32[1,128], index: 10, kind: input, shape index: {}]
  %s11 = inlined_call_operand.vmem [shape: f32[256,1], index: 11, kind: input, shape index: {}]
  %s12 = inlined_call_operand.vmem [shape: f32[256,1], index: 12, kind: input, shape index: {}]
  %s13 = inlined_call_operand.hbm [shape: f32[64,128], index: 13, kind: output, shape index: {}]
  %s14 = sld [smem:[#allocation0]]
  $region85: #{tpu_custom_call.1} parent=0
    _
  %s16 = ssub.s32 1, %s14
  %s17 = scalar_select 0, %s16, %s14
  $region1: #{tpu_custom_call.1} parent=0
    #allocation2 [shape = 'u8[32768]{0}', space=vmem, size = 0x8000, scoped, tag = 'output window, operand 0']
    #allocation3 [shape = 's32[2]{0}', space=sflag, size = 0x8, scoped, tag = 'scoped memory for tpu_custom_call.1']
    %18 = vsyncpa [#allocation3], 0
    %s19 = scalar_lea.sflag [#allocation3], 1
    %20 = vsyncpa %s19, 0
    loop: start=0, step=1, limit=4
    $region2: #{tpu_custom_call.1} parent=1 // loop_pre_header
      _
    $region3: #{tpu_custom_call.1} parent=1 // loop_header
      %s22 = sphi 0, %s26
      %p23 = scmp.ge.s32.totalorder %s22, 4
      %s32 = sphi 0, %s34
      %s35 = sphi 0, %s32
      %s36 = sphi 0, %s35
      %s52 = sphi 0, %s36
      %s56 = sphi 0, %s56
      %s58 = sphi 0, %s56
      %s59 = sphi 0, %s58
      %s73 = sphi 0, %s59
      %s77 = sphi 0, %s77
      %s79 = sphi 0, %s77
      %s80 = sphi 0, %s79
      %s94 = sphi 0, %s80
      %s98 = sphi 0, %s98
      %s100 = sphi 0, %s98
      %s101 = sphi 0, %s100
      %s115 = sphi 0, %s101
      %s119 = sphi 0, %s119
      %s121 = sphi 0, %s119
      %s122 = sphi 0, %s121
      %s136 = sphi 0, %s122
      %s140 = sphi 0, %s140
      %s142 = sphi 0, %s140
      %s143 = sphi 0, %s142
      %s157 = sphi 0, %s143
      %s161 = sphi 0, %s161
      %s163 = sphi 0, %s161
      %s164 = sphi 0, %s163
      %s178 = sphi 0, %s164
      %s182 = sphi 0, %s182
      %s184 = sphi 0, %s182
      %s185 = sphi 0, %s184
      %s199 = sphi 0, %s185
      %s203 = sphi 0, %s203
      %s205 = sphi 0, %s203
      %s206 = sphi 0, %s205
      %s220 = sphi 0, %s206
      %s224 = sphi 0, %s224
      %s226 = sphi 0, %s224
      %s227 = sphi 0, %s226
      %s241 = sphi 0, %s227
      %s245 = sphi 0, %s245
      %s247 = sphi 0, %s245
      %s248 = sphi 0, %s247
      %s262 = sphi 0, %s248
      %s266 = sphi 0, %s266
      %s268 = sphi 0, %s266
      %s269 = sphi 0, %s268
      %s283 = sphi 0, %s269
      %s287 = sphi 0, %s287
      %s289 = sphi 0, %s287
      %s290 = sphi 0, %s289
      %s304 = sphi 0, %s290
      %s310 = sphi 0, %s312
      %s313 = sphi 0, %s310
      %s314 = sphi 0, %s313
      %s330 = sphi 0, %s314
    $region4: #{tpu_custom_call.1} parent=1 // loop_header_branch
      %25 = sbr.rel (%p23) target = $region8
    $region5: #{tpu_custom_call.1} parent=1 // loop_body
      %s27 = ssub.s32 %s22, 1
      %s28 = ssub.s32 %s22, 2
      %s29 = sadd.s32 %s22, 1
      %s30 = ssub.s32 %s22, %s29
      %p31 = scmp.eq.s32.totalorder %s30, 0
      %s33 = sadd.s32 %s32, 1
      %s34 = scalar_select %p31, %s32, %s33
      %p37 = pneg %p31
      %p38 = scmp.eq.s32.totalorder %s22, 1
      %p39 = por %p37, %p38
      %p40 = scmp.ne.s32.totalorder %s32, %s35
      %p41 = scmp.eq.s32.totalorder %s22, 0
      %p42 = por %p40, %p41
      %p43 = scmp.ne.s32.totalorder %s32, %s35
      %p44 = scmp.eq.s32.totalorder %s27, 1
      %p45 = por %p43, %p44
      %p46 = scmp.ne.s32.totalorder %s35, %s36
      %p47 = scmp.eq.s32.totalorder %s27, 0
      %p48 = por %p46, %p47
      %p49 = scmp.ne.s32.totalorder %s35, %s36
      %p50 = scmp.eq.s32.totalorder %s28, 1
      %p51 = por %p49, %p50
      %p53 = scmp.ne.s32.totalorder %s36, %s52
      %p54 = scmp.eq.s32.totalorder %s28, 0
      %p55 = por %p53, %p54
      %s57 = sadd.s32 %s56, 1
      %p60 = scmp.eq.s32.totalorder %s22, 1
      %p61 = scmp.ne.s32.totalorder %s56, %s58
      %p62 = scmp.eq.s32.totalorder %s22, 0
      %p63 = por %p61, %p62
      %p64 = scmp.ne.s32.totalorder %s56, %s58
      %p65 = scmp.eq.s32.totalorder %s27, 1
      %p66 = por %p64, %p65
      %p67 = scmp.ne.s32.totalorder %s58, %s59
      %p68 = scmp.eq.s32.totalorder %s27, 0
      %p69 = por %p67, %p68
      %p70 = scmp.ne.s32.totalorder %s58, %s59
      %p71 = scmp.eq.s32.totalorder %s28, 1
      %p72 = por %p70, %p71
      %p74 = scmp.ne.s32.totalorder %s59, %s73
      %p75 = scmp.eq.s32.totalorder %s28, 0
      %p76 = por %p74, %p75
      %s78 = sadd.s32 %s77, 1
      %p81 = scmp.eq.s32.totalorder %s22, 1
      %p82 = scmp.ne.s32.totalorder %s77, %s79
      %p83 = scmp.eq.s32.totalorder %s22, 0
      %p84 = por %p82, %p83
      %p85 = scmp.ne.s32.totalorder %s77, %s79
      %p86 = scmp.eq.s32.totalorder %s27, 1
      %p87 = por %p85, %p86
      %p88 = scmp.ne.s32.totalorder %s79, %s80
      %p89 = scmp.eq.s32.totalorder %s27, 0
      %p90 = por %p88, %p89
      %p91 = scmp.ne.s32.totalorder %s79, %s80
      %p92 = scmp.eq.s32.totalorder %s28, 1
      %p93 = por %p91, %p92
      %p95 = scmp.ne.s32.totalorder %s80, %s94
      %p96 = scmp.eq.s32.totalorder %s28, 0
      %p97 = por %p95, %p96
      %s99 = sadd.s32 %s98, 1
      %p102 = scmp.eq.s32.totalorder %s22, 1
      %p103 = scmp.ne.s32.totalorder %s98, %s100
      %p104 = scmp.eq.s32.totalorder %s22, 0
      %p105 = por %p103, %p104
      %p106 = scmp.ne.s32.totalorder %s98, %s100
      %p107 = scmp.eq.s32.totalorder %s27, 1
      %p108 = por %p106, %p107
      %p109 = scmp.ne.s32.totalorder %s100, %s101
      %p110 = scmp.eq.s32.totalorder %s27, 0
      %p111 = por %p109, %p110
      %p112 = scmp.ne.s32.totalorder %s100, %s101
      %p113 = scmp.eq.s32.totalorder %s28, 1
      %p114 = por %p112, %p113
      %p116 = scmp.ne.s32.totalorder %s101, %s115
      %p117 = scmp.eq.s32.totalorder %s28, 0
      %p118 = por %p116, %p117
      %s120 = sadd.s32 %s119, 1
      %p123 = scmp.eq.s32.totalorder %s22, 1
      %p124 = scmp.ne.s32.totalorder %s119, %s121
      %p125 = scmp.eq.s32.totalorder %s22, 0
      %p126 = por %p124, %p125
      %p127 = scmp.ne.s32.totalorder %s119, %s121
      %p128 = scmp.eq.s32.totalorder %s27, 1
      %p129 = por %p127, %p128
      %p130 = scmp.ne.s32.totalorder %s121, %s122
      %p131 = scmp.eq.s32.totalorder %s27, 0
      %p132 = por %p130, %p131
      %p133 = scmp.ne.s32.totalorder %s121, %s122
      %p134 = scmp.eq.s32.totalorder %s28, 1
      %p135 = por %p133, %p134
      %p137 = scmp.ne.s32.totalorder %s122, %s136
      %p138 = scmp.eq.s32.totalorder %s28, 0
      %p139 = por %p137, %p138
      %s141 = sadd.s32 %s140, 1
      %p144 = scmp.eq.s32.totalorder %s22, 1
      %p145 = scmp.ne.s32.totalorder %s140, %s142
      %p146 = scmp.eq.s32.totalorder %s22, 0
      %p147 = por %p145, %p146
      %p148 = scmp.ne.s32.totalorder %s140, %s142
      %p149 = scmp.eq.s32.totalorder %s27, 1
      %p150 = por %p148, %p149
      %p151 = scmp.ne.s32.totalorder %s142, %s143
      %p152 = scmp.eq.s32.totalorder %s27, 0
      %p153 = por %p151, %p152
      %p154 = scmp.ne.s32.totalorder %s142, %s143
      %p155 = scmp.eq.s32.totalorder %s28, 1
      %p156 = por %p154, %p155
      %p158 = scmp.ne.s32.totalorder %s143, %s157
      %p159 = scmp.eq.s32.totalorder %s28, 0
      %p160 = por %p158, %p159
      %s162 = sadd.s32 %s161, 1
      %p165 = scmp.eq.s32.totalorder %s22, 1
      %p166 = scmp.ne.s32.totalorder %s161, %s163
      %p167 = scmp.eq.s32.totalorder %s22, 0
      %p168 = por %p166, %p167
      %p169 = scmp.ne.s32.totalorder %s161, %s163
      %p170 = scmp.eq.s32.totalorder %s27, 1
      %p171 = por %p169, %p170
      %p172 = scmp.ne.s32.totalorder %s163, %s164
      %p173 = scmp.eq.s32.totalorder %s27, 0
      %p174 = por %p172, %p173
      %p175 = scmp.ne.s32.totalorder %s163, %s164
      %p176 = scmp.eq.s32.totalorder %s28, 1
      %p177 = por %p175, %p176
      %p179 = scmp.ne.s32.totalorder %s164, %s178
      %p180 = scmp.eq.s32.totalorder %s28, 0
      %p181 = por %p179, %p180
      %s183 = sadd.s32 %s182, 1
      %p186 = scmp.eq.s32.totalorder %s22, 1
      %p187 = scmp.ne.s32.totalorder %s182, %s184
      %p188 = scmp.eq.s32.totalorder %s22, 0
      %p189 = por %p187, %p188
      %p190 = scmp.ne.s32.totalorder %s182, %s184
      %p191 = scmp.eq.s32.totalorder %s27, 1
      %p192 = por %p190, %p191
      %p193 = scmp.ne.s32.totalorder %s184, %s185
      %p194 = scmp.eq.s32.totalorder %s27, 0
      %p195 = por %p193, %p194
      %p196 = scmp.ne.s32.totalorder %s184, %s185
      %p197 = scmp.eq.s32.totalorder %s28, 1
      %p198 = por %p196, %p197
      %p200 = scmp.ne.s32.totalorder %s185, %s199
      %p201 = scmp.eq.s32.totalorder %s28, 0
      %p202 = por %p200, %p201
      %s204 = sadd.s32 %s203, 1
      %p207 = scmp.eq.s32.totalorder %s22, 1
      %p208 = scmp.ne.s32.totalorder %s203, %s205
      %p209 = scmp.eq.s32.totalorder %s22, 0
      %p210 = por %p208, %p209
      %p211 = scmp.ne.s32.totalorder %s203, %s205
      %p212 = scmp.eq.s32.totalorder %s27, 1
      %p213 = por %p211, %p212
      %p214 = scmp.ne.s32.totalorder %s205, %s206
      %p215 = scmp.eq.s32.totalorder %s27, 0
      %p216 = por %p214, %p215
      %p217 = scmp.ne.s32.totalorder %s205, %s206
      %p218 = scmp.eq.s32.totalorder %s28, 1
      %p219 = por %p217, %p218
      %p221 = scmp.ne.s32.totalorder %s206, %s220
      %p222 = scmp.eq.s32.totalorder %s28, 0
      %p223 = por %p221, %p222
      %s225 = sadd.s32 %s224, 1
      %p228 = scmp.eq.s32.totalorder %s22, 1
      %p229 = scmp.ne.s32.totalorder %s224, %s226
      %p230 = scmp.eq.s32.totalorder %s22, 0
      %p231 = por %p229, %p230
      %p232 = scmp.ne.s32.totalorder %s224, %s226
      %p233 = scmp.eq.s32.totalorder %s27, 1
      %p234 = por %p232, %p233
      %p235 = scmp.ne.s32.totalorder %s226, %s227
      %p236 = scmp.eq.s32.totalorder %s27, 0
      %p237 = por %p235, %p236
      %p238 = scmp.ne.s32.totalorder %s226, %s227
      %p239 = scmp.eq.s32.totalorder %s28, 1
      %p240 = por %p238, %p239
      %p242 = scmp.ne.s32.totalorder %s227, %s241
      %p243 = scmp.eq.s32.totalorder %s28, 0
      %p244 = por %p242, %p243
      %s246 = sadd.s32 %s245, 1
      %p249 = scmp.eq.s32.totalorder %s22, 1
      %p250 = scmp.ne.s32.totalorder %s245, %s247
      %p251 = scmp.eq.s32.totalorder %s22, 0
      %p252 = por %p250, %p251
      %p253 = scmp.ne.s32.totalorder %s245, %s247
      %p254 = scmp.eq.s32.totalorder %s27, 1
      %p255 = por %p253, %p254
      %p256 = scmp.ne.s32.totalorder %s247, %s248
      %p257 = scmp.eq.s32.totalorder %s27, 0
      %p258 = por %p256, %p257
      %p259 = scmp.ne.s32.totalorder %s247, %s248
      %p260 = scmp.eq.s32.totalorder %s28, 1
      %p261 = por %p259, %p260
      %p263 = scmp.ne.s32.totalorder %s248, %s262
      %p264 = scmp.eq.s32.totalorder %s28, 0
      %p265 = por %p263, %p264
      %s267 = sadd.s32 %s266, 1
      %p270 = scmp.eq.s32.totalorder %s22, 1
      %p271 = scmp.ne.s32.totalorder %s266, %s268
      %p272 = scmp.eq.s32.totalorder %s22, 0
      %p273 = por %p271, %p272
      %p274 = scmp.ne.s32.totalorder %s266, %s268
      %p275 = scmp.eq.s32.totalorder %s27, 1
      %p276 = por %p274, %p275
      %p277 = scmp.ne.s32.totalorder %s268, %s269
      %p278 = scmp.eq.s32.totalorder %s27, 0
      %p279 = por %p277, %p278
      %p280 = scmp.ne.s32.totalorder %s268, %s269
      %p281 = scmp.eq.s32.totalorder %s28, 1
      %p282 = por %p280, %p281
      %p284 = scmp.ne.s32.totalorder %s269, %s283
      %p285 = scmp.eq.s32.totalorder %s28, 0
      %p286 = por %p284, %p285
      %s288 = sadd.s32 %s287, 1
      %p291 = scmp.eq.s32.totalorder %s22, 1
      %p292 = scmp.ne.s32.totalorder %s287, %s289
      %p293 = scmp.eq.s32.totalorder %s22, 0
      %p294 = por %p292, %p293
      %p295 = scmp.ne.s32.totalorder %s287, %s289
      %p296 = scmp.eq.s32.totalorder %s27, 1
      %p297 = por %p295, %p296
      %p298 = scmp.ne.s32.totalorder %s289, %s290
      %p299 = scmp.eq.s32.totalorder %s27, 0
      %p300 = por %p298, %p299
      %p301 = scmp.ne.s32.totalorder %s289, %s290
      %p302 = scmp.eq.s32.totalorder %s28, 1
      %p303 = por %p301, %p302
      %p305 = scmp.ne.s32.totalorder %s290, %s304
      %p306 = scmp.eq.s32.totalorder %s28, 0
      %p307 = por %p305, %p306
      %s308 = ssub.s32 %s22, %s29
      %p309 = scmp.eq.s32.totalorder %s308, 0
      %s311 = sadd.s32 %s310, 1
      %s312 = scalar_select %p309, %s310, %s311
      %p315 = pneg %p309
      %p316 = scmp.eq.s32.totalorder %s22, 1
      %p317 = por %p315, %p316
      %p318 = scmp.ne.s32.totalorder %s310, %s313
      %p319 = scmp.eq.s32.totalorder %s22, 0
      %p320 = por %p318, %p319
      %p321 = scmp.ne.s32.totalorder %s310, %s313
      %p322 = scmp.eq.s32.totalorder %s27, 1
      %p323 = por %p321, %p322
      %p324 = scmp.ne.s32.totalorder %s313, %s314
      %p325 = scmp.eq.s32.totalorder %s27, 0
      %p326 = por %p324, %p325
      %p327 = scmp.ne.s32.totalorder %s313, %s314
      %p328 = scmp.eq.s32.totalorder %s28, 1
      %p329 = por %p327, %p328
      %p331 = scmp.ne.s32.totalorder %s314, %s330
      %p332 = scmp.eq.s32.totalorder %s28, 0
      %p333 = por %p331, %p332
      %p334 = scmp.le.s32.totalorder 1, %s22
      %p335 = scmp.lt.s32.totalorder %s22, 3
      %p336 = pnand %p334, %p335
      %p337 = pneg %p336
      // Predicated region
      $region9: #{tpu_custom_call.1} parent=5 // pred_check
        _
      $region10: #{tpu_custom_call.1} parent=5 // pred_check_branch
        %339 = sbr.rel (%p336) target = $region12
      $region11: #{tpu_custom_call.1} parent=5 // pred_region
        %s340 = ssub.s32 %s22, 1
        // Predicated region
        $region13: #{tpu_custom_call.1} parent=11 // pred_check
          %p341 = pneg %p69
        $region14: #{tpu_custom_call.1} parent=11 // pred_check_branch
          %343 = sbr.rel (%p341) target = $region16
        $region15: #{tpu_custom_call.1} parent=11 // pred_region
          _
        $region16: #{tpu_custom_call.1} parent=11 // pred_fallthru
          _
        // Predicated region
        $region17: #{tpu_custom_call.1} parent=11 // pred_check
          %p344 = pneg %p90
        $region18: #{tpu_custom_call.1} parent=11 // pred_check_branch
          %346 = sbr.rel (%p344) target = $region20
        $region19: #{tpu_custom_call.1} parent=11 // pred_region
          _
        $region20: #{tpu_custom_call.1} parent=11 // pred_fallthru
          _
        // Predicated region
        $region21: #{tpu_custom_call.1} parent=11 // pred_check
          %p347 = pneg %p111
        $region22: #{tpu_custom_call.1} parent=11 // pred_check_branch
          %349 = sbr.rel (%p347) target = $region24
        $region23: #{tpu_custom_call.1} parent=11 // pred_region
          _
        $region24: #{tpu_custom_call.1} parent=11 // pred_fallthru
          _
        // Predicated region
        $region25: #{tpu_custom_call.1} parent=11 // pred_check
          %p350 = pneg %p132
        $region26: #{tpu_custom_call.1} parent=11 // pred_check_branch
          %352 = sbr.rel (%p350) target = $region28
        $region27: #{tpu_custom_call.1} parent=11 // pred_region
          _
        $region28: #{tpu_custom_call.1} parent=11 // pred_fallthru
          _
        // Predicated region
        $region29: #{tpu_custom_call.1} parent=11 // pred_check
          %p353 = pneg %p153
        $region30: #{tpu_custom_call.1} parent=11 // pred_check_branch
          %355 = sbr.rel (%p353) target = $region32
        $region31: #{tpu_custom_call.1} parent=11 // pred_region
          _
        $region32: #{tpu_custom_call.1} parent=11 // pred_fallthru
          _
        // Predicated region
        $region33: #{tpu_custom_call.1} parent=11 // pred_check
          %p356 = pneg %p174
        $region34: #{tpu_custom_call.1} parent=11 // pred_check_branch
          %358 = sbr.rel (%p356) target = $region36
        $region35: #{tpu_custom_call.1} parent=11 // pred_region
          _
        $region36: #{tpu_custom_call.1} parent=11 // pred_fallthru
          _
        // Predicated region
        $region37: #{tpu_custom_call.1} parent=11 // pred_check
          %p359 = pneg %p195
        $region38: #{tpu_custom_call.1} parent=11 // pred_check_branch
          %361 = sbr.rel (%p359) target = $region40
        $region39: #{tpu_custom_call.1} parent=11 // pred_region
          _
        $region40: #{tpu_custom_call.1} parent=11 // pred_fallthru
          _
        // Predicated region
        $region41: #{tpu_custom_call.1} parent=11 // pred_check
          %p362 = pneg %p216
        $region42: #{tpu_custom_call.1} parent=11 // pred_check_branch
          %364 = sbr.rel (%p362) target = $region44
        $region43: #{tpu_custom_call.1} parent=11 // pred_region
          _
        $region44: #{tpu_custom_call.1} parent=11 // pred_fallthru
          _
        // Predicated region
        $region45: #{tpu_custom_call.1} parent=11 // pred_check
          %p365 = pneg %p237
        $region46: #{tpu_custom_call.1} parent=11 // pred_check_branch
          %367 = sbr.rel (%p365) target = $region48
        $region47: #{tpu_custom_call.1} parent=11 // pred_region
          _
        $region48: #{tpu_custom_call.1} parent=11 // pred_fallthru
          _
        // Predicated region
        $region49: #{tpu_custom_call.1} parent=11 // pred_check
          %p368 = pneg %p258
        $region50: #{tpu_custom_call.1} parent=11 // pred_check_branch
          %370 = sbr.rel (%p368) target = $region52
        $region51: #{tpu_custom_call.1} parent=11 // pred_region
          _
        $region52: #{tpu_custom_call.1} parent=11 // pred_fallthru
          _
        // Predicated region
        $region53: #{tpu_custom_call.1} parent=11 // pred_check
          %p371 = pneg %p279
        $region54: #{tpu_custom_call.1} parent=11 // pred_check_branch
          %373 = sbr.rel (%p371) target = $region56
        $region55: #{tpu_custom_call.1} parent=11 // pred_region
          _
        $region56: #{tpu_custom_call.1} parent=11 // pred_fallthru
          _
        // Predicated region
        $region57: #{tpu_custom_call.1} parent=11 // pred_check
          %p374 = pneg %p300
        $region58: #{tpu_custom_call.1} parent=11 // pred_check_branch
          %376 = sbr.rel (%p374) target = $region60
        $region59: #{tpu_custom_call.1} parent=11 // pred_region
          _
        $region60: #{tpu_custom_call.1} parent=11 // pred_fallthru
          _
      $region12: #{tpu_custom_call.1} parent=5 // pred_fallthru
        _
      %p377 = scmp.lt.s32.totalorder %s22, 2
      // Predicated region
      $region61: #{tpu_custom_call.1} parent=5 // pred_check
        %p378 = pneg %p377
      $region62: #{tpu_custom_call.1} parent=5 // pred_check_branch
        %380 = sbr.rel (%p378) target = $region64
      $region63: #{tpu_custom_call.1} parent=5 // pred_region
        // Predicated region
        $region65: #{tpu_custom_call.1} parent=63 // pred_check
          %p381 = pneg %p42
        $region66: #{tpu_custom_call.1} parent=63 // pred_check_branch
          %383 = sbr.rel (%p381) target = $region68
        $region67: #{tpu_custom_call.1} parent=63 // pred_region
          %s384 = smul.u32 32, %s22
          %p385 = scmp.lt.s32.totalorder %s384, 63
          %s386 = scalar_select %p385, %s384, 63
          %s387 = smul.addr %s386, 8
          %s388 = scalar_lea.vmem %s0, %s387
          %s389 = smul.u32 32, %s22
        $region68: #{tpu_custom_call.1} parent=63 // pred_fallthru
          _
      $region64: #{tpu_custom_call.1} parent=5 // pred_fallthru
        _
      %p390 = scmp.le.s32.totalorder 1, %s22
      %p391 = scmp.lt.s32.totalorder %s22, 3
      %p392 = pnand %p390, %p391
      %p393 = pneg %p392
      // Predicated region
      $region69: #{tpu_custom_call.1} parent=5 // pred_check
        _
      $region70: #{tpu_custom_call.1} parent=5 // pred_check_branch
        %395 = sbr.rel (%p392) target = $region72
      $region71: #{tpu_custom_call.1} parent=5 // pred_region
        %s396 = ssub.s32 %s22, 1
        %s397 = smul.u32 32, %s27
        %p398 = scmp.lt.s32.totalorder %s397, 63
        %s399 = scalar_select %p398, %s397, 63
        %s400 = smul.addr %s399, 8
        %s401 = scalar_lea.vmem %s0, %s400
        %p402 = pneg %p48
        %p403 = pneg %p45
        %p404 = pneg %p69
        %p405 = pneg %p66
        %p406 = pneg %p90
        %p407 = pneg %p87
        %p408 = pneg %p111
        %p409 = pneg %p108
        %p410 = pneg %p132
        %p411 = pneg %p129
        %p412 = pneg %p153
        %p413 = pneg %p150
        %p414 = pneg %p174
        %p415 = pneg %p171
        %p416 = pneg %p195
        %p417 = pneg %p192
        %p418 = pneg %p216
        %p419 = pneg %p213
        %p420 = pneg %p237
        %p421 = pneg %p234
        %p422 = pneg %p258
        %p423 = pneg %p255
        %p424 = pneg %p279
        %p425 = pneg %p276
        %p426 = pneg %p300
        %p427 = pneg %p297
        %p428 = pneg %p326
        %p429 = pneg %p323
        %s430 = sand.u32 %s313, 1
        %s431 = scalar_lea.sflag [#allocation3], %s430
        %s432 = sand.u32 %s313, 1
        %s433 = smul.addr %s432, 32
        %s434 = scalar_lea.vmem [#allocation2], %s433
        %s435 = smul.u32 32, %s27
        %p436 = scmp.lt.s32.totalorder %s435, 63
        %s437 = scalar_select %p436, %s435, 63
        %s438 = smul.addr %s437, 8
        %s439 = scalar_lea.vmem %s0, %s438
        %s440 = smul.u32 32, %s27
        %s441 = smul.u32 4, %s27
        %v443 = vld [vmem:[%s439] sm:$0xff]
        %v444 = vld [vmem:[%s439 + $0x8] sm:$0xff]
        %v445 = vld [vmem:[%s439 + $0x10] sm:$0xff]
        %v446 = vld [vmem:[%s439 + $0x18] sm:$0xff]
        %v447 = vld [vmem:[%s439 + $0x20] sm:$0xff]
        %v448 = vld [vmem:[%s439 + $0x28] sm:$0xff]
        %v449 = vld [vmem:[%s439 + $0x30] sm:$0xff]
        %v450 = vld [vmem:[%s439 + $0x38] sm:$0xff]
        %v451 = vld [vmem:[%s439 + $0x40] sm:$0xff]
        %v452 = vld [vmem:[%s439 + $0x48] sm:$0xff]
        %v453 = vld [vmem:[%s439 + $0x50] sm:$0xff]
        %v454 = vld [vmem:[%s439 + $0x58] sm:$0xff]
        %v455 = vld [vmem:[%s439 + $0x60] sm:$0xff]
        %v456 = vld [vmem:[%s439 + $0x68] sm:$0xff]
        %v457 = vld [vmem:[%s439 + $0x70] sm:$0xff]
        %v458 = vld [vmem:[%s439 + $0x78] sm:$0xff]
        %v459 = vld [vmem:[%s439 + $0x80] sm:$0xff]
        %v460 = vld [vmem:[%s439 + $0x88] sm:$0xff]
        %v461 = vld [vmem:[%s439 + $0x90] sm:$0xff]
        %v462 = vld [vmem:[%s439 + $0x98] sm:$0xff]
        %v463 = vld [vmem:[%s439 + $0xa0] sm:$0xff]
        %v464 = vld [vmem:[%s439 + $0xa8] sm:$0xff]
        %v465 = vld [vmem:[%s439 + $0xb0] sm:$0xff]
        %v466 = vld [vmem:[%s439 + $0xb8] sm:$0xff]
        %v467 = vld [vmem:[%s439 + $0xc0] sm:$0xff]
        %v468 = vld [vmem:[%s439 + $0xc8] sm:$0xff]
        %v469 = vld [vmem:[%s439 + $0xd0] sm:$0xff]
        %v470 = vld [vmem:[%s439 + $0xd8] sm:$0xff]
        %v471 = vld [vmem:[%s439 + $0xe0] sm:$0xff]
        %v472 = vld [vmem:[%s439 + $0xe8] sm:$0xff]
        %v473 = vld [vmem:[%s439 + $0xf0] sm:$0xff]
        %v474 = vld [vmem:[%s439 + $0xf8] sm:$0xff]
        %v476 = vrot.slane %v474, 6
        %vm509 = vcmask 1041408
        %v510 = vrot.slane %v443, 6
        %v511 = vrot.slane %v444, 6
        %v512 = vsel %vm509, %v510, %v511
        %v513 = vrot.slane %v445, 6
        %v514 = vsel %vm509, %v511, %v513
        %v515 = vrot.slane %v446, 6
        %v516 = vsel %vm509, %v513, %v515
        %v517 = vrot.slane %v447, 6
        %v518 = vsel %vm509, %v515, %v517
        %v519 = vrot.slane %v448, 6
        %v520 = vsel %vm509, %v517, %v519
        %v521 = vrot.slane %v449, 6
        %v522 = vsel %vm509, %v519, %v521
        %v523 = vrot.slane %v450, 6
        %v524 = vsel %vm509, %v521, %v523
        %v525 = vrot.slane %v451, 6
        %v526 = vsel %vm509, %v523, %v525
        %v527 = vrot.slane %v452, 6
        %v528 = vsel %vm509, %v525, %v527
        %v529 = vrot.slane %v453, 6
        %v530 = vsel %vm509, %v527, %v529
        %v531 = vrot.slane %v454, 6
        %v532 = vsel %vm509, %v529, %v531
        %v533 = vrot.slane %v455, 6
        %v534 = vsel %vm509, %v531, %v533
        %v535 = vrot.slane %v456, 6
        %v536 = vsel %vm509, %v533, %v535
        %v537 = vrot.slane %v457, 6
        %v538 = vsel %vm509, %v535, %v537
        %v539 = vrot.slane %v458, 6
        %v540 = vsel %vm509, %v537, %v539
        %v541 = vrot.slane %v459, 6
        %v542 = vsel %vm509, %v539, %v541
        %v543 = vrot.slane %v460, 6
        %v544 = vsel %vm509, %v541, %v543
        %v545 = vrot.slane %v461, 6
        %v546 = vsel %vm509, %v543, %v545
        %v547 = vrot.slane %v462, 6
        %v548 = vsel %vm509, %v545, %v547
        %v549 = vrot.slane %v463, 6
        %v550 = vsel %vm509, %v547, %v549
        %v551 = vrot.slane %v464, 6
        %v552 = vsel %vm509, %v549, %v551
        %v553 = vrot.slane %v465, 6
        %v554 = vsel %vm509, %v551, %v553
        %v555 = vrot.slane %v466, 6
        %v556 = vsel %vm509, %v553, %v555
        %v557 = vrot.slane %v467, 6
        %v558 = vsel %vm509, %v555, %v557
        %v559 = vrot.slane %v468, 6
        %v560 = vsel %vm509, %v557, %v559
        %v561 = vrot.slane %v469, 6
        %v562 = vsel %vm509, %v559, %v561
        %v563 = vrot.slane %v470, 6
        %v564 = vsel %vm509, %v561, %v563
        %v565 = vrot.slane %v471, 6
        %v566 = vsel %vm509, %v563, %v565
        %v567 = vrot.slane %v472, 6
        %v568 = vsel %vm509, %v565, %v567
        %v569 = vrot.slane %v473, 6
        %v570 = vsel %vm509, %v567, %v569
        %v571 = vsel %vm509, %v569, %v476
        %v604 = vsel %vm509, %v476, %v510
        %v605 = vpack.c.bf16 %v512, %v604
        %v606 = vpack.c.bf16 %v516, %v514
        %v607 = vpack.c.bf16 %v520, %v518
        %v608 = vpack.c.bf16 %v524, %v522
        %v609 = vpack.c.bf16 %v528, %v526
        %v610 = vpack.c.bf16 %v532, %v530
        %v611 = vpack.c.bf16 %v536, %v534
        %v612 = vpack.c.bf16 %v540, %v538
        %v613 = vpack.c.bf16 %v544, %v542
        %v614 = vpack.c.bf16 %v548, %v546
        %v615 = vpack.c.bf16 %v552, %v550
        %v616 = vpack.c.bf16 %v556, %v554
        %v617 = vpack.c.bf16 %v560, %v558
        %v618 = vpack.c.bf16 %v564, %v562
        %v619 = vpack.c.bf16 %v568, %v566
        %v620 = vpack.c.bf16 %v571, %v570
        %v621 = vld [vmem:[%s1] sm:$0xf]
        %v622 = vld [vmem:[%s1 + $0x4] sm:$0xf]
        %v623 = vrot.slane %v474, 7
        %vm625 = vcmask 1040384
        %v626 = vrot.slane %v443, 7
        %v627 = vrot.slane %v444, 7
        %v628 = vsel %vm625, %v626, %v627
        %v629 = vrot.slane %v445, 7
        %v630 = vsel %vm625, %v627, %v629
        %v631 = vrot.slane %v446, 7
        %v632 = vsel %vm625, %v629, %v631
        %v633 = vrot.slane %v447, 7
        %v634 = vsel %vm625, %v631, %v633
        %v635 = vrot.slane %v448, 7
        %v636 = vsel %vm625, %v633, %v635
        %v637 = vrot.slane %v449, 7
        %v638 = vsel %vm625, %v635, %v637
        %v639 = vrot.slane %v450, 7
        %v640 = vsel %vm625, %v637, %v639
        %v641 = vrot.slane %v451, 7
        %v642 = vsel %vm625, %v639, %v641
        %v643 = vrot.slane %v452, 7
        %v644 = vsel %vm625, %v641, %v643
        %v645 = vrot.slane %v453, 7
        %v646 = vsel %vm625, %v643, %v645
        %v647 = vrot.slane %v454, 7
        %v648 = vsel %vm625, %v645, %v647
        %v649 = vrot.slane %v455, 7
        %v650 = vsel %vm625, %v647, %v649
        %v651 = vrot.slane %v456, 7
        %v652 = vsel %vm625, %v649, %v651
        %v653 = vrot.slane %v457, 7
        %v654 = vsel %vm625, %v651, %v653
        %v655 = vrot.slane %v458, 7
        %v656 = vsel %vm625, %v653, %v655
        %v657 = vrot.slane %v459, 7
        %v658 = vsel %vm625, %v655, %v657
        %v659 = vrot.slane %v460, 7
        %v660 = vsel %vm625, %v657, %v659
        %v661 = vrot.slane %v461, 7
        %v662 = vsel %vm625, %v659, %v661
        %v663 = vrot.slane %v462, 7
        %v664 = vsel %vm625, %v661, %v663
        %v665 = vrot.slane %v463, 7
        %v666 = vsel %vm625, %v663, %v665
        %v667 = vrot.slane %v464, 7
        %v668 = vsel %vm625, %v665, %v667
        %v669 = vrot.slane %v465, 7
        %v670 = vsel %vm625, %v667, %v669
        %v671 = vrot.slane %v466, 7
        %v672 = vsel %vm625, %v669, %v671
        %v673 = vrot.slane %v467, 7
        %v674 = vsel %vm625, %v671, %v673
        %v675 = vrot.slane %v468, 7
        %v676 = vsel %vm625, %v673, %v675
        %v677 = vrot.slane %v469, 7
        %v678 = vsel %vm625, %v675, %v677
        %v679 = vrot.slane %v470, 7
        %v680 = vsel %vm625, %v677, %v679
        %v681 = vrot.slane %v471, 7
        %v682 = vsel %vm625, %v679, %v681
        %v683 = vrot.slane %v472, 7
        %v684 = vsel %vm625, %v681, %v683
        %v685 = vrot.slane %v473, 7
        %v686 = vsel %vm625, %v683, %v685
        %v687 = vsel %vm625, %v685, %v623
        %v720 = vsel %vm625, %v623, %v626
        %v721 = vpack.c.bf16 %v628, %v720
        %v722 = vpack.c.bf16 %v632, %v630
        %v723 = vpack.c.bf16 %v636, %v634
        %v724 = vpack.c.bf16 %v640, %v638
        %v725 = vpack.c.bf16 %v644, %v642
        %v726 = vpack.c.bf16 %v648, %v646
        %v727 = vpack.c.bf16 %v652, %v650
        %v728 = vpack.c.bf16 %v656, %v654
        %v729 = vpack.c.bf16 %v660, %v658
        %v730 = vpack.c.bf16 %v664, %v662
        %v731 = vpack.c.bf16 %v668, %v666
        %v732 = vpack.c.bf16 %v672, %v670
        %v733 = vpack.c.bf16 %v676, %v674
        %v734 = vpack.c.bf16 %v680, %v678
        %v735 = vpack.c.bf16 %v684, %v682
        %v736 = vpack.c.bf16 %v687, %v686
        %v737 = vld [vmem:[%s1 + $0x8] sm:$0xf]
        %v738 = vld [vmem:[%s1 + $0xc] sm:$0xf]
        %v741 = vunpack.c.l.b16 %v737
        %v742 = vunpack.c.l.b16 %v738
        %v743 = vpack.c.b16 %v742, %v741
        %vm745 = vcmask 130048
        %v747 = vsel %vm745, %v721, 0
        %v750 = vsel %vm745, %v722, 0
        %v753 = vsel %vm745, %v723, 0
        %v756 = vsel %vm745, %v724, 0
        %v759 = vsel %vm745, %v725, 0
        %v762 = vsel %vm745, %v726, 0
        %v765 = vsel %vm745, %v727, 0
        %v768 = vsel %vm745, %v728, 0
        %v771 = vsel %vm745, %v729, 0
        %v774 = vsel %vm745, %v730, 0
        %v777 = vsel %vm745, %v731, 0
        %v780 = vsel %vm745, %v732, 0
        %v783 = vsel %vm745, %v733, 0
        %v786 = vsel %vm745, %v734, 0
        %v789 = vsel %vm745, %v735, 0
        %v792 = vsel %vm745, %v736, 0
        %794 = vmatprep.subr.bf16.mxu0 0
        %795 = vmatpush1.bf16.msra.mxu0 %v743
        %796 = vmatprep.subr.bf16.mxu0 0
        %797 = vmatpush1.bf16.msra.mxu0 0
        %798 = vmatprep.subr.bf16.mxu0 0
        %799 = vmatpush1.bf16.msra.mxu0 0
        %800 = vmatprep.subr.bf16.mxu0 0
        %801 = vmatpush1.bf16.msra.mxu0 0
        %802 = vmatprep.subr.bf16.mxu0 0
        %803 = vmatpush1.bf16.msra.mxu0 0
        %804 = vmatprep.subr.bf16.mxu0 0
        %805 = vmatpush1.bf16.msra.mxu0 0
        %806 = vmatprep.subr.bf16.mxu0 0
        %807 = vmatpush1.bf16.msra.mxu0 0
        %808 = vmatprep.subr.bf16.mxu0 0
        %809 = vmatpush1.bf16.msra.mxu0 0
        %810 = vmatprep.subr.bf16.mxu0 0
        %811 = vmatpush1.bf16.msra.mxu0 0
        %812 = vmatprep.subr.bf16.mxu0 0
        %813 = vmatpush1.bf16.msra.mxu0 0
        %814 = vmatprep.subr.bf16.mxu0 0
        %815 = vmatpush1.bf16.msra.mxu0 0
        %816 = vmatprep.subr.bf16.mxu0 0
        %817 = vmatpush1.bf16.msra.mxu0 0
        %818 = vmatprep.subr.bf16.mxu0 0
        %819 = vmatpush1.bf16.msra.mxu0 0
        %820 = vmatprep.subr.bf16.mxu0 0
        %821 = vmatpush1.bf16.msra.mxu0 0
        %822 = vmatprep.subr.bf16.mxu0 0
        %823 = vmatpush1.bf16.msra.mxu0 0
        %824 = vmatprep.subr.bf16.mxu0 0
        %825 = vmatpush1.bf16.msra.mxu0 0
        %826 = vmatprep.mubr.bf16.mxu0 0
        %827 = vmatmul.mubr.bf16.gmra.mrb[0].mxu0 %v747
        %v828 = vpop.f32.mrb[0].mxu0
        %v829 = vadd.f32 0.0, %v828
        %v830 = vpop.f32.mrb[0].mxu0
        %v831 = vpop.f32.mrb[0].mxu0
        %v832 = vadd.f32 0.0, %v831
        %v833 = vpop.f32.mrb[0].mxu0
        %834 = vmatprep.mubr.bf16.mxu0 0
        %835 = vmatmul.mubr.bf16.gmra.mrb[0].mxu0 %v750
        %v836 = vpop.f32.mrb[0].mxu0
        %v837 = vadd.f32 0.0, %v836
        %v838 = vpop.f32.mrb[0].mxu0
        %v839 = vpop.f32.mrb[0].mxu0
        %v840 = vadd.f32 0.0, %v839
        %v841 = vpop.f32.mrb[0].mxu0
        %842 = vmatprep.mubr.bf16.mxu0 0
        %843 = vmatmul.mubr.bf16.gmra.mrb[0].mxu0 %v753
        %v844 = vpop.f32.mrb[0].mxu0
        %v845 = vadd.f32 0.0, %v844
        %v846 = vpop.f32.mrb[0].mxu0
        %v847 = vpop.f32.mrb[0].mxu0
        %v848 = vadd.f32 0.0, %v847
        %v849 = vpop.f32.mrb[0].mxu0
        %850 = vmatprep.mubr.bf16.mxu0 0
        %851 = vmatmul.mubr.bf16.gmra.mrb[0].mxu0 %v756
        %v852 = vpop.f32.mrb[0].mxu0
        %v853 = vadd.f32 0.0, %v852
        %v854 = vpop.f32.mrb[0].mxu0
        %v855 = vpop.f32.mrb[0].mxu0
        %v856 = vadd.f32 0.0, %v855
        %v857 = vpop.f32.mrb[0].mxu0
        %858 = vmatprep.mubr.bf16.mxu0 0
        %859 = vmatmul.mubr.bf16.gmra.mrb[0].mxu0 %v759
        %v860 = vpop.f32.mrb[0].mxu0
        %v861 = vadd.f32 0.0, %v860
        %v862 = vpop.f32.mrb[0].mxu0
        %v863 = vpop.f32.mrb[0].mxu0
        %v864 = vadd.f32 0.0, %v863
        %v865 = vpop.f32.mrb[0].mxu0
        %866 = vmatprep.mubr.bf16.mxu0 0
        %867 = vmatmul.mubr.bf16.gmra.mrb[0].mxu0 %v762
        %v868 = vpop.f32.mrb[0].mxu0
        %v869 = vadd.f32 0.0, %v868
        %v870 = vpop.f32.mrb[0].mxu0
        %v871 = vpop.f32.mrb[0].mxu0
        %v872 = vadd.f32 0.0, %v871
        %v873 = vpop.f32.mrb[0].mxu0
        %874 = vmatprep.mubr.bf16.mxu0 0
        %875 = vmatmul.mubr.bf16.gmra.mrb[0].mxu0 %v765
        %v876 = vpop.f32.mrb[0].mxu0
        %v877 = vadd.f32 0.0, %v876
        %v878 = vpop.f32.mrb[0].mxu0
        %v879 = vpop.f32.mrb[0].mxu0
        %v880 = vadd.f32 0.0, %v879
        %v881 = vpop.f32.mrb[0].mxu0
        %882 = vmatprep.mubr.bf16.mxu0 0
        %883 = vmatmul.mubr.bf16.gmra.mrb[0].mxu0 %v768
        %v884 = vpop.f32.mrb[0].mxu0
        %v885 = vadd.f32 0.0, %v884
        %v886 = vpop.f32.mrb[0].mxu0
        %v887 = vpop.f32.mrb[0].mxu0
        %v888 = vadd.f32 0.0, %v887
        %v889 = vpop.f32.mrb[0].mxu0
        %890 = vmatprep.mubr.bf16.mxu0 0
        %891 = vmatmul.mubr.bf16.gmra.mrb[0].mxu0 %v771
        %v892 = vpop.f32.mrb[0].mxu0
        %v893 = vadd.f32 0.0, %v892
        %v894 = vpop.f32.mrb[0].mxu0
        %v895 = vpop.f32.mrb[0].mxu0
        %v896 = vadd.f32 0.0, %v895
        %v897 = vpop.f32.mrb[0].mxu0
        %898 = vmatprep.mubr.bf16.mxu0 0
        %899 = vmatmul.mubr.bf16.gmra.mrb[0].mxu0 %v774
        %v900 = vpop.f32.mrb[0].mxu0
        %v901 = vadd.f32 0.0, %v900
        %v902 = vpop.f32.mrb[0].mxu0
        %v903 = vpop.f32.mrb[0].mxu0
        %v904 = vadd.f32 0.0, %v903
        %v905 = vpop.f32.mrb[0].mxu0
        %906 = vmatprep.mubr.bf16.mxu0 0
        %907 = vmatmul.mubr.bf16.gmra.mrb[0].mxu0 %v777
        %v908 = vpop.f32.mrb[0].mxu0
        %v909 = vadd.f32 0.0, %v908
        %v910 = vpop.f32.mrb[0].mxu0
        %v911 = vpop.f32.mrb[0].mxu0
        %v912 = vadd.f32 0.0, %v911
        %v913 = vpop.f32.mrb[0].mxu0
        %914 = vmatprep.mubr.bf16.mxu0 0
        %915 = vmatmul.mubr.bf16.gmra.mrb[0].mxu0 %v780
        %v916 = vpop.f32.mrb[0].mxu0
        %v917 = vadd.f32 0.0, %v916
        %v918 = vpop.f32.mrb[0].mxu0
        %v919 = vpop.f32.mrb[0].mxu0
        %v920 = vadd.f32 0.0, %v919
        %v921 = vpop.f32.mrb[0].mxu0
        %922 = vmatprep.mubr.bf16.mxu0 0
        %923 = vmatmul.mubr.bf16.gmra.mrb[0].mxu0 %v783
        %v924 = vpop.f32.mrb[0].mxu0
        %v925 = vadd.f32 0.0, %v924
        %v926 = vpop.f32.mrb[0].mxu0
        %v927 = vpop.f32.mrb[0].mxu0
        %v928 = vadd.f32 0.0, %v927
        %v929 = vpop.f32.mrb[0].mxu0
        %930 = vmatprep.mubr.bf16.mxu0 0
        %931 = vmatmul.mubr.bf16.gmra.mrb[0].mxu0 %v786
        %v932 = vpop.f32.mrb[0].mxu0
        %v933 = vadd.f32 0.0, %v932
        %v934 = vpop.f32.mrb[0].mxu0
        %v935 = vpop.f32.mrb[0].mxu0
        %v936 = vadd.f32 0.0, %v935
        %v937 = vpop.f32.mrb[0].mxu0
        %938 = vmatprep.mubr.bf16.mxu0 0
        %939 = vmatmul.mubr.bf16.gmra.mrb[0].mxu0 %v789
        %v940 = vpop.f32.mrb[0].mxu0
        %v941 = vadd.f32 0.0, %v940
        %v942 = vpop.f32.mrb[0].mxu0
        %v943 = vpop.f32.mrb[0].mxu0
        %v944 = vadd.f32 0.0, %v943
        %v945 = vpop.f32.mrb[0].mxu0
        %946 = vmatprep.mubr.bf16.mxu0 0
        %947 = vmatmul.mubr.bf16.gmra.mrb[0].mxu0 %v792
        %v948 = vpop.f32.mrb[0].mxu0
        %v949 = vadd.f32 0.0, %v948
        %v950 = vpop.f32.mrb[0].mxu0
        %v951 = vpop.f32.mrb[0].mxu0
        %v952 = vadd.f32 0.0, %v951
        %v953 = vpop.f32.mrb[0].mxu0
        %954 = vdwg.mxu0
        %v957 = vunpack.c.l.b16 %v621
        %v958 = vunpack.c.l.b16 %v622
        %v959 = vpack.c.b16 %v958, %v957
        %v962 = vsel %vm745, %v605, 0
        %v965 = vsel %vm745, %v606, 0
        %v968 = vsel %vm745, %v607, 0
        %v971 = vsel %vm745, %v608, 0
        %v974 = vsel %vm745, %v609, 0
        %v977 = vsel %vm745, %v610, 0
        %v980 = vsel %vm745, %v611, 0
        %v983 = vsel %vm745, %v612, 0
        %v986 = vsel %vm745, %v613, 0
        %v989 = vsel %vm745, %v614, 0
        %v992 = vsel %vm745, %v615, 0
        %v995 = vsel %vm745, %v616, 0
        %v998 = vsel %vm745, %v617, 0
        %v1001 = vsel %vm745, %v618, 0
        %v1004 = vsel %vm745, %v619, 0
        %v1007 = vsel %vm745, %v620, 0
        %1009 = vmatprep.subr.bf16.mxu0 0
        %1010 = vmatpush1.bf16.msra.mxu0 %v959
        %1011 = vmatprep.subr.bf16.mxu0 0
        %1012 = vmatpush1.bf16.msra.mxu0 0
        %1013 = vmatprep.subr.bf16.mxu0 0
        %1014 = vmatpush1.bf16.msra.mxu0 0
        %1015 = vmatprep.subr.bf16.mxu0 0
        %1016 = vmatpush1.bf16.msra.mxu0 0
        %1017 = vmatprep.subr.bf16.mxu0 0
        %1018 = vmatpush1.bf16.msra.mxu0 0
        %1019 = vmatprep.subr.bf16.mxu0 0
        %1020 = vmatpush1.bf16.msra.mxu0 0
        %1021 = vmatprep.subr.bf16.mxu0 0
        %1022 = vmatpush1.bf16.msra.mxu0 0
        %1023 = vmatprep.subr.bf16.mxu0 0
        %1024 = vmatpush1.bf16.msra.mxu0 0
        %1025 = vmatprep.subr.bf16.mxu0 0
        %1026 = vmatpush1.bf16.msra.mxu0 0
        %1027 = vmatprep.subr.bf16.mxu0 0
        %1028 = vmatpush1.bf16.msra.mxu0 0
        %1029 = vmatprep.subr.bf16.mxu0 0
        %1030 = vmatpush1.bf16.msra.mxu0 0
        %1031 = vmatprep.subr.bf16.mxu0 0
        %1032 = vmatpush1.bf16.msra.mxu0 0
        %1033 = vmatprep.subr.bf16.mxu0 0
        %1034 = vmatpush1.bf16.msra.mxu0 0
        %1035 = vmatprep.subr.bf16.mxu0 0
        %1036 = vmatpush1.bf16.msra.mxu0 0
        %1037 = vmatprep.subr.bf16.mxu0 0
        %1038 = vmatpush1.bf16.msra.mxu0 0
        %1039 = vmatprep.subr.bf16.mxu0 0
        %1040 = vmatpush1.bf16.msra.mxu0 0
        %1041 = vmatprep.mubr.bf16.mxu0 0
        %1042 = vmatmul.mubr.bf16.gmra.mrb[0].mxu0 %v962
        %v1043 = vpop.f32.mrb[0].mxu0
        %v1044 = vadd.f32 %v829, %v1043
        %v1045 = vpop.f32.mrb[0].mxu0
        %v1046 = vpop.f32.mrb[0].mxu0
        %v1047 = vadd.f32 %v832, %v1046
        %v1048 = vpop.f32.mrb[0].mxu0
        %1049 = vmatprep.mubr.bf16.mxu0 0
        %1050 = vmatmul.mubr.bf16.gmra.mrb[0].mxu0 %v965
        %v1051 = vpop.f32.mrb[0].mxu0
        %v1052 = vadd.f32 %v837, %v1051
        %v1053 = vpop.f32.mrb[0].mxu0
        %v1054 = vpop.f32.mrb[0].mxu0
        %v1055 = vadd.f32 %v840, %v1054
        %v1056 = vpop.f32.mrb[0].mxu0
        %1057 = vmatprep.mubr.bf16.mxu0 0
        %1058 = vmatmul.mubr.bf16.gmra.mrb[0].mxu0 %v968
        %v1059 = vpop.f32.mrb[0].mxu0
        %v1060 = vadd.f32 %v845, %v1059
        %v1061 = vpop.f32.mrb[0].mxu0
        %v1062 = vpop.f32.mrb[0].mxu0
        %v1063 = vadd.f32 %v848, %v1062
        %v1064 = vpop.f32.mrb[0].mxu0
        %1065 = vmatprep.mubr.bf16.mxu0 0
        %1066 = vmatmul.mubr.bf16.gmra.mrb[0].mxu0 %v971
        %v1067 = vpop.f32.mrb[0].mxu0
        %v1068 = vadd.f32 %v853, %v1067
        %v1069 = vpop.f32.mrb[0].mxu0
        %v1070 = vpop.f32.mrb[0].mxu0
        %v1071 = vadd.f32 %v856, %v1070
        %v1072 = vpop.f32.mrb[0].mxu0
        %1073 = vmatprep.mubr.bf16.mxu0 0
        %1074 = vmatmul.mubr.bf16.gmra.mrb[0].mxu0 %v974
        %v1075 = vpop.f32.mrb[0].mxu0
        %v1076 = vadd.f32 %v861, %v1075
        %v1077 = vpop.f32.mrb[0].mxu0
        %v1078 = vpop.f32.mrb[0].mxu0
        %v1079 = vadd.f32 %v864, %v1078
        %v1080 = vpop.f32.mrb[0].mxu0
        %1081 = vmatprep.mubr.bf16.mxu0 0
        %1082 = vmatmul.mubr.bf16.gmra.mrb[0].mxu0 %v977
        %v1083 = vpop.f32.mrb[0].mxu0
        %v1084 = vadd.f32 %v869, %v1083
        %v1085 = vpop.f32.mrb[0].mxu0
        %v1086 = vpop.f32.mrb[0].mxu0
        %v1087 = vadd.f32 %v872, %v1086
        %v1088 = vpop.f32.mrb[0].mxu0
        %1089 = vmatprep.mubr.bf16.mxu0 0
        %1090 = vmatmul.mubr.bf16.gmra.mrb[0].mxu0 %v980
        %v1091 = vpop.f32.mrb[0].mxu0
        %v1092 = vadd.f32 %v877, %v1091
        %v1093 = vpop.f32.mrb[0].mxu0
        %v1094 = vpop.f32.mrb[0].mxu0
        %v1095 = vadd.f32 %v880, %v1094
        %v1096 = vpop.f32.mrb[0].mxu0
        %1097 = vmatprep.mubr.bf16.mxu0 0
        %1098 = vmatmul.mubr.bf16.gmra.mrb[0].mxu0 %v983
        %v1099 = vpop.f32.mrb[0].mxu0
        %v1100 = vadd.f32 %v885, %v1099
        %v1101 = vpop.f32.mrb[0].mxu0
        %v1102 = vpop.f32.mrb[0].mxu0
        %v1103 = vadd.f32 %v888, %v1102
        %v1104 = vpop.f32.mrb[0].mxu0
        %1105 = vmatprep.mubr.bf16.mxu0 0
        %1106 = vmatmul.mubr.bf16.gmra.mrb[0].mxu0 %v986
        %v1107 = vpop.f32.mrb[0].mxu0
        %v1108 = vadd.f32 %v893, %v1107
        %v1109 = vpop.f32.mrb[0].mxu0
        %v1110 = vpop.f32.mrb[0].mxu0
        %v1111 = vadd.f32 %v896, %v1110
        %v1112 = vpop.f32.mrb[0].mxu0
        %1113 = vmatprep.mubr.bf16.mxu0 0
        %1114 = vmatmul.mubr.bf16.gmra.mrb[0].mxu0 %v989
        %v1115 = vpop.f32.mrb[0].mxu0
        %v1116 = vadd.f32 %v901, %v1115
        %v1117 = vpop.f32.mrb[0].mxu0
        %v1118 = vpop.f32.mrb[0].mxu0
        %v1119 = vadd.f32 %v904, %v1118
        %v1120 = vpop.f32.mrb[0].mxu0
        %1121 = vmatprep.mubr.bf16.mxu0 0
        %1122 = vmatmul.mubr.bf16.gmra.mrb[0].mxu0 %v992
        %v1123 = vpop.f32.mrb[0].mxu0
        %v1124 = vadd.f32 %v909, %v1123
        %v1125 = vpop.f32.mrb[0].mxu0
        %v1126 = vpop.f32.mrb[0].mxu0
        %v1127 = vadd.f32 %v912, %v1126
        %v1128 = vpop.f32.mrb[0].mxu0
        %1129 = vmatprep.mubr.bf16.mxu0 0
        %1130 = vmatmul.mubr.bf16.gmra.mrb[0].mxu0 %v995
        %v1131 = vpop.f32.mrb[0].mxu0
        %v1132 = vadd.f32 %v917, %v1131
        %v1133 = vpop.f32.mrb[0].mxu0
        %v1134 = vpop.f32.mrb[0].mxu0
        %v1135 = vadd.f32 %v920, %v1134
        %v1136 = vpop.f32.mrb[0].mxu0
        %1137 = vmatprep.mubr.bf16.mxu0 0
        %1138 = vmatmul.mubr.bf16.gmra.mrb[0].mxu0 %v998
        %v1139 = vpop.f32.mrb[0].mxu0
        %v1140 = vadd.f32 %v925, %v1139
        %v1141 = vpop.f32.mrb[0].mxu0
        %v1142 = vpop.f32.mrb[0].mxu0
        %v1143 = vadd.f32 %v928, %v1142
        %v1144 = vpop.f32.mrb[0].mxu0
        %1145 = vmatprep.mubr.bf16.mxu0 0
        %1146 = vmatmul.mubr.bf16.gmra.mrb[0].mxu0 %v1001
        %v1147 = vpop.f32.mrb[0].mxu0
        %v1148 = vadd.f32 %v933, %v1147
        %v1149 = vpop.f32.mrb[0].mxu0
        %v1150 = vpop.f32.mrb[0].mxu0
        %v1151 = vadd.f32 %v936, %v1150
        %v1152 = vpop.f32.mrb[0].mxu0
        %1153 = vmatprep.mubr.bf16.mxu0 0
        %1154 = vmatmul.mubr.bf16.gmra.mrb[0].mxu0 %v1004
        %v1155 = vpop.f32.mrb[0].mxu0
        %v1156 = vadd.f32 %v941, %v1155
        %v1157 = vpop.f32.mrb[0].mxu0
        %v1158 = vpop.f32.mrb[0].mxu0
        %v1159 = vadd.f32 %v944, %v1158
        %v1160 = vpop.f32.mrb[0].mxu0
        %1161 = vmatprep.mubr.bf16.mxu0 0
        %1162 = vmatmul.mubr.bf16.gmra.mrb[0].mxu0 %v1007
        %v1163 = vpop.f32.mrb[0].mxu0
        %v1164 = vadd.f32 %v949, %v1163
        %v1165 = vpop.f32.mrb[0].mxu0
        %v1166 = vpop.f32.mrb[0].mxu0
        %v1167 = vadd.f32 %v952, %v1166
        %v1168 = vpop.f32.mrb[0].mxu0
        %1169 = vdwg.mxu0
        %v1170 = vpack.c.bf16 %v444, %v443
        %v1171 = vpack.c.bf16 %v446, %v445
        %v1172 = vpack.c.bf16 %v448, %v447
        %v1173 = vpack.c.bf16 %v450, %v449
        %v1174 = vpack.c.bf16 %v452, %v451
        %v1175 = vpack.c.bf16 %v454, %v453
        %v1176 = vpack.c.bf16 %v456, %v455
        %v1177 = vpack.c.bf16 %v458, %v457
        %v1178 = vpack.c.bf16 %v460, %v459
        %v1179 = vpack.c.bf16 %v462, %v461
        %v1180 = vpack.c.bf16 %v464, %v463
        %v1181 = vpack.c.bf16 %v466, %v465
        %v1182 = vpack.c.bf16 %v468, %v467
        %v1183 = vpack.c.bf16 %v470, %v469
        %v1184 = vpack.c.bf16 %v472, %v471
        %v1185 = vpack.c.bf16 %v474, %v473
        %v1186 = vld [vmem:[%s1 + $0x10] sm:$0xf]
        %v1187 = vld [vmem:[%s1 + $0x14] sm:$0xf]
        %v1190 = vunpack.c.l.b16 %v1186
        %v1191 = vunpack.c.l.b16 %v1187
        %v1192 = vpack.c.b16 %v1191, %v1190
        %v1195 = vsel %vm745, %v1170, 0
        %v1198 = vsel %vm745, %v1171, 0
        %v1201 = vsel %vm745, %v1172, 0
        %v1204 = vsel %vm745, %v1173, 0
        %v1207 = vsel %vm745, %v1174, 0
        %v1210 = vsel %vm745, %v1175, 0
        %v1213 = vsel %vm745, %v1176, 0
        %v1216 = vsel %vm745, %v1177, 0
        %v1219 = vsel %vm745, %v1178, 0
        %v1222 = vsel %vm745, %v1179, 0
        %v1225 = vsel %vm745, %v1180, 0
        %v1228 = vsel %vm745, %v1181, 0
        %v1231 = vsel %vm745, %v1182, 0
        %v1234 = vsel %vm745, %v1183, 0
        %v1237 = vsel %vm745, %v1184, 0
        %v1240 = vsel %vm745, %v1185, 0
        %1242 = vmatprep.subr.bf16.mxu0 0
        %1243 = vmatpush1.bf16.msra.mxu0 %v1192
        %1244 = vmatprep.subr.bf16.mxu0 0
        %1245 = vmatpush1.bf16.msra.mxu0 0
        %1246 = vmatprep.subr.bf16.mxu0 0
        %1247 = vmatpush1.bf16.msra.mxu0 0
        %1248 = vmatprep.subr.bf16.mxu0 0
        %1249 = vmatpush1.bf16.msra.mxu0 0
        %1250 = vmatprep.subr.bf16.mxu0 0
        %1251 = vmatpush1.bf16.msra.mxu0 0
        %1252 = vmatprep.subr.bf16.mxu0 0
        %1253 = vmatpush1.bf16.msra.mxu0 0
        %1254 = vmatprep.subr.bf16.mxu0 0
        %1255 = vmatpush1.bf16.msra.mxu0 0
        %1256 = vmatprep.subr.bf16.mxu0 0
        %1257 = vmatpush1.bf16.msra.mxu0 0
        %1258 = vmatprep.subr.bf16.mxu0 0
        %1259 = vmatpush1.bf16.msra.mxu0 0
        %1260 = vmatprep.subr.bf16.mxu0 0
        %1261 = vmatpush1.bf16.msra.mxu0 0
        %1262 = vmatprep.subr.bf16.mxu0 0
        %1263 = vmatpush1.bf16.msra.mxu0 0
        %1264 = vmatprep.subr.bf16.mxu0 0
        %1265 = vmatpush1.bf16.msra.mxu0 0
        %1266 = vmatprep.subr.bf16.mxu0 0
        %1267 = vmatpush1.bf16.msra.mxu0 0
        %1268 = vmatprep.subr.bf16.mxu0 0
        %1269 = vmatpush1.bf16.msra.mxu0 0
        %1270 = vmatprep.subr.bf16.mxu0 0
        %1271 = vmatpush1.bf16.msra.mxu0 0
        %1272 = vmatprep.subr.bf16.mxu0 0
        %1273 = vmatpush1.bf16.msra.mxu0 0
        %1274 = vmatprep.mubr.bf16.mxu0 0
        %1275 = vmatmul.mubr.bf16.gmra.mrb[0].mxu0 %v1195
        %v1276 = vpop.f32.mrb[0].mxu0
        %v1277 = vadd.f32 0.0, %v1276
        %v1278 = vpop.f32.mrb[0].mxu0
        %v1279 = vpop.f32.mrb[0].mxu0
        %v1280 = vadd.f32 0.0, %v1279
        %v1281 = vpop.f32.mrb[0].mxu0
        %1282 = vmatprep.mubr.bf16.mxu0 0
        %1283 = vmatmul.mubr.bf16.gmra.mrb[0].mxu0 %v1198
        %v1284 = vpop.f32.mrb[0].mxu0
        %v1285 = vadd.f32 0.0, %v1284
        %v1286 = vpop.f32.mrb[0].mxu0
        %v1287 = vpop.f32.mrb[0].mxu0
        %v1288 = vadd.f32 0.0, %v1287
        %v1289 = vpop.f32.mrb[0].mxu0
        %1290 = vmatprep.mubr.bf16.mxu0 0
        %1291 = vmatmul.mubr.bf16.gmra.mrb[0].mxu0 %v1201
        %v1292 = vpop.f32.mrb[0].mxu0
        %v1293 = vadd.f32 0.0, %v1292
        %v1294 = vpop.f32.mrb[0].mxu0
        %v1295 = vpop.f32.mrb[0].mxu0
        %v1296 = vadd.f32 0.0, %v1295
        %v1297 = vpop.f32.mrb[0].mxu0
        %1298 = vmatprep.mubr.bf16.mxu0 0
        %1299 = vmatmul.mubr.bf16.gmra.mrb[0].mxu0 %v1204
        %v1300 = vpop.f32.mrb[0].mxu0
        %v1301 = vadd.f32 0.0, %v1300
        %v1302 = vpop.f32.mrb[0].mxu0
        %v1303 = vpop.f32.mrb[0].mxu0
        %v1304 = vadd.f32 0.0, %v1303
        %v1305 = vpop.f32.mrb[0].mxu0
        %1306 = vmatprep.mubr.bf16.mxu0 0
        %1307 = vmatmul.mubr.bf16.gmra.mrb[0].mxu0 %v1207
        %v1308 = vpop.f32.mrb[0].mxu0
        %v1309 = vadd.f32 0.0, %v1308
        %v1310 = vpop.f32.mrb[0].mxu0
        %v1311 = vpop.f32.mrb[0].mxu0
        %v1312 = vadd.f32 0.0, %v1311
        %v1313 = vpop.f32.mrb[0].mxu0
        %1314 = vmatprep.mubr.bf16.mxu0 0
        %1315 = vmatmul.mubr.bf16.gmra.mrb[0].mxu0 %v1210
        %v1316 = vpop.f32.mrb[0].mxu0
        %v1317 = vadd.f32 0.0, %v1316
        %v1318 = vpop.f32.mrb[0].mxu0
        %v1319 = vpop.f32.mrb[0].mxu0
        %v1320 = vadd.f32 0.0, %v1319
        %v1321 = vpop.f32.mrb[0].mxu0
        %1322 = vmatprep.mubr.bf16.mxu0 0
        %1323 = vmatmul.mubr.bf16.gmra.mrb[0].mxu0 %v1213
        %v1324 = vpop.f32.mrb[0].mxu0
        %v1325 = vadd.f32 0.0, %v1324
        %v1326 = vpop.f32.mrb[0].mxu0
        %v1327 = vpop.f32.mrb[0].mxu0
        %v1328 = vadd.f32 0.0, %v1327
        %v1329 = vpop.f32.mrb[0].mxu0
        %1330 = vmatprep.mubr.bf16.mxu0 0
        %1331 = vmatmul.mubr.bf16.gmra.mrb[0].mxu0 %v1216
        %v1332 = vpop.f32.mrb[0].mxu0
        %v1333 = vadd.f32 0.0, %v1332
        %v1334 = vpop.f32.mrb[0].mxu0
        %v1335 = vpop.f32.mrb[0].mxu0
        %v1336 = vadd.f32 0.0, %v1335
        %v1337 = vpop.f32.mrb[0].mxu0
        %1338 = vmatprep.mubr.bf16.mxu0 0
        %1339 = vmatmul.mubr.bf16.gmra.mrb[0].mxu0 %v1219
        %v1340 = vpop.f32.mrb[0].mxu0
        %v1341 = vadd.f32 0.0, %v1340
        %v1342 = vpop.f32.mrb[0].mxu0
        %v1343 = vpop.f32.mrb[0].mxu0
        %v1344 = vadd.f32 0.0, %v1343
        %v1345 = vpop.f32.mrb[0].mxu0
        %1346 = vmatprep.mubr.bf16.mxu0 0
        %1347 = vmatmul.mubr.bf16.gmra.mrb[0].mxu0 %v1222
        %v1348 = vpop.f32.mrb[0].mxu0
        %v1349 = vadd.f32 0.0, %v1348
        %v1350 = vpop.f32.mrb[0].mxu0
        %v1351 = vpop.f32.mrb[0].mxu0
        %v1352 = vadd.f32 0.0, %v1351
        %v1353 = vpop.f32.mrb[0].mxu0
        %1354 = vmatprep.mubr.bf16.mxu0 0
        %1355 = vmatmul.mubr.bf16.gmra.mrb[0].mxu0 %v1225
        %v1356 = vpop.f32.mrb[0].mxu0
        %v1357 = vadd.f32 0.0, %v1356
        %v1358 = vpop.f32.mrb[0].mxu0
        %v1359 = vpop.f32.mrb[0].mxu0
        %v1360 = vadd.f32 0.0, %v1359
        %v1361 = vpop.f32.mrb[0].mxu0
        %1362 = vmatprep.mubr.bf16.mxu0 0
        %1363 = vmatmul.mubr.bf16.gmra.mrb[0].mxu0 %v1228
        %v1364 = vpop.f32.mrb[0].mxu0
        %v1365 = vadd.f32 0.0, %v1364
        %v1366 = vpop.f32.mrb[0].mxu0
        %v1367 = vpop.f32.mrb[0].mxu0
        %v1368 = vadd.f32 0.0, %v1367
        %v1369 = vpop.f32.mrb[0].mxu0
        %1370 = vmatprep.mubr.bf16.mxu0 0
        %1371 = vmatmul.mubr.bf16.gmra.mrb[0].mxu0 %v1231
        %v1372 = vpop.f32.mrb[0].mxu0
        %v1373 = vadd.f32 0.0, %v1372
        %v1374 = vpop.f32.mrb[0].mxu0
        %v1375 = vpop.f32.mrb[0].mxu0
        %v1376 = vadd.f32 0.0, %v1375
        %v1377 = vpop.f32.mrb[0].mxu0
        %1378 = vmatprep.mubr.bf16.mxu0 0
        %1379 = vmatmul.mubr.bf16.gmra.mrb[0].mxu0 %v1234
        %v1380 = vpop.f32.mrb[0].mxu0
        %v1381 = vadd.f32 0.0, %v1380
        %v1382 = vpop.f32.mrb[0].mxu0
        %v1383 = vpop.f32.mrb[0].mxu0
        %v1384 = vadd.f32 0.0, %v1383
        %v1385 = vpop.f32.mrb[0].mxu0
        %1386 = vmatprep.mubr.bf16.mxu0 0
        %1387 = vmatmul.mubr.bf16.gmra.mrb[0].mxu0 %v1237
        %v1388 = vpop.f32.mrb[0].mxu0
        %v1389 = vadd.f32 0.0, %v1388
        %v1390 = vpop.f32.mrb[0].mxu0
        %v1391 = vpop.f32.mrb[0].mxu0
        %v1392 = vadd.f32 0.0, %v1391
        %v1393 = vpop.f32.mrb[0].mxu0
        %1394 = vmatprep.mubr.bf16.mxu0 0
        %1395 = vmatmul.mubr.bf16.gmra.mrb[0].mxu0 %v1240
        %v1396 = vpop.f32.mrb[0].mxu0
        %v1397 = vadd.f32 0.0, %v1396
        %v1398 = vpop.f32.mrb[0].mxu0
        %v1399 = vpop.f32.mrb[0].mxu0
        %v1400 = vadd.f32 0.0, %v1399
        %v1401 = vpop.f32.mrb[0].mxu0
        %1402 = vdwg.mxu0
        %v1403 = vadd.f32 %v1044, %v1277
        %v1404 = vadd.f32 %v1047, %v1280
        %v1405 = vadd.f32 %v1052, %v1285
        %v1406 = vadd.f32 %v1055, %v1288
        %v1407 = vadd.f32 %v1060, %v1293
        %v1408 = vadd.f32 %v1063, %v1296
        %v1409 = vadd.f32 %v1068, %v1301
        %v1410 = vadd.f32 %v1071, %v1304
        %v1411 = vadd.f32 %v1076, %v1309
        %v1412 = vadd.f32 %v1079, %v1312
        %v1413 = vadd.f32 %v1084, %v1317
        %v1414 = vadd.f32 %v1087, %v1320
        %v1415 = vadd.f32 %v1092, %v1325
        %v1416 = vadd.f32 %v1095, %v1328
        %v1417 = vadd.f32 %v1100, %v1333
        %v1418 = vadd.f32 %v1103, %v1336
        %v1419 = vadd.f32 %v1108, %v1341
        %v1420 = vadd.f32 %v1111, %v1344
        %v1421 = vadd.f32 %v1116, %v1349
        %v1422 = vadd.f32 %v1119, %v1352
        %v1423 = vadd.f32 %v1124, %v1357
        %v1424 = vadd.f32 %v1127, %v1360
        %v1425 = vadd.f32 %v1132, %v1365
        %v1426 = vadd.f32 %v1135, %v1368
        %v1427 = vadd.f32 %v1140, %v1373
        %v1428 = vadd.f32 %v1143, %v1376
        %v1429 = vadd.f32 %v1148, %v1381
        %v1430 = vadd.f32 %v1151, %v1384
        %v1431 = vadd.f32 %v1156, %v1389
        %v1432 = vadd.f32 %v1159, %v1392
        %v1433 = vadd.f32 %v1164, %v1397
        %v1434 = vadd.f32 %v1167, %v1400
        %v1435 = vld [vmem:[%s2] sm:$0x1]
        %v1437 = vlaneseq
        %v1438 = vshrl.u32 %v1437, 7
        %v1439 = vsub.s32 0, %v1438
        %v1440 = vrot.slane %v1435, %v1439
        %v1442 = vadd.f32 %v1403, %v1440
        %v1443 = vadd.f32 %v1404, %v1440
        %v1444 = vadd.f32 %v1405, %v1440
        %v1445 = vadd.f32 %v1406, %v1440
        %v1446 = vadd.f32 %v1407, %v1440
        %v1447 = vadd.f32 %v1408, %v1440
        %v1448 = vadd.f32 %v1409, %v1440
        %v1449 = vadd.f32 %v1410, %v1440
        %v1450 = vadd.f32 %v1411, %v1440
        %v1451 = vadd.f32 %v1412, %v1440
        %v1452 = vadd.f32 %v1413, %v1440
        %v1453 = vadd.f32 %v1414, %v1440
        %v1454 = vadd.f32 %v1415, %v1440
        %v1455 = vadd.f32 %v1416, %v1440
        %v1456 = vadd.f32 %v1417, %v1440
        %v1457 = vadd.f32 %v1418, %v1440
        %v1458 = vadd.f32 %v1419, %v1440
        %v1459 = vadd.f32 %v1420, %v1440
        %v1460 = vadd.f32 %v1421, %v1440
        %v1461 = vadd.f32 %v1422, %v1440
        %v1462 = vadd.f32 %v1423, %v1440
        %v1463 = vadd.f32 %v1424, %v1440
        %v1464 = vadd.f32 %v1425, %v1440
        %v1465 = vadd.f32 %v1426, %v1440
        %v1466 = vadd.f32 %v1427, %v1440
        %v1467 = vadd.f32 %v1428, %v1440
        %v1468 = vadd.f32 %v1429, %v1440
        %v1469 = vadd.f32 %v1430, %v1440
        %v1470 = vadd.f32 %v1431, %v1440
        %v1471 = vadd.f32 %v1432, %v1440
        %v1472 = vadd.f32 %v1433, %v1440
        %v1473 = vadd.f32 %v1434, %v1440
        %v1474 = vmax.f32 %v1442, 0.0
        %v1475 = vmax.f32 %v1443, 0.0
        %v1476 = vmax.f32 %v1444, 0.0
        %v1477 = vmax.f32 %v1445, 0.0
        %v1478 = vmax.f32 %v1446, 0.0
        %v1479 = vmax.f32 %v1447, 0.0
        %v1480 = vmax.f32 %v1448, 0.0
        %v1481 = vmax.f32 %v1449, 0.0
        %v1482 = vmax.f32 %v1450, 0.0
        %v1483 = vmax.f32 %v1451, 0.0
        %v1484 = vmax.f32 %v1452, 0.0
        %v1485 = vmax.f32 %v1453, 0.0
        %v1486 = vmax.f32 %v1454, 0.0
        %v1487 = vmax.f32 %v1455, 0.0
        %v1488 = vmax.f32 %v1456, 0.0
        %v1489 = vmax.f32 %v1457, 0.0
        %v1490 = vmax.f32 %v1458, 0.0
        %v1491 = vmax.f32 %v1459, 0.0
        %v1492 = vmax.f32 %v1460, 0.0
        %v1493 = vmax.f32 %v1461, 0.0
        %v1494 = vmax.f32 %v1462, 0.0
        %v1495 = vmax.f32 %v1463, 0.0
        %v1496 = vmax.f32 %v1464, 0.0
        %v1497 = vmax.f32 %v1465, 0.0
        %v1498 = vmax.f32 %v1466, 0.0
        %v1499 = vmax.f32 %v1467, 0.0
        %v1500 = vmax.f32 %v1468, 0.0
        %v1501 = vmax.f32 %v1469, 0.0
        %v1502 = vmax.f32 %v1470, 0.0
        %v1503 = vmax.f32 %v1471, 0.0
        %v1504 = vmax.f32 %v1472, 0.0
        %v1505 = vmax.f32 %v1473, 0.0
        %v1506 = vld [vmem:[%s11] sm:$0xff]
        %v1507 = vld [vmem:[%s11 + $0x8] sm:$0xff]
        %v1508 = vld [vmem:[%s11 + $0x10] sm:$0xff]
        %v1509 = vld [vmem:[%s11 + $0x18] sm:$0xff]
        %v1510 = vld [vmem:[%s11 + $0x20] sm:$0xff]
        %v1511 = vld [vmem:[%s11 + $0x28] sm:$0xff]
        %v1512 = vld [vmem:[%s11 + $0x30] sm:$0xff]
        %v1513 = vld [vmem:[%s11 + $0x38] sm:$0xff]
        %v1514 = vld [vmem:[%s11 + $0x40] sm:$0xff]
        %v1515 = vld [vmem:[%s11 + $0x48] sm:$0xff]
        %v1516 = vld [vmem:[%s11 + $0x50] sm:$0xff]
        %v1517 = vld [vmem:[%s11 + $0x58] sm:$0xff]
        %v1518 = vld [vmem:[%s11 + $0x60] sm:$0xff]
        %v1519 = vld [vmem:[%s11 + $0x68] sm:$0xff]
        %v1520 = vld [vmem:[%s11 + $0x70] sm:$0xff]
        %v1521 = vld [vmem:[%s11 + $0x78] sm:$0xff]
        %v1522 = vld [vmem:[%s11 + $0x80] sm:$0xff]
        %v1523 = vld [vmem:[%s11 + $0x88] sm:$0xff]
        %v1524 = vld [vmem:[%s11 + $0x90] sm:$0xff]
        %v1525 = vld [vmem:[%s11 + $0x98] sm:$0xff]
        %v1526 = vld [vmem:[%s11 + $0xa0] sm:$0xff]
        %v1527 = vld [vmem:[%s11 + $0xa8] sm:$0xff]
        %v1528 = vld [vmem:[%s11 + $0xb0] sm:$0xff]
        %v1529 = vld [vmem:[%s11 + $0xb8] sm:$0xff]
        %v1530 = vld [vmem:[%s11 + $0xc0] sm:$0xff]
        %v1531 = vld [vmem:[%s11 + $0xc8] sm:$0xff]
        %v1532 = vld [vmem:[%s11 + $0xd0] sm:$0xff]
        %v1533 = vld [vmem:[%s11 + $0xd8] sm:$0xff]
        %v1534 = vld [vmem:[%s11 + $0xe0] sm:$0xff]
        %v1535 = vld [vmem:[%s11 + $0xe8] sm:$0xff]
        %v1536 = vld [vmem:[%s11 + $0xf0] sm:$0xff]
        %v1537 = vld [vmem:[%s11 + $0xf8] sm:$0xff]
        %v1538 = vld [vmem:[%s12] sm:$0xff]
        %v1539 = vld [vmem:[%s12 + $0x8] sm:$0xff]
        %v1540 = vld [vmem:[%s12 + $0x10] sm:$0xff]
        %v1541 = vld [vmem:[%s12 + $0x18] sm:$0xff]
        %v1542 = vld [vmem:[%s12 + $0x20] sm:$0xff]
        %v1543 = vld [vmem:[%s12 + $0x28] sm:$0xff]
        %v1544 = vld [vmem:[%s12 + $0x30] sm:$0xff]
        %v1545 = vld [vmem:[%s12 + $0x38] sm:$0xff]
        %v1546 = vld [vmem:[%s12 + $0x40] sm:$0xff]
        %v1547 = vld [vmem:[%s12 + $0x48] sm:$0xff]
        %v1548 = vld [vmem:[%s12 + $0x50] sm:$0xff]
        %v1549 = vld [vmem:[%s12 + $0x58] sm:$0xff]
        %v1550 = vld [vmem:[%s12 + $0x60] sm:$0xff]
        %v1551 = vld [vmem:[%s12 + $0x68] sm:$0xff]
        %v1552 = vld [vmem:[%s12 + $0x70] sm:$0xff]
        %v1553 = vld [vmem:[%s12 + $0x78] sm:$0xff]
        %v1554 = vld [vmem:[%s12 + $0x80] sm:$0xff]
        %v1555 = vld [vmem:[%s12 + $0x88] sm:$0xff]
        %v1556 = vld [vmem:[%s12 + $0x90] sm:$0xff]
        %v1557 = vld [vmem:[%s12 + $0x98] sm:$0xff]
        %v1558 = vld [vmem:[%s12 + $0xa0] sm:$0xff]
        %v1559 = vld [vmem:[%s12 + $0xa8] sm:$0xff]
        %v1560 = vld [vmem:[%s12 + $0xb0] sm:$0xff]
        %v1561 = vld [vmem:[%s12 + $0xb8] sm:$0xff]
        %v1562 = vld [vmem:[%s12 + $0xc0] sm:$0xff]
        %v1563 = vld [vmem:[%s12 + $0xc8] sm:$0xff]
        %v1564 = vld [vmem:[%s12 + $0xd0] sm:$0xff]
        %v1565 = vld [vmem:[%s12 + $0xd8] sm:$0xff]
        %v1566 = vld [vmem:[%s12 + $0xe0] sm:$0xff]
        %v1567 = vld [vmem:[%s12 + $0xe8] sm:$0xff]
        %v1568 = vld [vmem:[%s12 + $0xf0] sm:$0xff]
        %v1569 = vld [vmem:[%s12 + $0xf8] sm:$0xff]
        %v1571 = vrot.slane %v1505, 7
        %v1604 = vrot.slane %v1474, 7
        %v1605 = vrot.slane %v1475, 7
        %v1606 = vsel %vm625, %v1604, %v1605
        %v1607 = vrot.slane %v1476, 7
        %v1608 = vsel %vm625, %v1605, %v1607
        %v1609 = vrot.slane %v1477, 7
        %v1610 = vsel %vm625, %v1607, %v1609
        %v1611 = vrot.slane %v1478, 7
        %v1612 = vsel %vm625, %v1609, %v1611
        %v1613 = vrot.slane %v1479, 7
        %v1614 = vsel %vm625, %v1611, %v1613
        %v1615 = vrot.slane %v1480, 7
        %v1616 = vsel %vm625, %v1613, %v1615
        %v1617 = vrot.slane %v1481, 7
        %v1618 = vsel %vm625, %v1615, %v1617
        %v1619 = vrot.slane %v1482, 7
        %v1620 = vsel %vm625, %v1617, %v1619
        %v1621 = vrot.slane %v1483, 7
        %v1622 = vsel %vm625, %v1619, %v1621
        %v1623 = vrot.slane %v1484, 7
        %v1624 = vsel %vm625, %v1621, %v1623
        %v1625 = vrot.slane %v1485, 7
        %v1626 = vsel %vm625, %v1623, %v1625
        %v1627 = vrot.slane %v1486, 7
        %v1628 = vsel %vm625, %v1625, %v1627
        %v1629 = vrot.slane %v1487, 7
        %v1630 = vsel %vm625, %v1627, %v1629
        %v1631 = vrot.slane %v1488, 7
        %v1632 = vsel %vm625, %v1629, %v1631
        %v1633 = vrot.slane %v1489, 7
        %v1634 = vsel %vm625, %v1631, %v1633
        %v1635 = vrot.slane %v1490, 7
        %v1636 = vsel %vm625, %v1633, %v1635
        %v1637 = vrot.slane %v1491, 7
        %v1638 = vsel %vm625, %v1635, %v1637
        %v1639 = vrot.slane %v1492, 7
        %v1640 = vsel %vm625, %v1637, %v1639
        %v1641 = vrot.slane %v1493, 7
        %v1642 = vsel %vm625, %v1639, %v1641
        %v1643 = vrot.slane %v1494, 7
        %v1644 = vsel %vm625, %v1641, %v1643
        %v1645 = vrot.slane %v1495, 7
        %v1646 = vsel %vm625, %v1643, %v1645
        %v1647 = vrot.slane %v1496, 7
        %v1648 = vsel %vm625, %v1645, %v1647
        %v1649 = vrot.slane %v1497, 7
        %v1650 = vsel %vm625, %v1647, %v1649
        %v1651 = vrot.slane %v1498, 7
        %v1652 = vsel %vm625, %v1649, %v1651
        %v1653 = vrot.slane %v1499, 7
        %v1654 = vsel %vm625, %v1651, %v1653
        %v1655 = vrot.slane %v1500, 7
        %v1656 = vsel %vm625, %v1653, %v1655
        %v1657 = vrot.slane %v1501, 7
        %v1658 = vsel %vm625, %v1655, %v1657
        %v1659 = vrot.slane %v1502, 7
        %v1660 = vsel %vm625, %v1657, %v1659
        %v1661 = vrot.slane %v1503, 7
        %v1662 = vsel %vm625, %v1659, %v1661
        %v1663 = vrot.slane %v1504, 7
        %v1664 = vsel %vm625, %v1661, %v1663
        %v1665 = vsel %vm625, %v1663, %v1571
        %v1698 = vsel %vm625, %v1571, %v1604
        %1700 = vset.pattern.permute.xlu0 0
        %1701 = vperm.xlu0 %1700, %v1506
        %v1702 = vpop.permute.xlu0 %1701
        %1705 = vset.pattern.permute.xlu0 0
        %1706 = vperm.xlu0 %1705, %v1507
        %v1707 = vpop.permute.xlu0 %1706
        %1710 = vset.pattern.permute.xlu0 0
        %1711 = vperm.xlu0 %1710, %v1508
        %v1712 = vpop.permute.xlu0 %1711
        %1715 = vset.pattern.permute.xlu0 0
        %1716 = vperm.xlu0 %1715, %v1509
        %v1717 = vpop.permute.xlu0 %1716
        %1720 = vset.pattern.permute.xlu0 0
        %1721 = vperm.xlu0 %1720, %v1510
        %v1722 = vpop.permute.xlu0 %1721
        %1725 = vset.pattern.permute.xlu0 0
        %1726 = vperm.xlu0 %1725, %v1511
        %v1727 = vpop.permute.xlu0 %1726
        %1730 = vset.pattern.permute.xlu0 0
        %1731 = vperm.xlu0 %1730, %v1512
        %v1732 = vpop.permute.xlu0 %1731
        %1735 = vset.pattern.permute.xlu0 0
        %1736 = vperm.xlu0 %1735, %v1513
        %v1737 = vpop.permute.xlu0 %1736
        %1740 = vset.pattern.permute.xlu0 0
        %1741 = vperm.xlu0 %1740, %v1514
        %v1742 = vpop.permute.xlu0 %1741
        %1745 = vset.pattern.permute.xlu0 0
        %1746 = vperm.xlu0 %1745, %v1515
        %v1747 = vpop.permute.xlu0 %1746
        %1750 = vset.pattern.permute.xlu0 0
        %1751 = vperm.xlu0 %1750, %v1516
        %v1752 = vpop.permute.xlu0 %1751
        %1755 = vset.pattern.permute.xlu0 0
        %1756 = vperm.xlu0 %1755, %v1517
        %v1757 = vpop.permute.xlu0 %1756
        %1760 = vset.pattern.permute.xlu0 0
        %1761 = vperm.xlu0 %1760, %v1518
        %v1762 = vpop.permute.xlu0 %1761
        %1765 = vset.pattern.permute.xlu0 0
        %1766 = vperm.xlu0 %1765, %v1519
        %v1767 = vpop.permute.xlu0 %1766
        %1770 = vset.pattern.permute.xlu0 0
        %1771 = vperm.xlu0 %1770, %v1520
        %v1772 = vpop.permute.xlu0 %1771
        %1775 = vset.pattern.permute.xlu0 0
        %1776 = vperm.xlu0 %1775, %v1521
        %v1777 = vpop.permute.xlu0 %1776
        %1780 = vset.pattern.permute.xlu0 0
        %1781 = vperm.xlu0 %1780, %v1522
        %v1782 = vpop.permute.xlu0 %1781
        %1785 = vset.pattern.permute.xlu0 0
        %1786 = vperm.xlu0 %1785, %v1523
        %v1787 = vpop.permute.xlu0 %1786
        %1790 = vset.pattern.permute.xlu0 0
        %1791 = vperm.xlu0 %1790, %v1524
        %v1792 = vpop.permute.xlu0 %1791
        %1795 = vset.pattern.permute.xlu0 0
        %1796 = vperm.xlu0 %1795, %v1525
        %v1797 = vpop.permute.xlu0 %1796
        %1800 = vset.pattern.permute.xlu0 0
        %1801 = vperm.xlu0 %1800, %v1526
        %v1802 = vpop.permute.xlu0 %1801
        %1805 = vset.pattern.permute.xlu0 0
        %1806 = vperm.xlu0 %1805, %v1527
        %v1807 = vpop.permute.xlu0 %1806
        %1810 = vset.pattern.permute.xlu0 0
        %1811 = vperm.xlu0 %1810, %v1528
        %v1812 = vpop.permute.xlu0 %1811
        %1815 = vset.pattern.permute.xlu0 0
        %1816 = vperm.xlu0 %1815, %v1529
        %v1817 = vpop.permute.xlu0 %1816
        %1820 = vset.pattern.permute.xlu0 0
        %1821 = vperm.xlu0 %1820, %v1530
        %v1822 = vpop.permute.xlu0 %1821
        %1825 = vset.pattern.permute.xlu0 0
        %1826 = vperm.xlu0 %1825, %v1531
        %v1827 = vpop.permute.xlu0 %1826
        %1830 = vset.pattern.permute.xlu0 0
        %1831 = vperm.xlu0 %1830, %v1532
        %v1832 = vpop.permute.xlu0 %1831
        %1835 = vset.pattern.permute.xlu0 0
        %1836 = vperm.xlu0 %1835, %v1533
        %v1837 = vpop.permute.xlu0 %1836
        %1840 = vset.pattern.permute.xlu0 0
        %1841 = vperm.xlu0 %1840, %v1534
        %v1842 = vpop.permute.xlu0 %1841
        %1845 = vset.pattern.permute.xlu0 0
        %1846 = vperm.xlu0 %1845, %v1535
        %v1847 = vpop.permute.xlu0 %1846
        %1850 = vset.pattern.permute.xlu0 0
        %1851 = vperm.xlu0 %1850, %v1536
        %v1852 = vpop.permute.xlu0 %1851
        %1855 = vset.pattern.permute.xlu0 0
        %1856 = vperm.xlu0 %1855, %v1537
        %v1857 = vpop.permute.xlu0 %1856
        %v1859 = vmul.f32 %v1698, %v1702
        %v1860 = vmul.f32 %v1606, %v1707
        %v1861 = vmul.f32 %v1608, %v1712
        %v1862 = vmul.f32 %v1610, %v1717
        %v1863 = vmul.f32 %v1612, %v1722
        %v1864 = vmul.f32 %v1614, %v1727
        %v1865 = vmul.f32 %v1616, %v1732
        %v1866 = vmul.f32 %v1618, %v1737
        %v1867 = vmul.f32 %v1620, %v1742
        %v1868 = vmul.f32 %v1622, %v1747
        %v1869 = vmul.f32 %v1624, %v1752
        %v1870 = vmul.f32 %v1626, %v1757
        %v1871 = vmul.f32 %v1628, %v1762
        %v1872 = vmul.f32 %v1630, %v1767
        %v1873 = vmul.f32 %v1632, %v1772
        %v1874 = vmul.f32 %v1634, %v1777
        %v1875 = vmul.f32 %v1636, %v1782
        %v1876 = vmul.f32 %v1638, %v1787
        %v1877 = vmul.f32 %v1640, %v1792
        %v1878 = vmul.f32 %v1642, %v1797
        %v1879 = vmul.f32 %v1644, %v1802
        %v1880 = vmul.f32 %v1646, %v1807
        %v1881 = vmul.f32 %v1648, %v1812
        %v1882 = vmul.f32 %v1650, %v1817
        %v1883 = vmul.f32 %v1652, %v1822
        %v1884 = vmul.f32 %v1654, %v1827
        %v1885 = vmul.f32 %v1656, %v1832
        %v1886 = vmul.f32 %v1658, %v1837
        %v1887 = vmul.f32 %v1660, %v1842
        %v1888 = vmul.f32 %v1662, %v1847
        %v1889 = vmul.f32 %v1664, %v1852
        %v1890 = vmul.f32 %v1665, %v1857
        %vm1891 = vcmask 1046528
        %v1892 = vrot.slane %v1474, 1
        %v1893 = vrot.slane %v1475, 1
        %v1894 = vsel %vm1891, %v1892, %v1893
        %v1895 = vrot.slane %v1476, 1
        %v1896 = vsel %vm1891, %v1893, %v1895
        %v1897 = vrot.slane %v1477, 1
        %v1898 = vsel %vm1891, %v1895, %v1897
        %v1899 = vrot.slane %v1478, 1
        %v1900 = vsel %vm1891, %v1897, %v1899
        %v1901 = vrot.slane %v1479, 1
        %v1902 = vsel %vm1891, %v1899, %v1901
        %v1903 = vrot.slane %v1480, 1
        %v1904 = vsel %vm1891, %v1901, %v1903
        %v1905 = vrot.slane %v1481, 1
        %v1906 = vsel %vm1891, %v1903, %v1905
        %v1907 = vrot.slane %v1482, 1
        %v1908 = vsel %vm1891, %v1905, %v1907
        %v1909 = vrot.slane %v1483, 1
        %v1910 = vsel %vm1891, %v1907, %v1909
        %v1911 = vrot.slane %v1484, 1
        %v1912 = vsel %vm1891, %v1909, %v1911
        %v1913 = vrot.slane %v1485, 1
        %v1914 = vsel %vm1891, %v1911, %v1913
        %v1915 = vrot.slane %v1486, 1
        %v1916 = vsel %vm1891, %v1913, %v1915
        %v1917 = vrot.slane %v1487, 1
        %v1918 = vsel %vm1891, %v1915, %v1917
        %v1919 = vrot.slane %v1488, 1
        %v1920 = vsel %vm1891, %v1917, %v1919
        %v1921 = vrot.slane %v1489, 1
        %v1922 = vsel %vm1891, %v1919, %v1921
        %v1923 = vrot.slane %v1490, 1
        %v1924 = vsel %vm1891, %v1921, %v1923
        %v1925 = vrot.slane %v1491, 1
        %v1926 = vsel %vm1891, %v1923, %v1925
        %v1927 = vrot.slane %v1492, 1
        %v1928 = vsel %vm1891, %v1925, %v1927
        %v1929 = vrot.slane %v1493, 1
        %v1930 = vsel %vm1891, %v1927, %v1929
        %v1931 = vrot.slane %v1494, 1
        %v1932 = vsel %vm1891, %v1929, %v1931
        %v1933 = vrot.slane %v1495, 1
        %v1934 = vsel %vm1891, %v1931, %v1933
        %v1935 = vrot.slane %v1496, 1
        %v1936 = vsel %vm1891, %v1933, %v1935
        %v1937 = vrot.slane %v1497, 1
        %v1938 = vsel %vm1891, %v1935, %v1937
        %v1939 = vrot.slane %v1498, 1
        %v1940 = vsel %vm1891, %v1937, %v1939
        %v1941 = vrot.slane %v1499, 1
        %v1942 = vsel %vm1891, %v1939, %v1941
        %v1943 = vrot.slane %v1500, 1
        %v1944 = vsel %vm1891, %v1941, %v1943
        %v1945 = vrot.slane %v1501, 1
        %v1946 = vsel %vm1891, %v1943, %v1945
        %v1947 = vrot.slane %v1502, 1
        %v1948 = vsel %vm1891, %v1945, %v1947
        %v1949 = vrot.slane %v1503, 1
        %v1950 = vsel %vm1891, %v1947, %v1949
        %v1951 = vrot.slane %v1504, 1
        %v1952 = vsel %vm1891, %v1949, %v1951
        %v1953 = vrot.slane %v1505, 1
        %v1954 = vsel %vm1891, %v1951, %v1953
        %v1988 = vsel %vm1891, %v1953, %v1892
        %1990 = vset.pattern.permute.xlu0 0
        %1991 = vperm.xlu0 %1990, %v1538
        %v1992 = vpop.permute.xlu0 %1991
        %1995 = vset.pattern.permute.xlu0 0
        %1996 = vperm.xlu0 %1995, %v1539
        %v1997 = vpop.permute.xlu0 %1996
        %2000 = vset.pattern.permute.xlu0 0
        %2001 = vperm.xlu0 %2000, %v1540
        %v2002 = vpop.permute.xlu0 %2001
        %2005 = vset.pattern.permute.xlu0 0
        %2006 = vperm.xlu0 %2005, %v1541
        %v2007 = vpop.permute.xlu0 %2006
        %2010 = vset.pattern.permute.xlu0 0
        %2011 = vperm.xlu0 %2010, %v1542
        %v2012 = vpop.permute.xlu0 %2011
        %2015 = vset.pattern.permute.xlu0 0
        %2016 = vperm.xlu0 %2015, %v1543
        %v2017 = vpop.permute.xlu0 %2016
        %2020 = vset.pattern.permute.xlu0 0
        %2021 = vperm.xlu0 %2020, %v1544
        %v2022 = vpop.permute.xlu0 %2021
        %2025 = vset.pattern.permute.xlu0 0
        %2026 = vperm.xlu0 %2025, %v1545
        %v2027 = vpop.permute.xlu0 %2026
        %2030 = vset.pattern.permute.xlu0 0
        %2031 = vperm.xlu0 %2030, %v1546
        %v2032 = vpop.permute.xlu0 %2031
        %2035 = vset.pattern.permute.xlu0 0
        %2036 = vperm.xlu0 %2035, %v1547
        %v2037 = vpop.permute.xlu0 %2036
        %2040 = vset.pattern.permute.xlu0 0
        %2041 = vperm.xlu0 %2040, %v1548
        %v2042 = vpop.permute.xlu0 %2041
        %2045 = vset.pattern.permute.xlu0 0
        %2046 = vperm.xlu0 %2045, %v1549
        %v2047 = vpop.permute.xlu0 %2046
        %2050 = vset.pattern.permute.xlu0 0
        %2051 = vperm.xlu0 %2050, %v1550
        %v2052 = vpop.permute.xlu0 %2051
        %2055 = vset.pattern.permute.xlu0 0
        %2056 = vperm.xlu0 %2055, %v1551
        %v2057 = vpop.permute.xlu0 %2056
        %2060 = vset.pattern.permute.xlu0 0
        %2061 = vperm.xlu0 %2060, %v1552
        %v2062 = vpop.permute.xlu0 %2061
        %2065 = vset.pattern.permute.xlu0 0
        %2066 = vperm.xlu0 %2065, %v1553
        %v2067 = vpop.permute.xlu0 %2066
        %2070 = vset.pattern.permute.xlu0 0
        %2071 = vperm.xlu0 %2070, %v1554
        %v2072 = vpop.permute.xlu0 %2071
        %2075 = vset.pattern.permute.xlu0 0
        %2076 = vperm.xlu0 %2075, %v1555
        %v2077 = vpop.permute.xlu0 %2076
        %2080 = vset.pattern.permute.xlu0 0
        %2081 = vperm.xlu0 %2080, %v1556
        %v2082 = vpop.permute.xlu0 %2081
        %2085 = vset.pattern.permute.xlu0 0
        %2086 = vperm.xlu0 %2085, %v1557
        %v2087 = vpop.permute.xlu0 %2086
        %2090 = vset.pattern.permute.xlu0 0
        %2091 = vperm.xlu0 %2090, %v1558
        %v2092 = vpop.permute.xlu0 %2091
        %2095 = vset.pattern.permute.xlu0 0
        %2096 = vperm.xlu0 %2095, %v1559
        %v2097 = vpop.permute.xlu0 %2096
        %2100 = vset.pattern.permute.xlu0 0
        %2101 = vperm.xlu0 %2100, %v1560
        %v2102 = vpop.permute.xlu0 %2101
        %2105 = vset.pattern.permute.xlu0 0
        %2106 = vperm.xlu0 %2105, %v1561
        %v2107 = vpop.permute.xlu0 %2106
        %2110 = vset.pattern.permute.xlu0 0
        %2111 = vperm.xlu0 %2110, %v1562
        %v2112 = vpop.permute.xlu0 %2111
        %2115 = vset.pattern.permute.xlu0 0
        %2116 = vperm.xlu0 %2115, %v1563
        %v2117 = vpop.permute.xlu0 %2116
        %2120 = vset.pattern.permute.xlu0 0
        %2121 = vperm.xlu0 %2120, %v1564
        %v2122 = vpop.permute.xlu0 %2121
        %2125 = vset.pattern.permute.xlu0 0
        %2126 = vperm.xlu0 %2125, %v1565
        %v2127 = vpop.permute.xlu0 %2126
        %2130 = vset.pattern.permute.xlu0 0
        %2131 = vperm.xlu0 %2130, %v1566
        %v2132 = vpop.permute.xlu0 %2131
        %2135 = vset.pattern.permute.xlu0 0
        %2136 = vperm.xlu0 %2135, %v1567
        %v2137 = vpop.permute.xlu0 %2136
        %2140 = vset.pattern.permute.xlu0 0
        %2141 = vperm.xlu0 %2140, %v1568
        %v2142 = vpop.permute.xlu0 %2141
        %2145 = vset.pattern.permute.xlu0 0
        %2146 = vperm.xlu0 %2145, %v1569
        %v2147 = vpop.permute.xlu0 %2146
        %v2149 = vmul.f32 %v1894, %v1992
        %v2150 = vmul.f32 %v1896, %v1997
        %v2151 = vmul.f32 %v1898, %v2002
        %v2152 = vmul.f32 %v1900, %v2007
        %v2153 = vmul.f32 %v1902, %v2012
        %v2154 = vmul.f32 %v1904, %v2017
        %v2155 = vmul.f32 %v1906, %v2022
        %v2156 = vmul.f32 %v1908, %v2027
        %v2157 = vmul.f32 %v1910, %v2032
        %v2158 = vmul.f32 %v1912, %v2037
        %v2159 = vmul.f32 %v1914, %v2042
        %v2160 = vmul.f32 %v1916, %v2047
        %v2161 = vmul.f32 %v1918, %v2052
        %v2162 = vmul.f32 %v1920, %v2057
        %v2163 = vmul.f32 %v1922, %v2062
        %v2164 = vmul.f32 %v1924, %v2067
        %v2165 = vmul.f32 %v1926, %v2072
        %v2166 = vmul.f32 %v1928, %v2077
        %v2167 = vmul.f32 %v1930, %v2082
        %v2168 = vmul.f32 %v1932, %v2087
        %v2169 = vmul.f32 %v1934, %v2092
        %v2170 = vmul.f32 %v1936, %v2097
        %v2171 = vmul.f32 %v1938, %v2102
        %v2172 = vmul.f32 %v1940, %v2107
        %v2173 = vmul.f32 %v1942, %v2112
        %v2174 = vmul.f32 %v1944, %v2117
        %v2175 = vmul.f32 %v1946, %v2122
        %v2176 = vmul.f32 %v1948, %v2127
        %v2177 = vmul.f32 %v1950, %v2132
        %v2178 = vmul.f32 %v1952, %v2137
        %v2179 = vmul.f32 %v1954, %v2142
        %v2180 = vmul.f32 %v1988, %v2147
        %v2181 = vpack.c.bf16 %v1860, %v1859
        %v2182 = vpack.c.bf16 %v1862, %v1861
        %v2183 = vpack.c.bf16 %v1864, %v1863
        %v2184 = vpack.c.bf16 %v1866, %v1865
        %v2185 = vpack.c.bf16 %v1868, %v1867
        %v2186 = vpack.c.bf16 %v1870, %v1869
        %v2187 = vpack.c.bf16 %v1872, %v1871
        %v2188 = vpack.c.bf16 %v1874, %v1873
        %v2189 = vpack.c.bf16 %v1876, %v1875
        %v2190 = vpack.c.bf16 %v1878, %v1877
        %v2191 = vpack.c.bf16 %v1880, %v1879
        %v2192 = vpack.c.bf16 %v1882, %v1881
        %v2193 = vpack.c.bf16 %v1884, %v1883
        %v2194 = vpack.c.bf16 %v1886, %v1885
        %v2195 = vpack.c.bf16 %v1888, %v1887
        %v2196 = vpack.c.bf16 %v1890, %v1889
        %v2197 = vld [vmem:[%s3] sm:$0xf]
        %v2198 = vld [vmem:[%s3 + $0x4] sm:$0xf]
        %v2199 = vld [vmem:[%s3 + $0x8] sm:$0xf]
        %v2200 = vld [vmem:[%s3 + $0xc] sm:$0xf]
        %v2201 = vld [vmem:[%s3 + $0x10] sm:$0xf]
        %v2202 = vld [vmem:[%s3 + $0x14] sm:$0xf]
        %v2203 = vld [vmem:[%s3 + $0x18] sm:$0xf]
        %v2204 = vld [vmem:[%s3 + $0x1c] sm:$0xf]
        %v2205 = vpack.c.bf16 %v1475, %v1474
        %v2206 = vpack.c.bf16 %v1477, %v1476
        %v2207 = vpack.c.bf16 %v1479, %v1478
        %v2208 = vpack.c.bf16 %v1481, %v1480
        %v2209 = vpack.c.bf16 %v1483, %v1482
        %v2210 = vpack.c.bf16 %v1485, %v1484
        %v2211 = vpack.c.bf16 %v1487, %v1486
        %v2212 = vpack.c.bf16 %v1489, %v1488
        %v2213 = vpack.c.bf16 %v1491, %v1490
        %v2214 = vpack.c.bf16 %v1493, %v1492
        %v2215 = vpack.c.bf16 %v1495, %v1494
        %v2216 = vpack.c.bf16 %v1497, %v1496
        %v2217 = vpack.c.bf16 %v1499, %v1498
        %v2218 = vpack.c.bf16 %v1501, %v1500
        %v2219 = vpack.c.bf16 %v1503, %v1502
        %v2220 = vpack.c.bf16 %v1505, %v1504
        %v2221 = vld [vmem:[%s3 + $0x20] sm:$0xf]
        %v2222 = vld [vmem:[%s3 + $0x24] sm:$0xf]
        %v2223 = vld [vmem:[%s3 + $0x28] sm:$0xf]
        %v2224 = vld [vmem:[%s3 + $0x2c] sm:$0xf]
        %v2225 = vld [vmem:[%s3 + $0x30] sm:$0xf]
        %v2226 = vld [vmem:[%s3 + $0x34] sm:$0xf]
        %v2227 = vld [vmem:[%s3 + $0x38] sm:$0xf]
        %v2228 = vld [vmem:[%s3 + $0x3c] sm:$0xf]
        %v2237 = vunpack.c.l.b16 %v2221
        %v2238 = vunpack.c.l.b16 %v2222
        %v2239 = vunpack.c.l.b16 %v2223
        %v2240 = vunpack.c.l.b16 %v2224
        %v2241 = vunpack.c.l.b16 %v2225
        %v2242 = vunpack.c.l.b16 %v2226
        %v2243 = vunpack.c.l.b16 %v2227
        %v2244 = vunpack.c.l.b16 %v2228
        %v2245 = vpack.c.b16 %v2238, %v2237
        %v2246 = vpack.c.b16 %v2240, %v2239
        %v2247 = vpack.c.b16 %v2242, %v2241
        %v2248 = vpack.c.b16 %v2244, %v2243
        %vm2253 = vcmask 523264
        %v2255 = vsel %vm2253, %v2205, 0
        %v2258 = vsel %vm2253, %v2206, 0
        %v2261 = vsel %vm2253, %v2207, 0
        %v2264 = vsel %vm2253, %v2208, 0
        %v2267 = vsel %vm2253, %v2209, 0
        %v2270 = vsel %vm2253, %v2210, 0
        %v2273 = vsel %vm2253, %v2211, 0
        %v2276 = vsel %vm2253, %v2212, 0
        %v2279 = vsel %vm2253, %v2213, 0
        %v2282 = vsel %vm2253, %v2214, 0
        %v2285 = vsel %vm2253, %v2215, 0
        %v2288 = vsel %vm2253, %v2216, 0
        %v2291 = vsel %vm2253, %v2217, 0
        %v2294 = vsel %vm2253, %v2218, 0
        %v2297 = vsel %vm2253, %v2219, 0
        %v2300 = vsel %vm2253, %v2220, 0
        %2302 = vmatprep.subr.bf16.mxu0 0
        %2303 = vmatpush1.bf16.msra.mxu0 %v2245
        %2304 = vmatprep.subr.bf16.mxu0 0
        %2305 = vmatpush1.bf16.msra.mxu0 %v2246
        %2306 = vmatprep.subr.bf16.mxu0 0
        %2307 = vmatpush1.bf16.msra.mxu0 %v2247
        %2308 = vmatprep.subr.bf16.mxu0 0
        %2309 = vmatpush1.bf16.msra.mxu0 %v2248
        %2310 = vmatprep.subr.bf16.mxu0 0
        %2311 = vmatpush1.bf16.msra.mxu0 0
        %2312 = vmatprep.subr.bf16.mxu0 0
        %2313 = vmatpush1.bf16.msra.mxu0 0
        %2314 = vmatprep.subr.bf16.mxu0 0
        %2315 = vmatpush1.bf16.msra.mxu0 0
        %2316 = vmatprep.subr.bf16.mxu0 0
        %2317 = vmatpush1.bf16.msra.mxu0 0
        %2318 = vmatprep.subr.bf16.mxu0 0
        %2319 = vmatpush1.bf16.msra.mxu0 0
        %2320 = vmatprep.subr.bf16.mxu0 0
        %2321 = vmatpush1.bf16.msra.mxu0 0
        %2322 = vmatprep.subr.bf16.mxu0 0
        %2323 = vmatpush1.bf16.msra.mxu0 0
        %2324 = vmatprep.subr.bf16.mxu0 0
        %2325 = vmatpush1.bf16.msra.mxu0 0
        %2326 = vmatprep.subr.bf16.mxu0 0
        %2327 = vmatpush1.bf16.msra.mxu0 0
        %2328 = vmatprep.subr.bf16.mxu0 0
        %2329 = vmatpush1.bf16.msra.mxu0 0
        %2330 = vmatprep.subr.bf16.mxu0 0
        %2331 = vmatpush1.bf16.msra.mxu0 0
        %2332 = vmatprep.subr.bf16.mxu0 0
        %2333 = vmatpush1.bf16.msra.mxu0 0
        %2334 = vmatprep.mubr.bf16.mxu0 0
        %2335 = vmatmul.mubr.bf16.gmra.mrb[0].mxu0 %v2255
        %v2336 = vpop.f32.mrb[0].mxu0
        %v2337 = vadd.f32 0.0, %v2336
        %v2338 = vpop.f32.mrb[0].mxu0
        %v2339 = vpop.f32.mrb[0].mxu0
        %v2340 = vadd.f32 0.0, %v2339
        %v2341 = vpop.f32.mrb[0].mxu0
        %2342 = vmatprep.mubr.bf16.mxu0 0
        %2343 = vmatmul.mubr.bf16.gmra.mrb[0].mxu0 %v2258
        %v2344 = vpop.f32.mrb[0].mxu0
        %v2345 = vadd.f32 0.0, %v2344
        %v2346 = vpop.f32.mrb[0].mxu0
        %v2347 = vpop.f32.mrb[0].mxu0
        %v2348 = vadd.f32 0.0, %v2347
        %v2349 = vpop.f32.mrb[0].mxu0
        %2350 = vmatprep.mubr.bf16.mxu0 0
        %2351 = vmatmul.mubr.bf16.gmra.mrb[0].mxu0 %v2261
        %v2352 = vpop.f32.mrb[0].mxu0
        %v2353 = vadd.f32 0.0, %v2352
        %v2354 = vpop.f32.mrb[0].mxu0
        %v2355 = vpop.f32.mrb[0].mxu0
        %v2356 = vadd.f32 0.0, %v2355
        %v2357 = vpop.f32.mrb[0].mxu0
        %2358 = vmatprep.mubr.bf16.mxu0 0
        %2359 = vmatmul.mubr.bf16.gmra.mrb[0].mxu0 %v2264
        %v2360 = vpop.f32.mrb[0].mxu0
        %v2361 = vadd.f32 0.0, %v2360
        %v2362 = vpop.f32.mrb[0].mxu0
        %v2363 = vpop.f32.mrb[0].mxu0
        %v2364 = vadd.f32 0.0, %v2363
        %v2365 = vpop.f32.mrb[0].mxu0
        %2366 = vmatprep.mubr.bf16.mxu0 0
        %2367 = vmatmul.mubr.bf16.gmra.mrb[0].mxu0 %v2267
        %v2368 = vpop.f32.mrb[0].mxu0
        %v2369 = vadd.f32 0.0, %v2368
        %v2370 = vpop.f32.mrb[0].mxu0
        %v2371 = vpop.f32.mrb[0].mxu0
        %v2372 = vadd.f32 0.0, %v2371
        %v2373 = vpop.f32.mrb[0].mxu0
        %2374 = vmatprep.mubr.bf16.mxu0 0
        %2375 = vmatmul.mubr.bf16.gmra.mrb[0].mxu0 %v2270
        %v2376 = vpop.f32.mrb[0].mxu0
        %v2377 = vadd.f32 0.0, %v2376
        %v2378 = vpop.f32.mrb[0].mxu0
        %v2379 = vpop.f32.mrb[0].mxu0
        %v2380 = vadd.f32 0.0, %v2379
        %v2381 = vpop.f32.mrb[0].mxu0
        %2382 = vmatprep.mubr.bf16.mxu0 0
        %2383 = vmatmul.mubr.bf16.gmra.mrb[0].mxu0 %v2273
        %v2384 = vpop.f32.mrb[0].mxu0
        %v2385 = vadd.f32 0.0, %v2384
        %v2386 = vpop.f32.mrb[0].mxu0
        %v2387 = vpop.f32.mrb[0].mxu0
        %v2388 = vadd.f32 0.0, %v2387
        %v2389 = vpop.f32.mrb[0].mxu0
        %2390 = vmatprep.mubr.bf16.mxu0 0
        %2391 = vmatmul.mubr.bf16.gmra.mrb[0].mxu0 %v2276
        %v2392 = vpop.f32.mrb[0].mxu0
        %v2393 = vadd.f32 0.0, %v2392
        %v2394 = vpop.f32.mrb[0].mxu0
        %v2395 = vpop.f32.mrb[0].mxu0
        %v2396 = vadd.f32 0.0, %v2395
        %v2397 = vpop.f32.mrb[0].mxu0
        %2398 = vmatprep.mubr.bf16.mxu0 0
        %2399 = vmatmul.mubr.bf16.gmra.mrb[0].mxu0 %v2279
        %v2400 = vpop.f32.mrb[0].mxu0
        %v2401 = vadd.f32 0.0, %v2400
        %v2402 = vpop.f32.mrb[0].mxu0
        %v2403 = vpop.f32.mrb[0].mxu0
        %v2404 = vadd.f32 0.0, %v2403
        %v2405 = vpop.f32.mrb[0].mxu0
        %2406 = vmatprep.mubr.bf16.mxu0 0
        %2407 = vmatmul.mubr.bf16.gmra.mrb[0].mxu0 %v2282
        %v2408 = vpop.f32.mrb[0].mxu0
        %v2409 = vadd.f32 0.0, %v2408
        %v2410 = vpop.f32.mrb[0].mxu0
        %v2411 = vpop.f32.mrb[0].mxu0
        %v2412 = vadd.f32 0.0, %v2411
        %v2413 = vpop.f32.mrb[0].mxu0
        %2414 = vmatprep.mubr.bf16.mxu0 0
        %2415 = vmatmul.mubr.bf16.gmra.mrb[0].mxu0 %v2285
        %v2416 = vpop.f32.mrb[0].mxu0
        %v2417 = vadd.f32 0.0, %v2416
        %v2418 = vpop.f32.mrb[0].mxu0
        %v2419 = vpop.f32.mrb[0].mxu0
        %v2420 = vadd.f32 0.0, %v2419
        %v2421 = vpop.f32.mrb[0].mxu0
        %2422 = vmatprep.mubr.bf16.mxu0 0
        %2423 = vmatmul.mubr.bf16.gmra.mrb[0].mxu0 %v2288
        %v2424 = vpop.f32.mrb[0].mxu0
        %v2425 = vadd.f32 0.0, %v2424
        %v2426 = vpop.f32.mrb[0].mxu0
        %v2427 = vpop.f32.mrb[0].mxu0
        %v2428 = vadd.f32 0.0, %v2427
        %v2429 = vpop.f32.mrb[0].mxu0
        %2430 = vmatprep.mubr.bf16.mxu0 0
        %2431 = vmatmul.mubr.bf16.gmra.mrb[0].mxu0 %v2291
        %v2432 = vpop.f32.mrb[0].mxu0
        %v2433 = vadd.f32 0.0, %v2432
        %v2434 = vpop.f32.mrb[0].mxu0
        %v2435 = vpop.f32.mrb[0].mxu0
        %v2436 = vadd.f32 0.0, %v2435
        %v2437 = vpop.f32.mrb[0].mxu0
        %2438 = vmatprep.mubr.bf16.mxu0 0
        %2439 = vmatmul.mubr.bf16.gmra.mrb[0].mxu0 %v2294
        %v2440 = vpop.f32.mrb[0].mxu0
        %v2441 = vadd.f32 0.0, %v2440
        %v2442 = vpop.f32.mrb[0].mxu0
        %v2443 = vpop.f32.mrb[0].mxu0
        %v2444 = vadd.f32 0.0, %v2443
        %v2445 = vpop.f32.mrb[0].mxu0
        %2446 = vmatprep.mubr.bf16.mxu0 0
        %2447 = vmatmul.mubr.bf16.gmra.mrb[0].mxu0 %v2297
        %v2448 = vpop.f32.mrb[0].mxu0
        %v2449 = vadd.f32 0.0, %v2448
        %v2450 = vpop.f32.mrb[0].mxu0
        %v2451 = vpop.f32.mrb[0].mxu0
        %v2452 = vadd.f32 0.0, %v2451
        %v2453 = vpop.f32.mrb[0].mxu0
        %2454 = vmatprep.mubr.bf16.mxu0 0
        %2455 = vmatmul.mubr.bf16.gmra.mrb[0].mxu0 %v2300
        %v2456 = vpop.f32.mrb[0].mxu0
        %v2457 = vadd.f32 0.0, %v2456
        %v2458 = vpop.f32.mrb[0].mxu0
        %v2459 = vpop.f32.mrb[0].mxu0
        %v2460 = vadd.f32 0.0, %v2459
        %v2461 = vpop.f32.mrb[0].mxu0
        %2462 = vdwg.mxu0
        %v2471 = vunpack.c.l.b16 %v2197
        %v2472 = vunpack.c.l.b16 %v2198
        %v2473 = vunpack.c.l.b16 %v2199
        %v2474 = vunpack.c.l.b16 %v2200
        %v2475 = vunpack.c.l.b16 %v2201
        %v2476 = vunpack.c.l.b16 %v2202
        %v2477 = vunpack.c.l.b16 %v2203
        %v2478 = vunpack.c.l.b16 %v2204
        %v2479 = vpack.c.b16 %v2472, %v2471
        %v2480 = vpack.c.b16 %v2474, %v2473
        %v2481 = vpack.c.b16 %v2476, %v2475
        %v2482 = vpack.c.b16 %v2478, %v2477
        %v2488 = vsel %vm2253, %v2181, 0
        %v2491 = vsel %vm2253, %v2182, 0
        %v2494 = vsel %vm2253, %v2183, 0
        %v2497 = vsel %vm2253, %v2184, 0
        %v2500 = vsel %vm2253, %v2185, 0
        %v2503 = vsel %vm2253, %v2186, 0
        %v2506 = vsel %vm2253, %v2187, 0
        %v2509 = vsel %vm2253, %v2188, 0
        %v2512 = vsel %vm2253, %v2189, 0
        %v2515 = vsel %vm2253, %v2190, 0
        %v2518 = vsel %vm2253, %v2191, 0
        %v2521 = vsel %vm2253, %v2192, 0
        %v2524 = vsel %vm2253, %v2193, 0
        %v2527 = vsel %vm2253, %v2194, 0
        %v2530 = vsel %vm2253, %v2195, 0
        %v2533 = vsel %vm2253, %v2196, 0
        %2535 = vmatprep.subr.bf16.mxu0 0
        %2536 = vmatpush1.bf16.msra.mxu0 %v2479
        %2537 = vmatprep.subr.bf16.mxu0 0
        %2538 = vmatpush1.bf16.msra.mxu0 %v2480
        %2539 = vmatprep.subr.bf16.mxu0 0
        %2540 = vmatpush1.bf16.msra.mxu0 %v2481
        %2541 = vmatprep.subr.bf16.mxu0 0
        %2542 = vmatpush1.bf16.msra.mxu0 %v2482
        %2543 = vmatprep.subr.bf16.mxu0 0
        %2544 = vmatpush1.bf16.msra.mxu0 0
        %2545 = vmatprep.subr.bf16.mxu0 0
        %2546 = vmatpush1.bf16.msra.mxu0 0
        %2547 = vmatprep.subr.bf16.mxu0 0
        %2548 = vmatpush1.bf16.msra.mxu0 0
        %2549 = vmatprep.subr.bf16.mxu0 0
        %2550 = vmatpush1.bf16.msra.mxu0 0
        %2551 = vmatprep.subr.bf16.mxu0 0
        %2552 = vmatpush1.bf16.msra.mxu0 0
        %2553 = vmatprep.subr.bf16.mxu0 0
        %2554 = vmatpush1.bf16.msra.mxu0 0
        %2555 = vmatprep.subr.bf16.mxu0 0
        %2556 = vmatpush1.bf16.msra.mxu0 0
        %2557 = vmatprep.subr.bf16.mxu0 0
        %2558 = vmatpush1.bf16.msra.mxu0 0
        %2559 = vmatprep.subr.bf16.mxu0 0
        %2560 = vmatpush1.bf16.msra.mxu0 0
        %2561 = vmatprep.subr.bf16.mxu0 0
        %2562 = vmatpush1.bf16.msra.mxu0 0
        %2563 = vmatprep.subr.bf16.mxu0 0
        %2564 = vmatpush1.bf16.msra.mxu0 0
        %2565 = vmatprep.subr.bf16.mxu0 0
        %2566 = vmatpush1.bf16.msra.mxu0 0
        %2567 = vmatprep.mubr.bf16.mxu0 0
        %2568 = vmatmul.mubr.bf16.gmra.mrb[0].mxu0 %v2488
        %v2569 = vpop.f32.mrb[0].mxu0
        %v2570 = vadd.f32 %v2337, %v2569
        %v2571 = vpop.f32.mrb[0].mxu0
        %v2572 = vpop.f32.mrb[0].mxu0
        %v2573 = vadd.f32 %v2340, %v2572
        %v2574 = vpop.f32.mrb[0].mxu0
        %2575 = vmatprep.mubr.bf16.mxu0 0
        %2576 = vmatmul.mubr.bf16.gmra.mrb[0].mxu0 %v2491
        %v2577 = vpop.f32.mrb[0].mxu0
        %v2578 = vadd.f32 %v2345, %v2577
        %v2579 = vpop.f32.mrb[0].mxu0
        %v2580 = vpop.f32.mrb[0].mxu0
        %v2581 = vadd.f32 %v2348, %v2580
        %v2582 = vpop.f32.mrb[0].mxu0
        %2583 = vmatprep.mubr.bf16.mxu0 0
        %2584 = vmatmul.mubr.bf16.gmra.mrb[0].mxu0 %v2494
        %v2585 = vpop.f32.mrb[0].mxu0
        %v2586 = vadd.f32 %v2353, %v2585
        %v2587 = vpop.f32.mrb[0].mxu0
        %v2588 = vpop.f32.mrb[0].mxu0
        %v2589 = vadd.f32 %v2356, %v2588
        %v2590 = vpop.f32.mrb[0].mxu0
        %2591 = vmatprep.mubr.bf16.mxu0 0
        %2592 = vmatmul.mubr.bf16.gmra.mrb[0].mxu0 %v2497
        %v2593 = vpop.f32.mrb[0].mxu0
        %v2594 = vadd.f32 %v2361, %v2593
        %v2595 = vpop.f32.mrb[0].mxu0
        %v2596 = vpop.f32.mrb[0].mxu0
        %v2597 = vadd.f32 %v2364, %v2596
        %v2598 = vpop.f32.mrb[0].mxu0
        %2599 = vmatprep.mubr.bf16.mxu0 0
        %2600 = vmatmul.mubr.bf16.gmra.mrb[0].mxu0 %v2500
        %v2601 = vpop.f32.mrb[0].mxu0
        %v2602 = vadd.f32 %v2369, %v2601
        %v2603 = vpop.f32.mrb[0].mxu0
        %v2604 = vpop.f32.mrb[0].mxu0
        %v2605 = vadd.f32 %v2372, %v2604
        %v2606 = vpop.f32.mrb[0].mxu0
        %2607 = vmatprep.mubr.bf16.mxu0 0
        %2608 = vmatmul.mubr.bf16.gmra.mrb[0].mxu0 %v2503
        %v2609 = vpop.f32.mrb[0].mxu0
        %v2610 = vadd.f32 %v2377, %v2609
        %v2611 = vpop.f32.mrb[0].mxu0
        %v2612 = vpop.f32.mrb[0].mxu0
        %v2613 = vadd.f32 %v2380, %v2612
        %v2614 = vpop.f32.mrb[0].mxu0
        %2615 = vmatprep.mubr.bf16.mxu0 0
        %2616 = vmatmul.mubr.bf16.gmra.mrb[0].mxu0 %v2506
        %v2617 = vpop.f32.mrb[0].mxu0
        %v2618 = vadd.f32 %v2385, %v2617
        %v2619 = vpop.f32.mrb[0].mxu0
        %v2620 = vpop.f32.mrb[0].mxu0
        %v2621 = vadd.f32 %v2388, %v2620
        %v2622 = vpop.f32.mrb[0].mxu0
        %2623 = vmatprep.mubr.bf16.mxu0 0
        %2624 = vmatmul.mubr.bf16.gmra.mrb[0].mxu0 %v2509
        %v2625 = vpop.f32.mrb[0].mxu0
        %v2626 = vadd.f32 %v2393, %v2625
        %v2627 = vpop.f32.mrb[0].mxu0
        %v2628 = vpop.f32.mrb[0].mxu0
        %v2629 = vadd.f32 %v2396, %v2628
        %v2630 = vpop.f32.mrb[0].mxu0
        %2631 = vmatprep.mubr.bf16.mxu0 0
        %2632 = vmatmul.mubr.bf16.gmra.mrb[0].mxu0 %v2512
        %v2633 = vpop.f32.mrb[0].mxu0
        %v2634 = vadd.f32 %v2401, %v2633
        %v2635 = vpop.f32.mrb[0].mxu0
        %v2636 = vpop.f32.mrb[0].mxu0
        %v2637 = vadd.f32 %v2404, %v2636
        %v2638 = vpop.f32.mrb[0].mxu0
        %2639 = vmatprep.mubr.bf16.mxu0 0
        %2640 = vmatmul.mubr.bf16.gmra.mrb[0].mxu0 %v2515
        %v2641 = vpop.f32.mrb[0].mxu0
        %v2642 = vadd.f32 %v2409, %v2641
        %v2643 = vpop.f32.mrb[0].mxu0
        %v2644 = vpop.f32.mrb[0].mxu0
        %v2645 = vadd.f32 %v2412, %v2644
        %v2646 = vpop.f32.mrb[0].mxu0
        %2647 = vmatprep.mubr.bf16.mxu0 0
        %2648 = vmatmul.mubr.bf16.gmra.mrb[0].mxu0 %v2518
        %v2649 = vpop.f32.mrb[0].mxu0
        %v2650 = vadd.f32 %v2417, %v2649
        %v2651 = vpop.f32.mrb[0].mxu0
        %v2652 = vpop.f32.mrb[0].mxu0
        %v2653 = vadd.f32 %v2420, %v2652
        %v2654 = vpop.f32.mrb[0].mxu0
        %2655 = vmatprep.mubr.bf16.mxu0 0
        %2656 = vmatmul.mubr.bf16.gmra.mrb[0].mxu0 %v2521
        %v2657 = vpop.f32.mrb[0].mxu0
        %v2658 = vadd.f32 %v2425, %v2657
        %v2659 = vpop.f32.mrb[0].mxu0
        %v2660 = vpop.f32.mrb[0].mxu0
        %v2661 = vadd.f32 %v2428, %v2660
        %v2662 = vpop.f32.mrb[0].mxu0
        %2663 = vmatprep.mubr.bf16.mxu0 0
        %2664 = vmatmul.mubr.bf16.gmra.mrb[0].mxu0 %v2524
        %v2665 = vpop.f32.mrb[0].mxu0
        %v2666 = vadd.f32 %v2433, %v2665
        %v2667 = vpop.f32.mrb[0].mxu0
        %v2668 = vpop.f32.mrb[0].mxu0
        %v2669 = vadd.f32 %v2436, %v2668
        %v2670 = vpop.f32.mrb[0].mxu0
        %2671 = vmatprep.mubr.bf16.mxu0 0
        %2672 = vmatmul.mubr.bf16.gmra.mrb[0].mxu0 %v2527
        %v2673 = vpop.f32.mrb[0].mxu0
        %v2674 = vadd.f32 %v2441, %v2673
        %v2675 = vpop.f32.mrb[0].mxu0
        %v2676 = vpop.f32.mrb[0].mxu0
        %v2677 = vadd.f32 %v2444, %v2676
        %v2678 = vpop.f32.mrb[0].mxu0
        %2679 = vmatprep.mubr.bf16.mxu0 0
        %2680 = vmatmul.mubr.bf16.gmra.mrb[0].mxu0 %v2530
        %v2681 = vpop.f32.mrb[0].mxu0
        %v2682 = vadd.f32 %v2449, %v2681
        %v2683 = vpop.f32.mrb[0].mxu0
        %v2684 = vpop.f32.mrb[0].mxu0
        %v2685 = vadd.f32 %v2452, %v2684
        %v2686 = vpop.f32.mrb[0].mxu0
        %2687 = vmatprep.mubr.bf16.mxu0 0
        %2688 = vmatmul.mubr.bf16.gmra.mrb[0].mxu0 %v2533
        %v2689 = vpop.f32.mrb[0].mxu0
        %v2690 = vadd.f32 %v2457, %v2689
        %v2691 = vpop.f32.mrb[0].mxu0
        %v2692 = vpop.f32.mrb[0].mxu0
        %v2693 = vadd.f32 %v2460, %v2692
        %v2694 = vpop.f32.mrb[0].mxu0
        %2695 = vdwg.mxu0
        %v2696 = vpack.c.bf16 %v2150, %v2149
        %v2697 = vpack.c.bf16 %v2152, %v2151
        %v2698 = vpack.c.bf16 %v2154, %v2153
        %v2699 = vpack.c.bf16 %v2156, %v2155
        %v2700 = vpack.c.bf16 %v2158, %v2157
        %v2701 = vpack.c.bf16 %v2160, %v2159
        %v2702 = vpack.c.bf16 %v2162, %v2161
        %v2703 = vpack.c.bf16 %v2164, %v2163
        %v2704 = vpack.c.bf16 %v2166, %v2165
        %v2705 = vpack.c.bf16 %v2168, %v2167
        %v2706 = vpack.c.bf16 %v2170, %v2169
        %v2707 = vpack.c.bf16 %v2172, %v2171
        %v2708 = vpack.c.bf16 %v2174, %v2173
        %v2709 = vpack.c.bf16 %v2176, %v2175
        %v2710 = vpack.c.bf16 %v2178, %v2177
        %v2711 = vpack.c.bf16 %v2180, %v2179
        %v2712 = vld [vmem:[%s3 + $0x40] sm:$0xf]
        %v2713 = vld [vmem:[%s3 + $0x44] sm:$0xf]
        %v2714 = vld [vmem:[%s3 + $0x48] sm:$0xf]
        %v2715 = vld [vmem:[%s3 + $0x4c] sm:$0xf]
        %v2716 = vld [vmem:[%s3 + $0x50] sm:$0xf]
        %v2717 = vld [vmem:[%s3 + $0x54] sm:$0xf]
        %v2718 = vld [vmem:[%s3 + $0x58] sm:$0xf]
        %v2719 = vld [vmem:[%s3 + $0x5c] sm:$0xf]
        %v2728 = vunpack.c.l.b16 %v2712
        %v2729 = vunpack.c.l.b16 %v2713
        %v2730 = vunpack.c.l.b16 %v2714
        %v2731 = vunpack.c.l.b16 %v2715
        %v2732 = vunpack.c.l.b16 %v2716
        %v2733 = vunpack.c.l.b16 %v2717
        %v2734 = vunpack.c.l.b16 %v2718
        %v2735 = vunpack.c.l.b16 %v2719
        %v2736 = vpack.c.b16 %v2729, %v2728
        %v2737 = vpack.c.b16 %v2731, %v2730
        %v2738 = vpack.c.b16 %v2733, %v2732
        %v2739 = vpack.c.b16 %v2735, %v2734
        %v2745 = vsel %vm2253, %v2696, 0
        %v2748 = vsel %vm2253, %v2697, 0
        %v2751 = vsel %vm2253, %v2698, 0
        %v2754 = vsel %vm2253, %v2699, 0
        %v2757 = vsel %vm2253, %v2700, 0
        %v2760 = vsel %vm2253, %v2701, 0
        %v2763 = vsel %vm2253, %v2702, 0
        %v2766 = vsel %vm2253, %v2703, 0
        %v2769 = vsel %vm2253, %v2704, 0
        %v2772 = vsel %vm2253, %v2705, 0
        %v2775 = vsel %vm2253, %v2706, 0
        %v2778 = vsel %vm2253, %v2707, 0
        %v2781 = vsel %vm2253, %v2708, 0
        %v2784 = vsel %vm2253, %v2709, 0
        %v2787 = vsel %vm2253, %v2710, 0
        %v2790 = vsel %vm2253, %v2711, 0
        %2792 = vmatprep.subr.bf16.mxu0 0
        %2793 = vmatpush1.bf16.msra.mxu0 %v2736
        %2794 = vmatprep.subr.bf16.mxu0 0
        %2795 = vmatpush1.bf16.msra.mxu0 %v2737
        %2796 = vmatprep.subr.bf16.mxu0 0
        %2797 = vmatpush1.bf16.msra.mxu0 %v2738
        %2798 = vmatprep.subr.bf16.mxu0 0
        %2799 = vmatpush1.bf16.msra.mxu0 %v2739
        %2800 = vmatprep.subr.bf16.mxu0 0
        %2801 = vmatpush1.bf16.msra.mxu0 0
        %2802 = vmatprep.subr.bf16.mxu0 0
        %2803 = vmatpush1.bf16.msra.mxu0 0
        %2804 = vmatprep.subr.bf16.mxu0 0
        %2805 = vmatpush1.bf16.msra.mxu0 0
        %2806 = vmatprep.subr.bf16.mxu0 0
        %2807 = vmatpush1.bf16.msra.mxu0 0
        %2808 = vmatprep.subr.bf16.mxu0 0
        %2809 = vmatpush1.bf16.msra.mxu0 0
        %2810 = vmatprep.subr.bf16.mxu0 0
        %2811 = vmatpush1.bf16.msra.mxu0 0
        %2812 = vmatprep.subr.bf16.mxu0 0
        %2813 = vmatpush1.bf16.msra.mxu0 0
        %2814 = vmatprep.subr.bf16.mxu0 0
        %2815 = vmatpush1.bf16.msra.mxu0 0
        %2816 = vmatprep.subr.bf16.mxu0 0
        %2817 = vmatpush1.bf16.msra.mxu0 0
        %2818 = vmatprep.subr.bf16.mxu0 0
        %2819 = vmatpush1.bf16.msra.mxu0 0
        %2820 = vmatprep.subr.bf16.mxu0 0
        %2821 = vmatpush1.bf16.msra.mxu0 0
        %2822 = vmatprep.subr.bf16.mxu0 0
        %2823 = vmatpush1.bf16.msra.mxu0 0
        %2824 = vmatprep.mubr.bf16.mxu0 0
        %2825 = vmatmul.mubr.bf16.gmra.mrb[0].mxu0 %v2745
        %v2826 = vpop.f32.mrb[0].mxu0
        %v2827 = vadd.f32 0.0, %v2826
        %v2828 = vpop.f32.mrb[0].mxu0
        %v2829 = vpop.f32.mrb[0].mxu0
        %v2830 = vadd.f32 0.0, %v2829
        %v2831 = vpop.f32.mrb[0].mxu0
        %2832 = vmatprep.mubr.bf16.mxu0 0
        %2833 = vmatmul.mubr.bf16.gmra.mrb[0].mxu0 %v2748
        %v2834 = vpop.f32.mrb[0].mxu0
        %v2835 = vadd.f32 0.0, %v2834
        %v2836 = vpop.f32.mrb[0].mxu0
        %v2837 = vpop.f32.mrb[0].mxu0
        %v2838 = vadd.f32 0.0, %v2837
        %v2839 = vpop.f32.mrb[0].mxu0
        %2840 = vmatprep.mubr.bf16.mxu0 0
        %2841 = vmatmul.mubr.bf16.gmra.mrb[0].mxu0 %v2751
        %v2842 = vpop.f32.mrb[0].mxu0
        %v2843 = vadd.f32 0.0, %v2842
        %v2844 = vpop.f32.mrb[0].mxu0
        %v2845 = vpop.f32.mrb[0].mxu0
        %v2846 = vadd.f32 0.0, %v2845
        %v2847 = vpop.f32.mrb[0].mxu0
        %2848 = vmatprep.mubr.bf16.mxu0 0
        %2849 = vmatmul.mubr.bf16.gmra.mrb[0].mxu0 %v2754
        %v2850 = vpop.f32.mrb[0].mxu0
        %v2851 = vadd.f32 0.0, %v2850
        %v2852 = vpop.f32.mrb[0].mxu0
        %v2853 = vpop.f32.mrb[0].mxu0
        %v2854 = vadd.f32 0.0, %v2853
        %v2855 = vpop.f32.mrb[0].mxu0
        %2856 = vmatprep.mubr.bf16.mxu0 0
        %2857 = vmatmul.mubr.bf16.gmra.mrb[0].mxu0 %v2757
        %v2858 = vpop.f32.mrb[0].mxu0
        %v2859 = vadd.f32 0.0, %v2858
        %v2860 = vpop.f32.mrb[0].mxu0
        %v2861 = vpop.f32.mrb[0].mxu0
        %v2862 = vadd.f32 0.0, %v2861
        %v2863 = vpop.f32.mrb[0].mxu0
        %2864 = vmatprep.mubr.bf16.mxu0 0
        %2865 = vmatmul.mubr.bf16.gmra.mrb[0].mxu0 %v2760
        %v2866 = vpop.f32.mrb[0].mxu0
        %v2867 = vadd.f32 0.0, %v2866
        %v2868 = vpop.f32.mrb[0].mxu0
        %v2869 = vpop.f32.mrb[0].mxu0
        %v2870 = vadd.f32 0.0, %v2869
        %v2871 = vpop.f32.mrb[0].mxu0
        %2872 = vmatprep.mubr.bf16.mxu0 0
        %2873 = vmatmul.mubr.bf16.gmra.mrb[0].mxu0 %v2763
        %v2874 = vpop.f32.mrb[0].mxu0
        %v2875 = vadd.f32 0.0, %v2874
        %v2876 = vpop.f32.mrb[0].mxu0
        %v2877 = vpop.f32.mrb[0].mxu0
        %v2878 = vadd.f32 0.0, %v2877
        %v2879 = vpop.f32.mrb[0].mxu0
        %2880 = vmatprep.mubr.bf16.mxu0 0
        %2881 = vmatmul.mubr.bf16.gmra.mrb[0].mxu0 %v2766
        %v2882 = vpop.f32.mrb[0].mxu0
        %v2883 = vadd.f32 0.0, %v2882
        %v2884 = vpop.f32.mrb[0].mxu0
        %v2885 = vpop.f32.mrb[0].mxu0
        %v2886 = vadd.f32 0.0, %v2885
        %v2887 = vpop.f32.mrb[0].mxu0
        %2888 = vmatprep.mubr.bf16.mxu0 0
        %2889 = vmatmul.mubr.bf16.gmra.mrb[0].mxu0 %v2769
        %v2890 = vpop.f32.mrb[0].mxu0
        %v2891 = vadd.f32 0.0, %v2890
        %v2892 = vpop.f32.mrb[0].mxu0
        %v2893 = vpop.f32.mrb[0].mxu0
        %v2894 = vadd.f32 0.0, %v2893
        %v2895 = vpop.f32.mrb[0].mxu0
        %2896 = vmatprep.mubr.bf16.mxu0 0
        %2897 = vmatmul.mubr.bf16.gmra.mrb[0].mxu0 %v2772
        %v2898 = vpop.f32.mrb[0].mxu0
        %v2899 = vadd.f32 0.0, %v2898
        %v2900 = vpop.f32.mrb[0].mxu0
        %v2901 = vpop.f32.mrb[0].mxu0
        %v2902 = vadd.f32 0.0, %v2901
        %v2903 = vpop.f32.mrb[0].mxu0
        %2904 = vmatprep.mubr.bf16.mxu0 0
        %2905 = vmatmul.mubr.bf16.gmra.mrb[0].mxu0 %v2775
        %v2906 = vpop.f32.mrb[0].mxu0
        %v2907 = vadd.f32 0.0, %v2906
        %v2908 = vpop.f32.mrb[0].mxu0
        %v2909 = vpop.f32.mrb[0].mxu0
        %v2910 = vadd.f32 0.0, %v2909
        %v2911 = vpop.f32.mrb[0].mxu0
        %2912 = vmatprep.mubr.bf16.mxu0 0
        %2913 = vmatmul.mubr.bf16.gmra.mrb[0].mxu0 %v2778
        %v2914 = vpop.f32.mrb[0].mxu0
        %v2915 = vadd.f32 0.0, %v2914
        %v2916 = vpop.f32.mrb[0].mxu0
        %v2917 = vpop.f32.mrb[0].mxu0
        %v2918 = vadd.f32 0.0, %v2917
        %v2919 = vpop.f32.mrb[0].mxu0
        %2920 = vmatprep.mubr.bf16.mxu0 0
        %2921 = vmatmul.mubr.bf16.gmra.mrb[0].mxu0 %v2781
        %v2922 = vpop.f32.mrb[0].mxu0
        %v2923 = vadd.f32 0.0, %v2922
        %v2924 = vpop.f32.mrb[0].mxu0
        %v2925 = vpop.f32.mrb[0].mxu0
        %v2926 = vadd.f32 0.0, %v2925
        %v2927 = vpop.f32.mrb[0].mxu0
        %2928 = vmatprep.mubr.bf16.mxu0 0
        %2929 = vmatmul.mubr.bf16.gmra.mrb[0].mxu0 %v2784
        %v2930 = vpop.f32.mrb[0].mxu0
        %v2931 = vadd.f32 0.0, %v2930
        %v2932 = vpop.f32.mrb[0].mxu0
        %v2933 = vpop.f32.mrb[0].mxu0
        %v2934 = vadd.f32 0.0, %v2933
        %v2935 = vpop.f32.mrb[0].mxu0
        %2936 = vmatprep.mubr.bf16.mxu0 0
        %2937 = vmatmul.mubr.bf16.gmra.mrb[0].mxu0 %v2787
        %v2938 = vpop.f32.mrb[0].mxu0
        %v2939 = vadd.f32 0.0, %v2938
        %v2940 = vpop.f32.mrb[0].mxu0
        %v2941 = vpop.f32.mrb[0].mxu0
        %v2942 = vadd.f32 0.0, %v2941
        %v2943 = vpop.f32.mrb[0].mxu0
        %2944 = vmatprep.mubr.bf16.mxu0 0
        %2945 = vmatmul.mubr.bf16.gmra.mrb[0].mxu0 %v2790
        %v2946 = vpop.f32.mrb[0].mxu0
        %v2947 = vadd.f32 0.0, %v2946
        %v2948 = vpop.f32.mrb[0].mxu0
        %v2949 = vpop.f32.mrb[0].mxu0
        %v2950 = vadd.f32 0.0, %v2949
        %v2951 = vpop.f32.mrb[0].mxu0
        %2952 = vdwg.mxu0
        %v2953 = vadd.f32 %v2570, %v2827
        %v2954 = vadd.f32 %v2573, %v2830
        %v2955 = vadd.f32 %v2578, %v2835
        %v2956 = vadd.f32 %v2581, %v2838
        %v2957 = vadd.f32 %v2586, %v2843
        %v2958 = vadd.f32 %v2589, %v2846
        %v2959 = vadd.f32 %v2594, %v2851
        %v2960 = vadd.f32 %v2597, %v2854
        %v2961 = vadd.f32 %v2602, %v2859
        %v2962 = vadd.f32 %v2605, %v2862
        %v2963 = vadd.f32 %v2610, %v2867
        %v2964 = vadd.f32 %v2613, %v2870
        %v2965 = vadd.f32 %v2618, %v2875
        %v2966 = vadd.f32 %v2621, %v2878
        %v2967 = vadd.f32 %v2626, %v2883
        %v2968 = vadd.f32 %v2629, %v2886
        %v2969 = vadd.f32 %v2634, %v2891
        %v2970 = vadd.f32 %v2637, %v2894
        %v2971 = vadd.f32 %v2642, %v2899
        %v2972 = vadd.f32 %v2645, %v2902
        %v2973 = vadd.f32 %v2650, %v2907
        %v2974 = vadd.f32 %v2653, %v2910
        %v2975 = vadd.f32 %v2658, %v2915
        %v2976 = vadd.f32 %v2661, %v2918
        %v2977 = vadd.f32 %v2666, %v2923
        %v2978 = vadd.f32 %v2669, %v2926
        %v2979 = vadd.f32 %v2674, %v2931
        %v2980 = vadd.f32 %v2677, %v2934
        %v2981 = vadd.f32 %v2682, %v2939
        %v2982 = vadd.f32 %v2685, %v2942
        %v2983 = vadd.f32 %v2690, %v2947
        %v2984 = vadd.f32 %v2693, %v2950
        %v2985 = vld [vmem:[%s4] sm:$0x1]
        %v2987 = vlaneseq
        %v2988 = vshrl.u32 %v2987, 7
        %v2989 = vsub.s32 0, %v2988
        %v2990 = vrot.slane %v2985, %v2989
        %v2992 = vadd.f32 %v2953, %v2990
        %v2993 = vadd.f32 %v2954, %v2990
        %v2994 = vadd.f32 %v2955, %v2990
        %v2995 = vadd.f32 %v2956, %v2990
        %v2996 = vadd.f32 %v2957, %v2990
        %v2997 = vadd.f32 %v2958, %v2990
        %v2998 = vadd.f32 %v2959, %v2990
        %v2999 = vadd.f32 %v2960, %v2990
        %v3000 = vadd.f32 %v2961, %v2990
        %v3001 = vadd.f32 %v2962, %v2990
        %v3002 = vadd.f32 %v2963, %v2990
        %v3003 = vadd.f32 %v2964, %v2990
        %v3004 = vadd.f32 %v2965, %v2990
        %v3005 = vadd.f32 %v2966, %v2990
        %v3006 = vadd.f32 %v2967, %v2990
        %v3007 = vadd.f32 %v2968, %v2990
        %v3008 = vadd.f32 %v2969, %v2990
        %v3009 = vadd.f32 %v2970, %v2990
        %v3010 = vadd.f32 %v2971, %v2990
        %v3011 = vadd.f32 %v2972, %v2990
        %v3012 = vadd.f32 %v2973, %v2990
        %v3013 = vadd.f32 %v2974, %v2990
        %v3014 = vadd.f32 %v2975, %v2990
        %v3015 = vadd.f32 %v2976, %v2990
        %v3016 = vadd.f32 %v2977, %v2990
        %v3017 = vadd.f32 %v2978, %v2990
        %v3018 = vadd.f32 %v2979, %v2990
        %v3019 = vadd.f32 %v2980, %v2990
        %v3020 = vadd.f32 %v2981, %v2990
        %v3021 = vadd.f32 %v2982, %v2990
        %v3022 = vadd.f32 %v2983, %v2990
        %v3023 = vadd.f32 %v2984, %v2990
        %v3024 = vmax.f32 %v2992, 0.0
        %v3025 = vmax.f32 %v2993, 0.0
        %v3026 = vmax.f32 %v2994, 0.0
        %v3027 = vmax.f32 %v2995, 0.0
        %v3028 = vmax.f32 %v2996, 0.0
        %v3029 = vmax.f32 %v2997, 0.0
        %v3030 = vmax.f32 %v2998, 0.0
        %v3031 = vmax.f32 %v2999, 0.0
        %v3032 = vmax.f32 %v3000, 0.0
        %v3033 = vmax.f32 %v3001, 0.0
        %v3034 = vmax.f32 %v3002, 0.0
        %v3035 = vmax.f32 %v3003, 0.0
        %v3036 = vmax.f32 %v3004, 0.0
        %v3037 = vmax.f32 %v3005, 0.0
        %v3038 = vmax.f32 %v3006, 0.0
        %v3039 = vmax.f32 %v3007, 0.0
        %v3040 = vmax.f32 %v3008, 0.0
        %v3041 = vmax.f32 %v3009, 0.0
        %v3042 = vmax.f32 %v3010, 0.0
        %v3043 = vmax.f32 %v3011, 0.0
        %v3044 = vmax.f32 %v3012, 0.0
        %v3045 = vmax.f32 %v3013, 0.0
        %v3046 = vmax.f32 %v3014, 0.0
        %v3047 = vmax.f32 %v3015, 0.0
        %v3048 = vmax.f32 %v3016, 0.0
        %v3049 = vmax.f32 %v3017, 0.0
        %v3050 = vmax.f32 %v3018, 0.0
        %v3051 = vmax.f32 %v3019, 0.0
        %v3052 = vmax.f32 %v3020, 0.0
        %v3053 = vmax.f32 %v3021, 0.0
        %v3054 = vmax.f32 %v3022, 0.0
        %v3055 = vmax.f32 %v3023, 0.0
        %v3057 = vrot.slane %v3055, 7
        %v3090 = vrot.slane %v3024, 7
        %v3091 = vrot.slane %v3025, 7
        %v3092 = vsel %vm625, %v3090, %v3091
        %v3093 = vrot.slane %v3026, 7
        %v3094 = vsel %vm625, %v3091, %v3093
        %v3095 = vrot.slane %v3027, 7
        %v3096 = vsel %vm625, %v3093, %v3095
        %v3097 = vrot.slane %v3028, 7
        %v3098 = vsel %vm625, %v3095, %v3097
        %v3099 = vrot.slane %v3029, 7
        %v3100 = vsel %vm625, %v3097, %v3099
        %v3101 = vrot.slane %v3030, 7
        %v3102 = vsel %vm625, %v3099, %v3101
        %v3103 = vrot.slane %v3031, 7
        %v3104 = vsel %vm625, %v3101, %v3103
        %v3105 = vrot.slane %v3032, 7
        %v3106 = vsel %vm625, %v3103, %v3105
        %v3107 = vrot.slane %v3033, 7
        %v3108 = vsel %vm625, %v3105, %v3107
        %v3109 = vrot.slane %v3034, 7
        %v3110 = vsel %vm625, %v3107, %v3109
        %v3111 = vrot.slane %v3035, 7
        %v3112 = vsel %vm625, %v3109, %v3111
        %v3113 = vrot.slane %v3036, 7
        %v3114 = vsel %vm625, %v3111, %v3113
        %v3115 = vrot.slane %v3037, 7
        %v3116 = vsel %vm625, %v3113, %v3115
        %v3117 = vrot.slane %v3038, 7
        %v3118 = vsel %vm625, %v3115, %v3117
        %v3119 = vrot.slane %v3039, 7
        %v3120 = vsel %vm625, %v3117, %v3119
        %v3121 = vrot.slane %v3040, 7
        %v3122 = vsel %vm625, %v3119, %v3121
        %v3123 = vrot.slane %v3041, 7
        %v3124 = vsel %vm625, %v3121, %v3123
        %v3125 = vrot.slane %v3042, 7
        %v3126 = vsel %vm625, %v3123, %v3125
        %v3127 = vrot.slane %v3043, 7
        %v3128 = vsel %vm625, %v3125, %v3127
        %v3129 = vrot.slane %v3044, 7
        %v3130 = vsel %vm625, %v3127, %v3129
        %v3131 = vrot.slane %v3045, 7
        %v3132 = vsel %vm625, %v3129, %v3131
        %v3133 = vrot.slane %v3046, 7
        %v3134 = vsel %vm625, %v3131, %v3133
        %v3135 = vrot.slane %v3047, 7
        %v3136 = vsel %vm625, %v3133, %v3135
        %v3137 = vrot.slane %v3048, 7
        %v3138 = vsel %vm625, %v3135, %v3137
        %v3139 = vrot.slane %v3049, 7
        %v3140 = vsel %vm625, %v3137, %v3139
        %v3141 = vrot.slane %v3050, 7
        %v3142 = vsel %vm625, %v3139, %v3141
        %v3143 = vrot.slane %v3051, 7
        %v3144 = vsel %vm625, %v3141, %v3143
        %v3145 = vrot.slane %v3052, 7
        %v3146 = vsel %vm625, %v3143, %v3145
        %v3147 = vrot.slane %v3053, 7
        %v3148 = vsel %vm625, %v3145, %v3147
        %v3149 = vrot.slane %v3054, 7
        %v3150 = vsel %vm625, %v3147, %v3149
        %v3151 = vsel %vm625, %v3149, %v3057
        %v3184 = vsel %vm625, %v3057, %v3090
        %v3185 = vmul.f32 %v3184, %v1702
        %v3186 = vmul.f32 %v3092, %v1707
        %v3187 = vmul.f32 %v3094, %v1712
        %v3188 = vmul.f32 %v3096, %v1717
        %v3189 = vmul.f32 %v3098, %v1722
        %v3190 = vmul.f32 %v3100, %v1727
        %v3191 = vmul.f32 %v3102, %v1732
        %v3192 = vmul.f32 %v3104, %v1737
        %v3193 = vmul.f32 %v3106, %v1742
        %v3194 = vmul.f32 %v3108, %v1747
        %v3195 = vmul.f32 %v3110, %v1752
        %v3196 = vmul.f32 %v3112, %v1757
        %v3197 = vmul.f32 %v3114, %v1762
        %v3198 = vmul.f32 %v3116, %v1767
        %v3199 = vmul.f32 %v3118, %v1772
        %v3200 = vmul.f32 %v3120, %v1777
        %v3201 = vmul.f32 %v3122, %v1782
        %v3202 = vmul.f32 %v3124, %v1787
        %v3203 = vmul.f32 %v3126, %v1792
        %v3204 = vmul.f32 %v3128, %v1797
        %v3205 = vmul.f32 %v3130, %v1802
        %v3206 = vmul.f32 %v3132, %v1807
        %v3207 = vmul.f32 %v3134, %v1812
        %v3208 = vmul.f32 %v3136, %v1817
        %v3209 = vmul.f32 %v3138, %v1822
        %v3210 = vmul.f32 %v3140, %v1827
        %v3211 = vmul.f32 %v3142, %v1832
        %v3212 = vmul.f32 %v3144, %v1837
        %v3213 = vmul.f32 %v3146, %v1842
        %v3214 = vmul.f32 %v3148, %v1847
        %v3215 = vmul.f32 %v3150, %v1852
        %v3216 = vmul.f32 %v3151, %v1857
        %v3217 = vrot.slane %v3024, 1
        %v3218 = vrot.slane %v3025, 1
        %v3219 = vsel %vm1891, %v3217, %v3218
        %v3220 = vrot.slane %v3026, 1
        %v3221 = vsel %vm1891, %v3218, %v3220
        %v3222 = vrot.slane %v3027, 1
        %v3223 = vsel %vm1891, %v3220, %v3222
        %v3224 = vrot.slane %v3028, 1
        %v3225 = vsel %vm1891, %v3222, %v3224
        %v3226 = vrot.slane %v3029, 1
        %v3227 = vsel %vm1891, %v3224, %v3226
        %v3228 = vrot.slane %v3030, 1
        %v3229 = vsel %vm1891, %v3226, %v3228
        %v3230 = vrot.slane %v3031, 1
        %v3231 = vsel %vm1891, %v3228, %v3230
        %v3232 = vrot.slane %v3032, 1
        %v3233 = vsel %vm1891, %v3230, %v3232
        %v3234 = vrot.slane %v3033, 1
        %v3235 = vsel %vm1891, %v3232, %v3234
        %v3236 = vrot.slane %v3034, 1
        %v3237 = vsel %vm1891, %v3234, %v3236
        %v3238 = vrot.slane %v3035, 1
        %v3239 = vsel %vm1891, %v3236, %v3238
        %v3240 = vrot.slane %v3036, 1
        %v3241 = vsel %vm1891, %v3238, %v3240
        %v3242 = vrot.slane %v3037, 1
        %v3243 = vsel %vm1891, %v3240, %v3242
        %v3244 = vrot.slane %v3038, 1
        %v3245 = vsel %vm1891, %v3242, %v3244
        %v3246 = vrot.slane %v3039, 1
        %v3247 = vsel %vm1891, %v3244, %v3246
        %v3248 = vrot.slane %v3040, 1
        %v3249 = vsel %vm1891, %v3246, %v3248
        %v3250 = vrot.slane %v3041, 1
        %v3251 = vsel %vm1891, %v3248, %v3250
        %v3252 = vrot.slane %v3042, 1
        %v3253 = vsel %vm1891, %v3250, %v3252
        %v3254 = vrot.slane %v3043, 1
        %v3255 = vsel %vm1891, %v3252, %v3254
        %v3256 = vrot.slane %v3044, 1
        %v3257 = vsel %vm1891, %v3254, %v3256
        %v3258 = vrot.slane %v3045, 1
        %v3259 = vsel %vm1891, %v3256, %v3258
        %v3260 = vrot.slane %v3046, 1
        %v3261 = vsel %vm1891, %v3258, %v3260
        %v3262 = vrot.slane %v3047, 1
        %v3263 = vsel %vm1891, %v3260, %v3262
        %v3264 = vrot.slane %v3048, 1
        %v3265 = vsel %vm1891, %v3262, %v3264
        %v3266 = vrot.slane %v3049, 1
        %v3267 = vsel %vm1891, %v3264, %v3266
        %v3268 = vrot.slane %v3050, 1
        %v3269 = vsel %vm1891, %v3266, %v3268
        %v3270 = vrot.slane %v3051, 1
        %v3271 = vsel %vm1891, %v3268, %v3270
        %v3272 = vrot.slane %v3052, 1
        %v3273 = vsel %vm1891, %v3270, %v3272
        %v3274 = vrot.slane %v3053, 1
        %v3275 = vsel %vm1891, %v3272, %v3274
        %v3276 = vrot.slane %v3054, 1
        %v3277 = vsel %vm1891, %v3274, %v3276
        %v3278 = vrot.slane %v3055, 1
        %v3279 = vsel %vm1891, %v3276, %v3278
        %v3313 = vsel %vm1891, %v3278, %v3217
        %v3314 = vmul.f32 %v3219, %v1992
        %v3315 = vmul.f32 %v3221, %v1997
        %v3316 = vmul.f32 %v3223, %v2002
        %v3317 = vmul.f32 %v3225, %v2007
        %v3318 = vmul.f32 %v3227, %v2012
        %v3319 = vmul.f32 %v3229, %v2017
        %v3320 = vmul.f32 %v3231, %v2022
        %v3321 = vmul.f32 %v3233, %v2027
        %v3322 = vmul.f32 %v3235, %v2032
        %v3323 = vmul.f32 %v3237, %v2037
        %v3324 = vmul.f32 %v3239, %v2042
        %v3325 = vmul.f32 %v3241, %v2047
        %v3326 = vmul.f32 %v3243, %v2052
        %v3327 = vmul.f32 %v3245, %v2057
        %v3328 = vmul.f32 %v3247, %v2062
        %v3329 = vmul.f32 %v3249, %v2067
        %v3330 = vmul.f32 %v3251, %v2072
        %v3331 = vmul.f32 %v3253, %v2077
        %v3332 = vmul.f32 %v3255, %v2082
        %v3333 = vmul.f32 %v3257, %v2087
        %v3334 = vmul.f32 %v3259, %v2092
        %v3335 = vmul.f32 %v3261, %v2097
        %v3336 = vmul.f32 %v3263, %v2102
        %v3337 = vmul.f32 %v3265, %v2107
        %v3338 = vmul.f32 %v3267, %v2112
        %v3339 = vmul.f32 %v3269, %v2117
        %v3340 = vmul.f32 %v3271, %v2122
        %v3341 = vmul.f32 %v3273, %v2127
        %v3342 = vmul.f32 %v3275, %v2132
        %v3343 = vmul.f32 %v3277, %v2137
        %v3344 = vmul.f32 %v3279, %v2142
        %v3345 = vmul.f32 %v3313, %v2147
        %v3346 = vpack.c.bf16 %v3186, %v3185
        %v3347 = vpack.c.bf16 %v3188, %v3187
        %v3348 = vpack.c.bf16 %v3190, %v3189
        %v3349 = vpack.c.bf16 %v3192, %v3191
        %v3350 = vpack.c.bf16 %v3194, %v3193
        %v3351 = vpack.c.bf16 %v3196, %v3195
        %v3352 = vpack.c.bf16 %v3198, %v3197
        %v3353 = vpack.c.bf16 %v3200, %v3199
        %v3354 = vpack.c.bf16 %v3202, %v3201
        %v3355 = vpack.c.bf16 %v3204, %v3203
        %v3356 = vpack.c.bf16 %v3206, %v3205
        %v3357 = vpack.c.bf16 %v3208, %v3207
        %v3358 = vpack.c.bf16 %v3210, %v3209
        %v3359 = vpack.c.bf16 %v3212, %v3211
        %v3360 = vpack.c.bf16 %v3214, %v3213
        %v3361 = vpack.c.bf16 %v3216, %v3215
        %v3362 = vld [vmem:[%s5] sm:$0xff]
        %v3363 = vld [vmem:[%s5 + $0x8] sm:$0xff]
        %v3364 = vld [vmem:[%s5 + $0x10] sm:$0xff]
        %v3365 = vld [vmem:[%s5 + $0x18] sm:$0xff]
        %v3366 = vld [vmem:[%s5 + $0x20] sm:$0xff]
        %v3367 = vld [vmem:[%s5 + $0x28] sm:$0xff]
        %v3368 = vld [vmem:[%s5 + $0x30] sm:$0xff]
        %v3369 = vld [vmem:[%s5 + $0x38] sm:$0xff]
        %v3370 = vld [vmem:[%s5 + $0x40] sm:$0xff]
        %v3371 = vld [vmem:[%s5 + $0x48] sm:$0xff]
        %v3372 = vld [vmem:[%s5 + $0x50] sm:$0xff]
        %v3373 = vld [vmem:[%s5 + $0x58] sm:$0xff]
        %v3374 = vld [vmem:[%s5 + $0x60] sm:$0xff]
        %v3375 = vld [vmem:[%s5 + $0x68] sm:$0xff]
        %v3376 = vld [vmem:[%s5 + $0x70] sm:$0xff]
        %v3377 = vld [vmem:[%s5 + $0x78] sm:$0xff]
        %v3378 = vpack.c.bf16 %v3025, %v3024
        %v3379 = vpack.c.bf16 %v3027, %v3026
        %v3380 = vpack.c.bf16 %v3029, %v3028
        %v3381 = vpack.c.bf16 %v3031, %v3030
        %v3382 = vpack.c.bf16 %v3033, %v3032
        %v3383 = vpack.c.bf16 %v3035, %v3034
        %v3384 = vpack.c.bf16 %v3037, %v3036
        %v3385 = vpack.c.bf16 %v3039, %v3038
        %v3386 = vpack.c.bf16 %v3041, %v3040
        %v3387 = vpack.c.bf16 %v3043, %v3042
        %v3388 = vpack.c.bf16 %v3045, %v3044
        %v3389 = vpack.c.bf16 %v3047, %v3046
        %v3390 = vpack.c.bf16 %v3049, %v3048
        %v3391 = vpack.c.bf16 %v3051, %v3050
        %v3392 = vpack.c.bf16 %v3053, %v3052
        %v3393 = vpack.c.bf16 %v3055, %v3054
        %v3394 = vld [vmem:[%s5 + $0x80] sm:$0xff]
        %v3395 = vld [vmem:[%s5 + $0x88] sm:$0xff]
        %v3396 = vld [vmem:[%s5 + $0x90] sm:$0xff]
        %v3397 = vld [vmem:[%s5 + $0x98] sm:$0xff]
        %v3398 = vld [vmem:[%s5 + $0xa0] sm:$0xff]
        %v3399 = vld [vmem:[%s5 + $0xa8] sm:$0xff]
        %v3400 = vld [vmem:[%s5 + $0xb0] sm:$0xff]
        %v3401 = vld [vmem:[%s5 + $0xb8] sm:$0xff]
        %v3402 = vld [vmem:[%s5 + $0xc0] sm:$0xff]
        %v3403 = vld [vmem:[%s5 + $0xc8] sm:$0xff]
        %v3404 = vld [vmem:[%s5 + $0xd0] sm:$0xff]
        %v3405 = vld [vmem:[%s5 + $0xd8] sm:$0xff]
        %v3406 = vld [vmem:[%s5 + $0xe0] sm:$0xff]
        %v3407 = vld [vmem:[%s5 + $0xe8] sm:$0xff]
        %v3408 = vld [vmem:[%s5 + $0xf0] sm:$0xff]
        %v3409 = vld [vmem:[%s5 + $0xf8] sm:$0xff]
        %v3426 = vunpack.c.l.b16 %v3394
        %v3427 = vunpack.c.h.b16 %v3394
        %v3428 = vunpack.c.l.b16 %v3395
        %v3429 = vunpack.c.h.b16 %v3395
        %v3430 = vunpack.c.l.b16 %v3396
        %v3431 = vunpack.c.h.b16 %v3396
        %v3432 = vunpack.c.l.b16 %v3397
        %v3433 = vunpack.c.h.b16 %v3397
        %v3434 = vunpack.c.l.b16 %v3398
        %v3435 = vunpack.c.h.b16 %v3398
        %v3436 = vunpack.c.l.b16 %v3399
        %v3437 = vunpack.c.h.b16 %v3399
        %v3438 = vunpack.c.l.b16 %v3400
        %v3439 = vunpack.c.h.b16 %v3400
        %v3440 = vunpack.c.l.b16 %v3401
        %v3441 = vunpack.c.h.b16 %v3401
        %v3442 = vunpack.c.l.b16 %v3402
        %v3443 = vunpack.c.h.b16 %v3402
        %v3444 = vunpack.c.l.b16 %v3403
        %v3445 = vunpack.c.h.b16 %v3403
        %v3446 = vunpack.c.l.b16 %v3404
        %v3447 = vunpack.c.h.b16 %v3404
        %v3448 = vunpack.c.l.b16 %v3405
        %v3449 = vunpack.c.h.b16 %v3405
        %v3450 = vunpack.c.l.b16 %v3406
        %v3451 = vunpack.c.h.b16 %v3406
        %v3452 = vunpack.c.l.b16 %v3407
        %v3453 = vunpack.c.h.b16 %v3407
        %v3454 = vunpack.c.l.b16 %v3408
        %v3455 = vunpack.c.h.b16 %v3408
        %v3456 = vunpack.c.l.b16 %v3409
        %v3457 = vunpack.c.h.b16 %v3409
        %v3458 = vpack.c.b16 %v3428, %v3426
        %v3459 = vpack.c.b16 %v3429, %v3427
        %v3460 = vpack.c.b16 %v3432, %v3430
        %v3461 = vpack.c.b16 %v3433, %v3431
        %v3462 = vpack.c.b16 %v3436, %v3434
        %v3463 = vpack.c.b16 %v3437, %v3435
        %v3464 = vpack.c.b16 %v3440, %v3438
        %v3465 = vpack.c.b16 %v3441, %v3439
        %v3466 = vpack.c.b16 %v3444, %v3442
        %v3467 = vpack.c.b16 %v3445, %v3443
        %v3468 = vpack.c.b16 %v3448, %v3446
        %v3469 = vpack.c.b16 %v3449, %v3447
        %v3470 = vpack.c.b16 %v3452, %v3450
        %v3471 = vpack.c.b16 %v3453, %v3451
        %v3472 = vpack.c.b16 %v3456, %v3454
        %v3473 = vpack.c.b16 %v3457, %v3455
        %3490 = vmatprep.subr.bf16.mxu0 %v3459
        %3491 = vmatpush1.bf16.msra.mxu0 %v3458
        %3492 = vmatprep.subr.bf16.mxu0 %v3461
        %3493 = vmatpush1.bf16.msra.mxu0 %v3460
        %3494 = vmatprep.subr.bf16.mxu0 %v3463
        %3495 = vmatpush1.bf16.msra.mxu0 %v3462
        %3496 = vmatprep.subr.bf16.mxu0 %v3465
        %3497 = vmatpush1.bf16.msra.mxu0 %v3464
        %3498 = vmatprep.subr.bf16.mxu0 %v3467
        %3499 = vmatpush1.bf16.msra.mxu0 %v3466
        %3500 = vmatprep.subr.bf16.mxu0 %v3469
        %3501 = vmatpush1.bf16.msra.mxu0 %v3468
        %3502 = vmatprep.subr.bf16.mxu0 %v3471
        %3503 = vmatpush1.bf16.msra.mxu0 %v3470
        %3504 = vmatprep.subr.bf16.mxu0 %v3473
        %3505 = vmatpush1.bf16.msra.mxu0 %v3472
        %3506 = vmatprep.subr.bf16.mxu0 0
        %3507 = vmatpush1.bf16.msra.mxu0 0
        %3508 = vmatprep.subr.bf16.mxu0 0
        %3509 = vmatpush1.bf16.msra.mxu0 0
        %3510 = vmatprep.subr.bf16.mxu0 0
        %3511 = vmatpush1.bf16.msra.mxu0 0
        %3512 = vmatprep.subr.bf16.mxu0 0
        %3513 = vmatpush1.bf16.msra.mxu0 0
        %3514 = vmatprep.subr.bf16.mxu0 0
        %3515 = vmatpush1.bf16.msra.mxu0 0
        %3516 = vmatprep.subr.bf16.mxu0 0
        %3517 = vmatpush1.bf16.msra.mxu0 0
        %3518 = vmatprep.subr.bf16.mxu0 0
        %3519 = vmatpush1.bf16.msra.mxu0 0
        %3520 = vmatprep.subr.bf16.mxu0 0
        %3521 = vmatpush1.bf16.msra.mxu0 0
        %3522 = vmatprep.mubr.bf16.mxu0 0
        %3523 = vmatmul.mubr.bf16.gmra.mrb[0].mxu0 %v3378
        %v3524 = vpop.f32.mrb[0].mxu0
        %v3525 = vadd.f32 0.0, %v3524
        %v3526 = vpop.f32.mrb[0].mxu0
        %v3527 = vadd.f32 0.0, %v3526
        %v3528 = vpop.f32.mrb[0].mxu0
        %v3529 = vadd.f32 0.0, %v3528
        %v3530 = vpop.f32.mrb[0].mxu0
        %v3531 = vadd.f32 0.0, %v3530
        %3532 = vmatprep.mubr.bf16.mxu0 0
        %3533 = vmatmul.mubr.bf16.gmra.mrb[0].mxu0 %v3379
        %v3534 = vpop.f32.mrb[0].mxu0
        %v3535 = vadd.f32 0.0, %v3534
        %v3536 = vpop.f32.mrb[0].mxu0
        %v3537 = vadd.f32 0.0, %v3536
        %v3538 = vpop.f32.mrb[0].mxu0
        %v3539 = vadd.f32 0.0, %v3538
        %v3540 = vpop.f32.mrb[0].mxu0
        %v3541 = vadd.f32 0.0, %v3540
        %3542 = vmatprep.mubr.bf16.mxu0 0
        %3543 = vmatmul.mubr.bf16.gmra.mrb[0].mxu0 %v3380
        %v3544 = vpop.f32.mrb[0].mxu0
        %v3545 = vadd.f32 0.0, %v3544
        %v3546 = vpop.f32.mrb[0].mxu0
        %v3547 = vadd.f32 0.0, %v3546
        %v3548 = vpop.f32.mrb[0].mxu0
        %v3549 = vadd.f32 0.0, %v3548
        %v3550 = vpop.f32.mrb[0].mxu0
        %v3551 = vadd.f32 0.0, %v3550
        %3552 = vmatprep.mubr.bf16.mxu0 0
        %3553 = vmatmul.mubr.bf16.gmra.mrb[0].mxu0 %v3381
        %v3554 = vpop.f32.mrb[0].mxu0
        %v3555 = vadd.f32 0.0, %v3554
        %v3556 = vpop.f32.mrb[0].mxu0
        %v3557 = vadd.f32 0.0, %v3556
        %v3558 = vpop.f32.mrb[0].mxu0
        %v3559 = vadd.f32 0.0, %v3558
        %v3560 = vpop.f32.mrb[0].mxu0
        %v3561 = vadd.f32 0.0, %v3560
        %3562 = vmatprep.mubr.bf16.mxu0 0
        %3563 = vmatmul.mubr.bf16.gmra.mrb[0].mxu0 %v3382
        %v3564 = vpop.f32.mrb[0].mxu0
        %v3565 = vadd.f32 0.0, %v3564
        %v3566 = vpop.f32.mrb[0].mxu0
        %v3567 = vadd.f32 0.0, %v3566
        %v3568 = vpop.f32.mrb[0].mxu0
        %v3569 = vadd.f32 0.0, %v3568
        %v3570 = vpop.f32.mrb[0].mxu0
        %v3571 = vadd.f32 0.0, %v3570
        %3572 = vmatprep.mubr.bf16.mxu0 0
        %3573 = vmatmul.mubr.bf16.gmra.mrb[0].mxu0 %v3383
        %v3574 = vpop.f32.mrb[0].mxu0
        %v3575 = vadd.f32 0.0, %v3574
        %v3576 = vpop.f32.mrb[0].mxu0
        %v3577 = vadd.f32 0.0, %v3576
        %v3578 = vpop.f32.mrb[0].mxu0
        %v3579 = vadd.f32 0.0, %v3578
        %v3580 = vpop.f32.mrb[0].mxu0
        %v3581 = vadd.f32 0.0, %v3580
        %3582 = vmatprep.mubr.bf16.mxu0 0
        %3583 = vmatmul.mubr.bf16.gmra.mrb[0].mxu0 %v3384
        %v3584 = vpop.f32.mrb[0].mxu0
        %v3585 = vadd.f32 0.0, %v3584
        %v3586 = vpop.f32.mrb[0].mxu0
        %v3587 = vadd.f32 0.0, %v3586
        %v3588 = vpop.f32.mrb[0].mxu0
        %v3589 = vadd.f32 0.0, %v3588
        %v3590 = vpop.f32.mrb[0].mxu0
        %v3591 = vadd.f32 0.0, %v3590
        %3592 = vmatprep.mubr.bf16.mxu0 0
        %3593 = vmatmul.mubr.bf16.gmra.mrb[0].mxu0 %v3385
        %v3594 = vpop.f32.mrb[0].mxu0
        %v3595 = vadd.f32 0.0, %v3594
        %v3596 = vpop.f32.mrb[0].mxu0
        %v3597 = vadd.f32 0.0, %v3596
        %v3598 = vpop.f32.mrb[0].mxu0
        %v3599 = vadd.f32 0.0, %v3598
        %v3600 = vpop.f32.mrb[0].mxu0
        %v3601 = vadd.f32 0.0, %v3600
        %3602 = vmatprep.mubr.bf16.mxu0 0
        %3603 = vmatmul.mubr.bf16.gmra.mrb[0].mxu0 %v3386
        %v3604 = vpop.f32.mrb[0].mxu0
        %v3605 = vadd.f32 0.0, %v3604
        %v3606 = vpop.f32.mrb[0].mxu0
        %v3607 = vadd.f32 0.0, %v3606
        %v3608 = vpop.f32.mrb[0].mxu0
        %v3609 = vadd.f32 0.0, %v3608
        %v3610 = vpop.f32.mrb[0].mxu0
        %v3611 = vadd.f32 0.0, %v3610
        %3612 = vmatprep.mubr.bf16.mxu0 0
        %3613 = vmatmul.mubr.bf16.gmra.mrb[0].mxu0 %v3387
        %v3614 = vpop.f32.mrb[0].mxu0
        %v3615 = vadd.f32 0.0, %v3614
        %v3616 = vpop.f32.mrb[0].mxu0
        %v3617 = vadd.f32 0.0, %v3616
        %v3618 = vpop.f32.mrb[0].mxu0
        %v3619 = vadd.f32 0.0, %v3618
        %v3620 = vpop.f32.mrb[0].mxu0
        %v3621 = vadd.f32 0.0, %v3620
        %3622 = vmatprep.mubr.bf16.mxu0 0
        %3623 = vmatmul.mubr.bf16.gmra.mrb[0].mxu0 %v3388
        %v3624 = vpop.f32.mrb[0].mxu0
        %v3625 = vadd.f32 0.0, %v3624
        %v3626 = vpop.f32.mrb[0].mxu0
        %v3627 = vadd.f32 0.0, %v3626
        %v3628 = vpop.f32.mrb[0].mxu0
        %v3629 = vadd.f32 0.0, %v3628
        %v3630 = vpop.f32.mrb[0].mxu0
        %v3631 = vadd.f32 0.0, %v3630
        %3632 = vmatprep.mubr.bf16.mxu0 0
        %3633 = vmatmul.mubr.bf16.gmra.mrb[0].mxu0 %v3389
        %v3634 = vpop.f32.mrb[0].mxu0
        %v3635 = vadd.f32 0.0, %v3634
        %v3636 = vpop.f32.mrb[0].mxu0
        %v3637 = vadd.f32 0.0, %v3636
        %v3638 = vpop.f32.mrb[0].mxu0
        %v3639 = vadd.f32 0.0, %v3638
        %v3640 = vpop.f32.mrb[0].mxu0
        %v3641 = vadd.f32 0.0, %v3640
        %3642 = vmatprep.mubr.bf16.mxu0 0
        %3643 = vmatmul.mubr.bf16.gmra.mrb[0].mxu0 %v3390
        %v3644 = vpop.f32.mrb[0].mxu0
        %v3645 = vadd.f32 0.0, %v3644
        %v3646 = vpop.f32.mrb[0].mxu0
        %v3647 = vadd.f32 0.0, %v3646
        %v3648 = vpop.f32.mrb[0].mxu0
        %v3649 = vadd.f32 0.0, %v3648
        %v3650 = vpop.f32.mrb[0].mxu0
        %v3651 = vadd.f32 0.0, %v3650
        %3652 = vmatprep.mubr.bf16.mxu0 0
        %3653 = vmatmul.mubr.bf16.gmra.mrb[0].mxu0 %v3391
        %v3654 = vpop.f32.mrb[0].mxu0
        %v3655 = vadd.f32 0.0, %v3654
        %v3656 = vpop.f32.mrb[0].mxu0
        %v3657 = vadd.f32 0.0, %v3656
        %v3658 = vpop.f32.mrb[0].mxu0
        %v3659 = vadd.f32 0.0, %v3658
        %v3660 = vpop.f32.mrb[0].mxu0
        %v3661 = vadd.f32 0.0, %v3660
        %3662 = vmatprep.mubr.bf16.mxu0 0
        %3663 = vmatmul.mubr.bf16.gmra.mrb[0].mxu0 %v3392
        %v3664 = vpop.f32.mrb[0].mxu0
        %v3665 = vadd.f32 0.0, %v3664
        %v3666 = vpop.f32.mrb[0].mxu0
        %v3667 = vadd.f32 0.0, %v3666
        %v3668 = vpop.f32.mrb[0].mxu0
        %v3669 = vadd.f32 0.0, %v3668
        %v3670 = vpop.f32.mrb[0].mxu0
        %v3671 = vadd.f32 0.0, %v3670
        %3672 = vmatprep.mubr.bf16.mxu0 0
        %3673 = vmatmul.mubr.bf16.gmra.mrb[0].mxu0 %v3393
        %v3674 = vpop.f32.mrb[0].mxu0
        %v3675 = vadd.f32 0.0, %v3674
        %v3676 = vpop.f32.mrb[0].mxu0
        %v3677 = vadd.f32 0.0, %v3676
        %v3678 = vpop.f32.mrb[0].mxu0
        %v3679 = vadd.f32 0.0, %v3678
        %v3680 = vpop.f32.mrb[0].mxu0
        %v3681 = vadd.f32 0.0, %v3680
        %3682 = vdwg.mxu0
        %v3699 = vunpack.c.l.b16 %v3362
        %v3700 = vunpack.c.h.b16 %v3362
        %v3701 = vunpack.c.l.b16 %v3363
        %v3702 = vunpack.c.h.b16 %v3363
        %v3703 = vunpack.c.l.b16 %v3364
        %v3704 = vunpack.c.h.b16 %v3364
        %v3705 = vunpack.c.l.b16 %v3365
        %v3706 = vunpack.c.h.b16 %v3365
        %v3707 = vunpack.c.l.b16 %v3366
        %v3708 = vunpack.c.h.b16 %v3366
        %v3709 = vunpack.c.l.b16 %v3367
        %v3710 = vunpack.c.h.b16 %v3367
        %v3711 = vunpack.c.l.b16 %v3368
        %v3712 = vunpack.c.h.b16 %v3368
        %v3713 = vunpack.c.l.b16 %v3369
        %v3714 = vunpack.c.h.b16 %v3369
        %v3715 = vunpack.c.l.b16 %v3370
        %v3716 = vunpack.c.h.b16 %v3370
        %v3717 = vunpack.c.l.b16 %v3371
        %v3718 = vunpack.c.h.b16 %v3371
        %v3719 = vunpack.c.l.b16 %v3372
        %v3720 = vunpack.c.h.b16 %v3372
        %v3721 = vunpack.c.l.b16 %v3373
        %v3722 = vunpack.c.h.b16 %v3373
        %v3723 = vunpack.c.l.b16 %v3374
        %v3724 = vunpack.c.h.b16 %v3374
        %v3725 = vunpack.c.l.b16 %v3375
        %v3726 = vunpack.c.h.b16 %v3375
        %v3727 = vunpack.c.l.b16 %v3376
        %v3728 = vunpack.c.h.b16 %v3376
        %v3729 = vunpack.c.l.b16 %v3377
        %v3730 = vunpack.c.h.b16 %v3377
        %v3731 = vpack.c.b16 %v3701, %v3699
        %v3732 = vpack.c.b16 %v3702, %v3700
        %v3733 = vpack.c.b16 %v3705, %v3703
        %v3734 = vpack.c.b16 %v3706, %v3704
        %v3735 = vpack.c.b16 %v3709, %v3707
        %v3736 = vpack.c.b16 %v3710, %v3708
        %v3737 = vpack.c.b16 %v3713, %v3711
        %v3738 = vpack.c.b16 %v3714, %v3712
        %v3739 = vpack.c.b16 %v3717, %v3715
        %v3740 = vpack.c.b16 %v3718, %v3716
        %v3741 = vpack.c.b16 %v3721, %v3719
        %v3742 = vpack.c.b16 %v3722, %v3720
        %v3743 = vpack.c.b16 %v3725, %v3723
        %v3744 = vpack.c.b16 %v3726, %v3724
        %v3745 = vpack.c.b16 %v3729, %v3727
        %v3746 = vpack.c.b16 %v3730, %v3728
        %3763 = vmatprep.subr.bf16.mxu0 %v3732
        %3764 = vmatpush1.bf16.msra.mxu0 %v3731
        %3765 = vmatprep.subr.bf16.mxu0 %v3734
        %3766 = vmatpush1.bf16.msra.mxu0 %v3733
        %3767 = vmatprep.subr.bf16.mxu0 %v3736
        %3768 = vmatpush1.bf16.msra.mxu0 %v3735
        %3769 = vmatprep.subr.bf16.mxu0 %v3738
        %3770 = vmatpush1.bf16.msra.mxu0 %v3737
        %3771 = vmatprep.subr.bf16.mxu0 %v3740
        %3772 = vmatpush1.bf16.msra.mxu0 %v3739
        %3773 = vmatprep.subr.bf16.mxu0 %v3742
        %3774 = vmatpush1.bf16.msra.mxu0 %v3741
        %3775 = vmatprep.subr.bf16.mxu0 %v3744
        %3776 = vmatpush1.bf16.msra.mxu0 %v3743
        %3777 = vmatprep.subr.bf16.mxu0 %v3746
        %3778 = vmatpush1.bf16.msra.mxu0 %v3745
        %3779 = vmatprep.subr.bf16.mxu0 0
        %3780 = vmatpush1.bf16.msra.mxu0 0
        %3781 = vmatprep.subr.bf16.mxu0 0
        %3782 = vmatpush1.bf16.msra.mxu0 0
        %3783 = vmatprep.subr.bf16.mxu0 0
        %3784 = vmatpush1.bf16.msra.mxu0 0
        %3785 = vmatprep.subr.bf16.mxu0 0
        %3786 = vmatpush1.bf16.msra.mxu0 0
        %3787 = vmatprep.subr.bf16.mxu0 0
        %3788 = vmatpush1.bf16.msra.mxu0 0
        %3789 = vmatprep.subr.bf16.mxu0 0
        %3790 = vmatpush1.bf16.msra.mxu0 0
        %3791 = vmatprep.subr.bf16.mxu0 0
        %3792 = vmatpush1.bf16.msra.mxu0 0
        %3793 = vmatprep.subr.bf16.mxu0 0
        %3794 = vmatpush1.bf16.msra.mxu0 0
        %3795 = vmatprep.mubr.bf16.mxu0 0
        %3796 = vmatmul.mubr.bf16.gmra.mrb[0].mxu0 %v3346
        %v3797 = vpop.f32.mrb[0].mxu0
        %v3798 = vadd.f32 %v3525, %v3797
        %v3799 = vpop.f32.mrb[0].mxu0
        %v3800 = vadd.f32 %v3527, %v3799
        %v3801 = vpop.f32.mrb[0].mxu0
        %v3802 = vadd.f32 %v3529, %v3801
        %v3803 = vpop.f32.mrb[0].mxu0
        %v3804 = vadd.f32 %v3531, %v3803
        %3805 = vmatprep.mubr.bf16.mxu0 0
        %3806 = vmatmul.mubr.bf16.gmra.mrb[0].mxu0 %v3347
        %v3807 = vpop.f32.mrb[0].mxu0
        %v3808 = vadd.f32 %v3535, %v3807
        %v3809 = vpop.f32.mrb[0].mxu0
        %v3810 = vadd.f32 %v3537, %v3809
        %v3811 = vpop.f32.mrb[0].mxu0
        %v3812 = vadd.f32 %v3539, %v3811
        %v3813 = vpop.f32.mrb[0].mxu0
        %v3814 = vadd.f32 %v3541, %v3813
        %3815 = vmatprep.mubr.bf16.mxu0 0
        %3816 = vmatmul.mubr.bf16.gmra.mrb[0].mxu0 %v3348
        %v3817 = vpop.f32.mrb[0].mxu0
        %v3818 = vadd.f32 %v3545, %v3817
        %v3819 = vpop.f32.mrb[0].mxu0
        %v3820 = vadd.f32 %v3547, %v3819
        %v3821 = vpop.f32.mrb[0].mxu0
        %v3822 = vadd.f32 %v3549, %v3821
        %v3823 = vpop.f32.mrb[0].mxu0
        %v3824 = vadd.f32 %v3551, %v3823
        %3825 = vmatprep.mubr.bf16.mxu0 0
        %3826 = vmatmul.mubr.bf16.gmra.mrb[0].mxu0 %v3349
        %v3827 = vpop.f32.mrb[0].mxu0
        %v3828 = vadd.f32 %v3555, %v3827
        %v3829 = vpop.f32.mrb[0].mxu0
        %v3830 = vadd.f32 %v3557, %v3829
        %v3831 = vpop.f32.mrb[0].mxu0
        %v3832 = vadd.f32 %v3559, %v3831
        %v3833 = vpop.f32.mrb[0].mxu0
        %v3834 = vadd.f32 %v3561, %v3833
        %3835 = vmatprep.mubr.bf16.mxu0 0
        %3836 = vmatmul.mubr.bf16.gmra.mrb[0].mxu0 %v3350
        %v3837 = vpop.f32.mrb[0].mxu0
        %v3838 = vadd.f32 %v3565, %v3837
        %v3839 = vpop.f32.mrb[0].mxu0
        %v3840 = vadd.f32 %v3567, %v3839
        %v3841 = vpop.f32.mrb[0].mxu0
        %v3842 = vadd.f32 %v3569, %v3841
        %v3843 = vpop.f32.mrb[0].mxu0
        %v3844 = vadd.f32 %v3571, %v3843
        %3845 = vmatprep.mubr.bf16.mxu0 0
        %3846 = vmatmul.mubr.bf16.gmra.mrb[0].mxu0 %v3351
        %v3847 = vpop.f32.mrb[0].mxu0
        %v3848 = vadd.f32 %v3575, %v3847
        %v3849 = vpop.f32.mrb[0].mxu0
        %v3850 = vadd.f32 %v3577, %v3849
        %v3851 = vpop.f32.mrb[0].mxu0
        %v3852 = vadd.f32 %v3579, %v3851
        %v3853 = vpop.f32.mrb[0].mxu0
        %v3854 = vadd.f32 %v3581, %v3853
        %3855 = vmatprep.mubr.bf16.mxu0 0
        %3856 = vmatmul.mubr.bf16.gmra.mrb[0].mxu0 %v3352
        %v3857 = vpop.f32.mrb[0].mxu0
        %v3858 = vadd.f32 %v3585, %v3857
        %v3859 = vpop.f32.mrb[0].mxu0
        %v3860 = vadd.f32 %v3587, %v3859
        %v3861 = vpop.f32.mrb[0].mxu0
        %v3862 = vadd.f32 %v3589, %v3861
        %v3863 = vpop.f32.mrb[0].mxu0
        %v3864 = vadd.f32 %v3591, %v3863
        %3865 = vmatprep.mubr.bf16.mxu0 0
        %3866 = vmatmul.mubr.bf16.gmra.mrb[0].mxu0 %v3353
        %v3867 = vpop.f32.mrb[0].mxu0
        %v3868 = vadd.f32 %v3595, %v3867
        %v3869 = vpop.f32.mrb[0].mxu0
        %v3870 = vadd.f32 %v3597, %v3869
        %v3871 = vpop.f32.mrb[0].mxu0
        %v3872 = vadd.f32 %v3599, %v3871
        %v3873 = vpop.f32.mrb[0].mxu0
        %v3874 = vadd.f32 %v3601, %v3873
        %3875 = vmatprep.mubr.bf16.mxu0 0
        %3876 = vmatmul.mubr.bf16.gmra.mrb[0].mxu0 %v3354
        %v3877 = vpop.f32.mrb[0].mxu0
        %v3878 = vadd.f32 %v3605, %v3877
        %v3879 = vpop.f32.mrb[0].mxu0
        %v3880 = vadd.f32 %v3607, %v3879
        %v3881 = vpop.f32.mrb[0].mxu0
        %v3882 = vadd.f32 %v3609, %v3881
        %v3883 = vpop.f32.mrb[0].mxu0
        %v3884 = vadd.f32 %v3611, %v3883
        %3885 = vmatprep.mubr.bf16.mxu0 0
        %3886 = vmatmul.mubr.bf16.gmra.mrb[0].mxu0 %v3355
        %v3887 = vpop.f32.mrb[0].mxu0
        %v3888 = vadd.f32 %v3615, %v3887
        %v3889 = vpop.f32.mrb[0].mxu0
        %v3890 = vadd.f32 %v3617, %v3889
        %v3891 = vpop.f32.mrb[0].mxu0
        %v3892 = vadd.f32 %v3619, %v3891
        %v3893 = vpop.f32.mrb[0].mxu0
        %v3894 = vadd.f32 %v3621, %v3893
        %3895 = vmatprep.mubr.bf16.mxu0 0
        %3896 = vmatmul.mubr.bf16.gmra.mrb[0].mxu0 %v3356
        %v3897 = vpop.f32.mrb[0].mxu0
        %v3898 = vadd.f32 %v3625, %v3897
        %v3899 = vpop.f32.mrb[0].mxu0
        %v3900 = vadd.f32 %v3627, %v3899
        %v3901 = vpop.f32.mrb[0].mxu0
        %v3902 = vadd.f32 %v3629, %v3901
        %v3903 = vpop.f32.mrb[0].mxu0
        %v3904 = vadd.f32 %v3631, %v3903
        %3905 = vmatprep.mubr.bf16.mxu0 0
        %3906 = vmatmul.mubr.bf16.gmra.mrb[0].mxu0 %v3357
        %v3907 = vpop.f32.mrb[0].mxu0
        %v3908 = vadd.f32 %v3635, %v3907
        %v3909 = vpop.f32.mrb[0].mxu0
        %v3910 = vadd.f32 %v3637, %v3909
        %v3911 = vpop.f32.mrb[0].mxu0
        %v3912 = vadd.f32 %v3639, %v3911
        %v3913 = vpop.f32.mrb[0].mxu0
        %v3914 = vadd.f32 %v3641, %v3913
        %3915 = vmatprep.mubr.bf16.mxu0 0
        %3916 = vmatmul.mubr.bf16.gmra.mrb[0].mxu0 %v3358
        %v3917 = vpop.f32.mrb[0].mxu0
        %v3918 = vadd.f32 %v3645, %v3917
        %v3919 = vpop.f32.mrb[0].mxu0
        %v3920 = vadd.f32 %v3647, %v3919
        %v3921 = vpop.f32.mrb[0].mxu0
        %v3922 = vadd.f32 %v3649, %v3921
        %v3923 = vpop.f32.mrb[0].mxu0
        %v3924 = vadd.f32 %v3651, %v3923
        %3925 = vmatprep.mubr.bf16.mxu0 0
        %3926 = vmatmul.mubr.bf16.gmra.mrb[0].mxu0 %v3359
        %v3927 = vpop.f32.mrb[0].mxu0
        %v3928 = vadd.f32 %v3655, %v3927
        %v3929 = vpop.f32.mrb[0].mxu0
        %v3930 = vadd.f32 %v3657, %v3929
        %v3931 = vpop.f32.mrb[0].mxu0
        %v3932 = vadd.f32 %v3659, %v3931
        %v3933 = vpop.f32.mrb[0].mxu0
        %v3934 = vadd.f32 %v3661, %v3933
        %3935 = vmatprep.mubr.bf16.mxu0 0
        %3936 = vmatmul.mubr.bf16.gmra.mrb[0].mxu0 %v3360
        %v3937 = vpop.f32.mrb[0].mxu0
        %v3938 = vadd.f32 %v3665, %v3937
        %v3939 = vpop.f32.mrb[0].mxu0
        %v3940 = vadd.f32 %v3667, %v3939
        %v3941 = vpop.f32.mrb[0].mxu0
        %v3942 = vadd.f32 %v3669, %v3941
        %v3943 = vpop.f32.mrb[0].mxu0
        %v3944 = vadd.f32 %v3671, %v3943
        %3945 = vmatprep.mubr.bf16.mxu0 0
        %3946 = vmatmul.mubr.bf16.gmra.mrb[0].mxu0 %v3361
        %v3947 = vpop.f32.mrb[0].mxu0
        %v3948 = vadd.f32 %v3675, %v3947
        %v3949 = vpop.f32.mrb[0].mxu0
        %v3950 = vadd.f32 %v3677, %v3949
        %v3951 = vpop.f32.mrb[0].mxu0
        %v3952 = vadd.f32 %v3679, %v3951
        %v3953 = vpop.f32.mrb[0].mxu0
        %v3954 = vadd.f32 %v3681, %v3953
        %3955 = vdwg.mxu0
        %v3956 = vpack.c.bf16 %v3315, %v3314
        %v3957 = vpack.c.bf16 %v3317, %v3316
        %v3958 = vpack.c.bf16 %v3319, %v3318
        %v3959 = vpack.c.bf16 %v3321, %v3320
        %v3960 = vpack.c.bf16 %v3323, %v3322
        %v3961 = vpack.c.bf16 %v3325, %v3324
        %v3962 = vpack.c.bf16 %v3327, %v3326
        %v3963 = vpack.c.bf16 %v3329, %v3328
        %v3964 = vpack.c.bf16 %v3331, %v3330
        %v3965 = vpack.c.bf16 %v3333, %v3332
        %v3966 = vpack.c.bf16 %v3335, %v3334
        %v3967 = vpack.c.bf16 %v3337, %v3336
        %v3968 = vpack.c.bf16 %v3339, %v3338
        %v3969 = vpack.c.bf16 %v3341, %v3340
        %v3970 = vpack.c.bf16 %v3343, %v3342
        %v3971 = vpack.c.bf16 %v3345, %v3344
        %v3972 = vld [vmem:[%s5 + $0x100] sm:$0xff]
        %v3973 = vld [vmem:[%s5 + $0x108] sm:$0xff]
        %v3974 = vld [vmem:[%s5 + $0x110] sm:$0xff]
        %v3975 = vld [vmem:[%s5 + $0x118] sm:$0xff]
        %v3976 = vld [vmem:[%s5 + $0x120] sm:$0xff]
        %v3977 = vld [vmem:[%s5 + $0x128] sm:$0xff]
        %v3978 = vld [vmem:[%s5 + $0x130] sm:$0xff]
        %v3979 = vld [vmem:[%s5 + $0x138] sm:$0xff]
        %v3980 = vld [vmem:[%s5 + $0x140] sm:$0xff]
        %v3981 = vld [vmem:[%s5 + $0x148] sm:$0xff]
        %v3982 = vld [vmem:[%s5 + $0x150] sm:$0xff]
        %v3983 = vld [vmem:[%s5 + $0x158] sm:$0xff]
        %v3984 = vld [vmem:[%s5 + $0x160] sm:$0xff]
        %v3985 = vld [vmem:[%s5 + $0x168] sm:$0xff]
        %v3986 = vld [vmem:[%s5 + $0x170] sm:$0xff]
        %v3987 = vld [vmem:[%s5 + $0x178] sm:$0xff]
        %v4004 = vunpack.c.l.b16 %v3972
        %v4005 = vunpack.c.h.b16 %v3972
        %v4006 = vunpack.c.l.b16 %v3973
        %v4007 = vunpack.c.h.b16 %v3973
        %v4008 = vunpack.c.l.b16 %v3974
        %v4009 = vunpack.c.h.b16 %v3974
        %v4010 = vunpack.c.l.b16 %v3975
        %v4011 = vunpack.c.h.b16 %v3975
        %v4012 = vunpack.c.l.b16 %v3976
        %v4013 = vunpack.c.h.b16 %v3976
        %v4014 = vunpack.c.l.b16 %v3977
        %v4015 = vunpack.c.h.b16 %v3977
        %v4016 = vunpack.c.l.b16 %v3978
        %v4017 = vunpack.c.h.b16 %v3978
        %v4018 = vunpack.c.l.b16 %v3979
        %v4019 = vunpack.c.h.b16 %v3979
        %v4020 = vunpack.c.l.b16 %v3980
        %v4021 = vunpack.c.h.b16 %v3980
        %v4022 = vunpack.c.l.b16 %v3981
        %v4023 = vunpack.c.h.b16 %v3981
        %v4024 = vunpack.c.l.b16 %v3982
        %v4025 = vunpack.c.h.b16 %v3982
        %v4026 = vunpack.c.l.b16 %v3983
        %v4027 = vunpack.c.h.b16 %v3983
        %v4028 = vunpack.c.l.b16 %v3984
        %v4029 = vunpack.c.h.b16 %v3984
        %v4030 = vunpack.c.l.b16 %v3985
        %v4031 = vunpack.c.h.b16 %v3985
        %v4032 = vunpack.c.l.b16 %v3986
        %v4033 = vunpack.c.h.b16 %v3986
        %v4034 = vunpack.c.l.b16 %v3987
        %v4035 = vunpack.c.h.b16 %v3987
        %v4036 = vpack.c.b16 %v4006, %v4004
        %v4037 = vpack.c.b16 %v4007, %v4005
        %v4038 = vpack.c.b16 %v4010, %v4008
        %v4039 = vpack.c.b16 %v4011, %v4009
        %v4040 = vpack.c.b16 %v4014, %v4012
        %v4041 = vpack.c.b16 %v4015, %v4013
        %v4042 = vpack.c.b16 %v4018, %v4016
        %v4043 = vpack.c.b16 %v4019, %v4017
        %v4044 = vpack.c.b16 %v4022, %v4020
        %v4045 = vpack.c.b16 %v4023, %v4021
        %v4046 = vpack.c.b16 %v4026, %v4024
        %v4047 = vpack.c.b16 %v4027, %v4025
        %v4048 = vpack.c.b16 %v4030, %v4028
        %v4049 = vpack.c.b16 %v4031, %v4029
        %v4050 = vpack.c.b16 %v4034, %v4032
        %v4051 = vpack.c.b16 %v4035, %v4033
        %4068 = vmatprep.subr.bf16.mxu0 %v4037
        %4069 = vmatpush1.bf16.msra.mxu0 %v4036
        %4070 = vmatprep.subr.bf16.mxu0 %v4039
        %4071 = vmatpush1.bf16.msra.mxu0 %v4038
        %4072 = vmatprep.subr.bf16.mxu0 %v4041
        %4073 = vmatpush1.bf16.msra.mxu0 %v4040
        %4074 = vmatprep.subr.bf16.mxu0 %v4043
        %4075 = vmatpush1.bf16.msra.mxu0 %v4042
        %4076 = vmatprep.subr.bf16.mxu0 %v4045
        %4077 = vmatpush1.bf16.msra.mxu0 %v4044
        %4078 = vmatprep.subr.bf16.mxu0 %v4047
        %4079 = vmatpush1.bf16.msra.mxu0 %v4046
        %4080 = vmatprep.subr.bf16.mxu0 %v4049
        %4081 = vmatpush1.bf16.msra.mxu0 %v4048
        %4082 = vmatprep.subr.bf16.mxu0 %v4051
        %4083 = vmatpush1.bf16.msra.mxu0 %v4050
        %4084 = vmatprep.subr.bf16.mxu0 0
        %4085 = vmatpush1.bf16.msra.mxu0 0
        %4086 = vmatprep.subr.bf16.mxu0 0
        %4087 = vmatpush1.bf16.msra.mxu0 0
        %4088 = vmatprep.subr.bf16.mxu0 0
        %4089 = vmatpush1.bf16.msra.mxu0 0
        %4090 = vmatprep.subr.bf16.mxu0 0
        %4091 = vmatpush1.bf16.msra.mxu0 0
        %4092 = vmatprep.subr.bf16.mxu0 0
        %4093 = vmatpush1.bf16.msra.mxu0 0
        %4094 = vmatprep.subr.bf16.mxu0 0
        %4095 = vmatpush1.bf16.msra.mxu0 0
        %4096 = vmatprep.subr.bf16.mxu0 0
        %4097 = vmatpush1.bf16.msra.mxu0 0
        %4098 = vmatprep.subr.bf16.mxu0 0
        %4099 = vmatpush1.bf16.msra.mxu0 0
        %4100 = vmatprep.mubr.bf16.mxu0 0
        %4101 = vmatmul.mubr.bf16.gmra.mrb[0].mxu0 %v3956
        %v4102 = vpop.f32.mrb[0].mxu0
        %v4103 = vadd.f32 0.0, %v4102
        %v4104 = vpop.f32.mrb[0].mxu0
        %v4105 = vadd.f32 0.0, %v4104
        %v4106 = vpop.f32.mrb[0].mxu0
        %v4107 = vadd.f32 0.0, %v4106
        %v4108 = vpop.f32.mrb[0].mxu0
        %v4109 = vadd.f32 0.0, %v4108
        %4110 = vmatprep.mubr.bf16.mxu0 0
        %4111 = vmatmul.mubr.bf16.gmra.mrb[0].mxu0 %v3957
        %v4112 = vpop.f32.mrb[0].mxu0
        %v4113 = vadd.f32 0.0, %v4112
        %v4114 = vpop.f32.mrb[0].mxu0
        %v4115 = vadd.f32 0.0, %v4114
        %v4116 = vpop.f32.mrb[0].mxu0
        %v4117 = vadd.f32 0.0, %v4116
        %v4118 = vpop.f32.mrb[0].mxu0
        %v4119 = vadd.f32 0.0, %v4118
        %4120 = vmatprep.mubr.bf16.mxu0 0
        %4121 = vmatmul.mubr.bf16.gmra.mrb[0].mxu0 %v3958
        %v4122 = vpop.f32.mrb[0].mxu0
        %v4123 = vadd.f32 0.0, %v4122
        %v4124 = vpop.f32.mrb[0].mxu0
        %v4125 = vadd.f32 0.0, %v4124
        %v4126 = vpop.f32.mrb[0].mxu0
        %v4127 = vadd.f32 0.0, %v4126
        %v4128 = vpop.f32.mrb[0].mxu0
        %v4129 = vadd.f32 0.0, %v4128
        %4130 = vmatprep.mubr.bf16.mxu0 0
        %4131 = vmatmul.mubr.bf16.gmra.mrb[0].mxu0 %v3959
        %v4132 = vpop.f32.mrb[0].mxu0
        %v4133 = vadd.f32 0.0, %v4132
        %v4134 = vpop.f32.mrb[0].mxu0
        %v4135 = vadd.f32 0.0, %v4134
        %v4136 = vpop.f32.mrb[0].mxu0
        %v4137 = vadd.f32 0.0, %v4136
        %v4138 = vpop.f32.mrb[0].mxu0
        %v4139 = vadd.f32 0.0, %v4138
        %4140 = vmatprep.mubr.bf16.mxu0 0
        %4141 = vmatmul.mubr.bf16.gmra.mrb[0].mxu0 %v3960
        %v4142 = vpop.f32.mrb[0].mxu0
        %v4143 = vadd.f32 0.0, %v4142
        %v4144 = vpop.f32.mrb[0].mxu0
        %v4145 = vadd.f32 0.0, %v4144
        %v4146 = vpop.f32.mrb[0].mxu0
        %v4147 = vadd.f32 0.0, %v4146
        %v4148 = vpop.f32.mrb[0].mxu0
        %v4149 = vadd.f32 0.0, %v4148
        %4150 = vmatprep.mubr.bf16.mxu0 0
        %4151 = vmatmul.mubr.bf16.gmra.mrb[0].mxu0 %v3961
        %v4152 = vpop.f32.mrb[0].mxu0
        %v4153 = vadd.f32 0.0, %v4152
        %v4154 = vpop.f32.mrb[0].mxu0
        %v4155 = vadd.f32 0.0, %v4154
        %v4156 = vpop.f32.mrb[0].mxu0
        %v4157 = vadd.f32 0.0, %v4156
        %v4158 = vpop.f32.mrb[0].mxu0
        %v4159 = vadd.f32 0.0, %v4158
        %4160 = vmatprep.mubr.bf16.mxu0 0
        %4161 = vmatmul.mubr.bf16.gmra.mrb[0].mxu0 %v3962
        %v4162 = vpop.f32.mrb[0].mxu0
        %v4163 = vadd.f32 0.0, %v4162
        %v4164 = vpop.f32.mrb[0].mxu0
        %v4165 = vadd.f32 0.0, %v4164
        %v4166 = vpop.f32.mrb[0].mxu0
        %v4167 = vadd.f32 0.0, %v4166
        %v4168 = vpop.f32.mrb[0].mxu0
        %v4169 = vadd.f32 0.0, %v4168
        %4170 = vmatprep.mubr.bf16.mxu0 0
        %4171 = vmatmul.mubr.bf16.gmra.mrb[0].mxu0 %v3963
        %v4172 = vpop.f32.mrb[0].mxu0
        %v4173 = vadd.f32 0.0, %v4172
        %v4174 = vpop.f32.mrb[0].mxu0
        %v4175 = vadd.f32 0.0, %v4174
        %v4176 = vpop.f32.mrb[0].mxu0
        %v4177 = vadd.f32 0.0, %v4176
        %v4178 = vpop.f32.mrb[0].mxu0
        %v4179 = vadd.f32 0.0, %v4178
        %4180 = vmatprep.mubr.bf16.mxu0 0
        %4181 = vmatmul.mubr.bf16.gmra.mrb[0].mxu0 %v3964
        %v4182 = vpop.f32.mrb[0].mxu0
        %v4183 = vadd.f32 0.0, %v4182
        %v4184 = vpop.f32.mrb[0].mxu0
        %v4185 = vadd.f32 0.0, %v4184
        %v4186 = vpop.f32.mrb[0].mxu0
        %v4187 = vadd.f32 0.0, %v4186
        %v4188 = vpop.f32.mrb[0].mxu0
        %v4189 = vadd.f32 0.0, %v4188
        %4190 = vmatprep.mubr.bf16.mxu0 0
        %4191 = vmatmul.mubr.bf16.gmra.mrb[0].mxu0 %v3965
        %v4192 = vpop.f32.mrb[0].mxu0
        %v4193 = vadd.f32 0.0, %v4192
        %v4194 = vpop.f32.mrb[0].mxu0
        %v4195 = vadd.f32 0.0, %v4194
        %v4196 = vpop.f32.mrb[0].mxu0
        %v4197 = vadd.f32 0.0, %v4196
        %v4198 = vpop.f32.mrb[0].mxu0
        %v4199 = vadd.f32 0.0, %v4198
        %4200 = vmatprep.mubr.bf16.mxu0 0
        %4201 = vmatmul.mubr.bf16.gmra.mrb[0].mxu0 %v3966
        %v4202 = vpop.f32.mrb[0].mxu0
        %v4203 = vadd.f32 0.0, %v4202
        %v4204 = vpop.f32.mrb[0].mxu0
        %v4205 = vadd.f32 0.0, %v4204
        %v4206 = vpop.f32.mrb[0].mxu0
        %v4207 = vadd.f32 0.0, %v4206
        %v4208 = vpop.f32.mrb[0].mxu0
        %v4209 = vadd.f32 0.0, %v4208
        %4210 = vmatprep.mubr.bf16.mxu0 0
        %4211 = vmatmul.mubr.bf16.gmra.mrb[0].mxu0 %v3967
        %v4212 = vpop.f32.mrb[0].mxu0
        %v4213 = vadd.f32 0.0, %v4212
        %v4214 = vpop.f32.mrb[0].mxu0
        %v4215 = vadd.f32 0.0, %v4214
        %v4216 = vpop.f32.mrb[0].mxu0
        %v4217 = vadd.f32 0.0, %v4216
        %v4218 = vpop.f32.mrb[0].mxu0
        %v4219 = vadd.f32 0.0, %v4218
        %4220 = vmatprep.mubr.bf16.mxu0 0
        %4221 = vmatmul.mubr.bf16.gmra.mrb[0].mxu0 %v3968
        %v4222 = vpop.f32.mrb[0].mxu0
        %v4223 = vadd.f32 0.0, %v4222
        %v4224 = vpop.f32.mrb[0].mxu0
        %v4225 = vadd.f32 0.0, %v4224
        %v4226 = vpop.f32.mrb[0].mxu0
        %v4227 = vadd.f32 0.0, %v4226
        %v4228 = vpop.f32.mrb[0].mxu0
        %v4229 = vadd.f32 0.0, %v4228
        %4230 = vmatprep.mubr.bf16.mxu0 0
        %4231 = vmatmul.mubr.bf16.gmra.mrb[0].mxu0 %v3969
        %v4232 = vpop.f32.mrb[0].mxu0
        %v4233 = vadd.f32 0.0, %v4232
        %v4234 = vpop.f32.mrb[0].mxu0
        %v4235 = vadd.f32 0.0, %v4234
        %v4236 = vpop.f32.mrb[0].mxu0
        %v4237 = vadd.f32 0.0, %v4236
        %v4238 = vpop.f32.mrb[0].mxu0
        %v4239 = vadd.f32 0.0, %v4238
        %4240 = vmatprep.mubr.bf16.mxu0 0
        %4241 = vmatmul.mubr.bf16.gmra.mrb[0].mxu0 %v3970
        %v4242 = vpop.f32.mrb[0].mxu0
        %v4243 = vadd.f32 0.0, %v4242
        %v4244 = vpop.f32.mrb[0].mxu0
        %v4245 = vadd.f32 0.0, %v4244
        %v4246 = vpop.f32.mrb[0].mxu0
        %v4247 = vadd.f32 0.0, %v4246
        %v4248 = vpop.f32.mrb[0].mxu0
        %v4249 = vadd.f32 0.0, %v4248
        %4250 = vmatprep.mubr.bf16.mxu0 0
        %4251 = vmatmul.mubr.bf16.gmra.mrb[0].mxu0 %v3971
        %v4252 = vpop.f32.mrb[0].mxu0
        %v4253 = vadd.f32 0.0, %v4252
        %v4254 = vpop.f32.mrb[0].mxu0
        %v4255 = vadd.f32 0.0, %v4254
        %v4256 = vpop.f32.mrb[0].mxu0
        %v4257 = vadd.f32 0.0, %v4256
        %v4258 = vpop.f32.mrb[0].mxu0
        %v4259 = vadd.f32 0.0, %v4258
        %4260 = vdwg.mxu0
        %v4261 = vadd.f32 %v3798, %v4103
        %v4262 = vadd.f32 %v3800, %v4105
        %v4263 = vadd.f32 %v3802, %v4107
        %v4264 = vadd.f32 %v3804, %v4109
        %v4265 = vadd.f32 %v3808, %v4113
        %v4266 = vadd.f32 %v3810, %v4115
        %v4267 = vadd.f32 %v3812, %v4117
        %v4268 = vadd.f32 %v3814, %v4119
        %v4269 = vadd.f32 %v3818, %v4123
        %v4270 = vadd.f32 %v3820, %v4125
        %v4271 = vadd.f32 %v3822, %v4127
        %v4272 = vadd.f32 %v3824, %v4129
        %v4273 = vadd.f32 %v3828, %v4133
        %v4274 = vadd.f32 %v3830, %v4135
        %v4275 = vadd.f32 %v3832, %v4137
        %v4276 = vadd.f32 %v3834, %v4139
        %v4277 = vadd.f32 %v3838, %v4143
        %v4278 = vadd.f32 %v3840, %v4145
        %v4279 = vadd.f32 %v3842, %v4147
        %v4280 = vadd.f32 %v3844, %v4149
        %v4281 = vadd.f32 %v3848, %v4153
        %v4282 = vadd.f32 %v3850, %v4155
        %v4283 = vadd.f32 %v3852, %v4157
        %v4284 = vadd.f32 %v3854, %v4159
        %v4285 = vadd.f32 %v3858, %v4163
        %v4286 = vadd.f32 %v3860, %v4165
        %v4287 = vadd.f32 %v3862, %v4167
        %v4288 = vadd.f32 %v3864, %v4169
        %v4289 = vadd.f32 %v3868, %v4173
        %v4290 = vadd.f32 %v3870, %v4175
        %v4291 = vadd.f32 %v3872, %v4177
        %v4292 = vadd.f32 %v3874, %v4179
        %v4293 = vadd.f32 %v3878, %v4183
        %v4294 = vadd.f32 %v3880, %v4185
        %v4295 = vadd.f32 %v3882, %v4187
        %v4296 = vadd.f32 %v3884, %v4189
        %v4297 = vadd.f32 %v3888, %v4193
        %v4298 = vadd.f32 %v3890, %v4195
        %v4299 = vadd.f32 %v3892, %v4197
        %v4300 = vadd.f32 %v3894, %v4199
        %v4301 = vadd.f32 %v3898, %v4203
        %v4302 = vadd.f32 %v3900, %v4205
        %v4303 = vadd.f32 %v3902, %v4207
        %v4304 = vadd.f32 %v3904, %v4209
        %v4305 = vadd.f32 %v3908, %v4213
        %v4306 = vadd.f32 %v3910, %v4215
        %v4307 = vadd.f32 %v3912, %v4217
        %v4308 = vadd.f32 %v3914, %v4219
        %v4309 = vadd.f32 %v3918, %v4223
        %v4310 = vadd.f32 %v3920, %v4225
        %v4311 = vadd.f32 %v3922, %v4227
        %v4312 = vadd.f32 %v3924, %v4229
        %v4313 = vadd.f32 %v3928, %v4233
        %v4314 = vadd.f32 %v3930, %v4235
        %v4315 = vadd.f32 %v3932, %v4237
        %v4316 = vadd.f32 %v3934, %v4239
        %v4317 = vadd.f32 %v3938, %v4243
        %v4318 = vadd.f32 %v3940, %v4245
        %v4319 = vadd.f32 %v3942, %v4247
        %v4320 = vadd.f32 %v3944, %v4249
        %v4321 = vadd.f32 %v3948, %v4253
        %v4322 = vadd.f32 %v3950, %v4255
        %v4323 = vadd.f32 %v3952, %v4257
        %v4324 = vadd.f32 %v3954, %v4259
        %v4325 = vld [vmem:[%s6] sm:$0x3]
        %v4327 = vlaneseq
        %v4328 = vshrl.u32 %v4327, 7
        %v4329 = vsub.s32 0, %v4328
        %v4330 = vrot.slane %v4325, %v4329
        %v4331 = vlaneseq
        %v4332 = vshrl.u32 %v4331, 7
        %v4333 = vsub.s32 1, %v4332
        %v4334 = vrot.slane %v4325, %v4333
        %v4337 = vadd.f32 %v4261, %v4330
        %v4338 = vadd.f32 %v4262, %v4334
        %v4339 = vadd.f32 %v4263, %v4330
        %v4340 = vadd.f32 %v4264, %v4334
        %v4341 = vadd.f32 %v4265, %v4330
        %v4342 = vadd.f32 %v4266, %v4334
        %v4343 = vadd.f32 %v4267, %v4330
        %v4344 = vadd.f32 %v4268, %v4334
        %v4345 = vadd.f32 %v4269, %v4330
        %v4346 = vadd.f32 %v4270, %v4334
        %v4347 = vadd.f32 %v4271, %v4330
        %v4348 = vadd.f32 %v4272, %v4334
        %v4349 = vadd.f32 %v4273, %v4330
        %v4350 = vadd.f32 %v4274, %v4334
        %v4351 = vadd.f32 %v4275, %v4330
        %v4352 = vadd.f32 %v4276, %v4334
        %v4353 = vadd.f32 %v4277, %v4330
        %v4354 = vadd.f32 %v4278, %v4334
        %v4355 = vadd.f32 %v4279, %v4330
        %v4356 = vadd.f32 %v4280, %v4334
        %v4357 = vadd.f32 %v4281, %v4330
        %v4358 = vadd.f32 %v4282, %v4334
        %v4359 = vadd.f32 %v4283, %v4330
        %v4360 = vadd.f32 %v4284, %v4334
        %v4361 = vadd.f32 %v4285, %v4330
        %v4362 = vadd.f32 %v4286, %v4334
        %v4363 = vadd.f32 %v4287, %v4330
        %v4364 = vadd.f32 %v4288, %v4334
        %v4365 = vadd.f32 %v4289, %v4330
        %v4366 = vadd.f32 %v4290, %v4334
        %v4367 = vadd.f32 %v4291, %v4330
        %v4368 = vadd.f32 %v4292, %v4334
        %v4369 = vadd.f32 %v4293, %v4330
        %v4370 = vadd.f32 %v4294, %v4334
        %v4371 = vadd.f32 %v4295, %v4330
        %v4372 = vadd.f32 %v4296, %v4334
        %v4373 = vadd.f32 %v4297, %v4330
        %v4374 = vadd.f32 %v4298, %v4334
        %v4375 = vadd.f32 %v4299, %v4330
        %v4376 = vadd.f32 %v4300, %v4334
        %v4377 = vadd.f32 %v4301, %v4330
        %v4378 = vadd.f32 %v4302, %v4334
        %v4379 = vadd.f32 %v4303, %v4330
        %v4380 = vadd.f32 %v4304, %v4334
        %v4381 = vadd.f32 %v4305, %v4330
        %v4382 = vadd.f32 %v4306, %v4334
        %v4383 = vadd.f32 %v4307, %v4330
        %v4384 = vadd.f32 %v4308, %v4334
        %v4385 = vadd.f32 %v4309, %v4330
        %v4386 = vadd.f32 %v4310, %v4334
        %v4387 = vadd.f32 %v4311, %v4330
        %v4388 = vadd.f32 %v4312, %v4334
        %v4389 = vadd.f32 %v4313, %v4330
        %v4390 = vadd.f32 %v4314, %v4334
        %v4391 = vadd.f32 %v4315, %v4330
        %v4392 = vadd.f32 %v4316, %v4334
        %v4393 = vadd.f32 %v4317, %v4330
        %v4394 = vadd.f32 %v4318, %v4334
        %v4395 = vadd.f32 %v4319, %v4330
        %v4396 = vadd.f32 %v4320, %v4334
        %v4397 = vadd.f32 %v4321, %v4330
        %v4398 = vadd.f32 %v4322, %v4334
        %v4399 = vadd.f32 %v4323, %v4330
        %v4400 = vadd.f32 %v4324, %v4334
        %v4401 = vmax.f32 %v4337, 0.0
        %v4402 = vmax.f32 %v4338, 0.0
        %v4403 = vmax.f32 %v4339, 0.0
        %v4404 = vmax.f32 %v4340, 0.0
        %v4405 = vmax.f32 %v4341, 0.0
        %v4406 = vmax.f32 %v4342, 0.0
        %v4407 = vmax.f32 %v4343, 0.0
        %v4408 = vmax.f32 %v4344, 0.0
        %v4409 = vmax.f32 %v4345, 0.0
        %v4410 = vmax.f32 %v4346, 0.0
        %v4411 = vmax.f32 %v4347, 0.0
        %v4412 = vmax.f32 %v4348, 0.0
        %v4413 = vmax.f32 %v4349, 0.0
        %v4414 = vmax.f32 %v4350, 0.0
        %v4415 = vmax.f32 %v4351, 0.0
        %v4416 = vmax.f32 %v4352, 0.0
        %v4417 = vmax.f32 %v4353, 0.0
        %v4418 = vmax.f32 %v4354, 0.0
        %v4419 = vmax.f32 %v4355, 0.0
        %v4420 = vmax.f32 %v4356, 0.0
        %v4421 = vmax.f32 %v4357, 0.0
        %v4422 = vmax.f32 %v4358, 0.0
        %v4423 = vmax.f32 %v4359, 0.0
        %v4424 = vmax.f32 %v4360, 0.0
        %v4425 = vmax.f32 %v4361, 0.0
        %v4426 = vmax.f32 %v4362, 0.0
        %v4427 = vmax.f32 %v4363, 0.0
        %v4428 = vmax.f32 %v4364, 0.0
        %v4429 = vmax.f32 %v4365, 0.0
        %v4430 = vmax.f32 %v4366, 0.0
        %v4431 = vmax.f32 %v4367, 0.0
        %v4432 = vmax.f32 %v4368, 0.0
        %v4433 = vmax.f32 %v4369, 0.0
        %v4434 = vmax.f32 %v4370, 0.0
        %v4435 = vmax.f32 %v4371, 0.0
        %v4436 = vmax.f32 %v4372, 0.0
        %v4437 = vmax.f32 %v4373, 0.0
        %v4438 = vmax.f32 %v4374, 0.0
        %v4439 = vmax.f32 %v4375, 0.0
        %v4440 = vmax.f32 %v4376, 0.0
        %v4441 = vmax.f32 %v4377, 0.0
        %v4442 = vmax.f32 %v4378, 0.0
        %v4443 = vmax.f32 %v4379, 0.0
        %v4444 = vmax.f32 %v4380, 0.0
        %v4445 = vmax.f32 %v4381, 0.0
        %v4446 = vmax.f32 %v4382, 0.0
        %v4447 = vmax.f32 %v4383, 0.0
        %v4448 = vmax.f32 %v4384, 0.0
        %v4449 = vmax.f32 %v4385, 0.0
        %v4450 = vmax.f32 %v4386, 0.0
        %v4451 = vmax.f32 %v4387, 0.0
        %v4452 = vmax.f32 %v4388, 0.0
        %v4453 = vmax.f32 %v4389, 0.0
        %v4454 = vmax.f32 %v4390, 0.0
        %v4455 = vmax.f32 %v4391, 0.0
        %v4456 = vmax.f32 %v4392, 0.0
        %v4457 = vmax.f32 %v4393, 0.0
        %v4458 = vmax.f32 %v4394, 0.0
        %v4459 = vmax.f32 %v4395, 0.0
        %v4460 = vmax.f32 %v4396, 0.0
        %v4461 = vmax.f32 %v4397, 0.0
        %v4462 = vmax.f32 %v4398, 0.0
        %v4463 = vmax.f32 %v4399, 0.0
        %v4464 = vmax.f32 %v4400, 0.0
        %v4529 = vrot.slane %v4401, 1
        %v4530 = vrot.slane %v4402, 1
        %v4531 = vrot.slane %v4403, 1
        %v4532 = vrot.slane %v4404, 1
        %v4533 = vrot.slane %v4405, 1
        %v4534 = vrot.slane %v4406, 1
        %v4535 = vrot.slane %v4407, 1
        %v4536 = vrot.slane %v4408, 1
        %v4537 = vrot.slane %v4409, 1
        %v4538 = vrot.slane %v4410, 1
        %v4539 = vrot.slane %v4411, 1
        %v4540 = vrot.slane %v4412, 1
        %v4541 = vrot.slane %v4413, 1
        %v4542 = vrot.slane %v4414, 1
        %v4543 = vrot.slane %v4415, 1
        %v4544 = vrot.slane %v4416, 1
        %v4545 = vrot.slane %v4417, 1
        %v4546 = vrot.slane %v4418, 1
        %v4547 = vrot.slane %v4419, 1
        %v4548 = vrot.slane %v4420, 1
        %v4549 = vrot.slane %v4421, 1
        %v4550 = vrot.slane %v4422, 1
        %v4551 = vrot.slane %v4423, 1
        %v4552 = vrot.slane %v4424, 1
        %v4553 = vrot.slane %v4425, 1
        %v4554 = vrot.slane %v4426, 1
        %v4555 = vrot.slane %v4427, 1
        %v4556 = vrot.slane %v4428, 1
        %v4557 = vrot.slane %v4429, 1
        %v4558 = vrot.slane %v4430, 1
        %v4559 = vrot.slane %v4431, 1
        %v4560 = vrot.slane %v4432, 1
        %v4561 = vrot.slane %v4433, 1
        %v4562 = vrot.slane %v4434, 1
        %v4563 = vrot.slane %v4435, 1
        %v4564 = vrot.slane %v4436, 1
        %v4565 = vrot.slane %v4437, 1
        %v4566 = vrot.slane %v4438, 1
        %v4567 = vrot.slane %v4439, 1
        %v4568 = vrot.slane %v4440, 1
        %v4569 = vrot.slane %v4441, 1
        %v4570 = vrot.slane %v4442, 1
        %v4571 = vrot.slane %v4443, 1
        %v4572 = vrot.slane %v4444, 1
        %v4573 = vrot.slane %v4445, 1
        %v4574 = vrot.slane %v4446, 1
        %v4575 = vrot.slane %v4447, 1
        %v4576 = vrot.slane %v4448, 1
        %v4577 = vrot.slane %v4449, 1
        %v4578 = vrot.slane %v4450, 1
        %v4579 = vrot.slane %v4451, 1
        %v4580 = vrot.slane %v4452, 1
        %v4581 = vrot.slane %v4453, 1
        %v4582 = vrot.slane %v4454, 1
        %v4583 = vrot.slane %v4455, 1
        %v4584 = vrot.slane %v4456, 1
        %v4585 = vrot.slane %v4457, 1
        %v4586 = vrot.slane %v4458, 1
        %v4587 = vrot.slane %v4459, 1
        %v4588 = vrot.slane %v4460, 1
        %v4589 = vrot.slane %v4461, 1
        %v4590 = vrot.slane %v4462, 1
        %v4591 = vrot.slane %v4463, 1
        %v4592 = vrot.slane %v4464, 1
        %v4657 = vadd.f32 %v4401, %v4529
        %v4658 = vadd.f32 %v4402, %v4530
        %v4659 = vadd.f32 %v4403, %v4531
        %v4660 = vadd.f32 %v4404, %v4532
        %v4661 = vadd.f32 %v4405, %v4533
        %v4662 = vadd.f32 %v4406, %v4534
        %v4663 = vadd.f32 %v4407, %v4535
        %v4664 = vadd.f32 %v4408, %v4536
        %v4665 = vadd.f32 %v4409, %v4537
        %v4666 = vadd.f32 %v4410, %v4538
        %v4667 = vadd.f32 %v4411, %v4539
        %v4668 = vadd.f32 %v4412, %v4540
        %v4669 = vadd.f32 %v4413, %v4541
        %v4670 = vadd.f32 %v4414, %v4542
        %v4671 = vadd.f32 %v4415, %v4543
        %v4672 = vadd.f32 %v4416, %v4544
        %v4673 = vadd.f32 %v4417, %v4545
        %v4674 = vadd.f32 %v4418, %v4546
        %v4675 = vadd.f32 %v4419, %v4547
        %v4676 = vadd.f32 %v4420, %v4548
        %v4677 = vadd.f32 %v4421, %v4549
        %v4678 = vadd.f32 %v4422, %v4550
        %v4679 = vadd.f32 %v4423, %v4551
        %v4680 = vadd.f32 %v4424, %v4552
        %v4681 = vadd.f32 %v4425, %v4553
        %v4682 = vadd.f32 %v4426, %v4554
        %v4683 = vadd.f32 %v4427, %v4555
        %v4684 = vadd.f32 %v4428, %v4556
        %v4685 = vadd.f32 %v4429, %v4557
        %v4686 = vadd.f32 %v4430, %v4558
        %v4687 = vadd.f32 %v4431, %v4559
        %v4688 = vadd.f32 %v4432, %v4560
        %v4689 = vadd.f32 %v4433, %v4561
        %v4690 = vadd.f32 %v4434, %v4562
        %v4691 = vadd.f32 %v4435, %v4563
        %v4692 = vadd.f32 %v4436, %v4564
        %v4693 = vadd.f32 %v4437, %v4565
        %v4694 = vadd.f32 %v4438, %v4566
        %v4695 = vadd.f32 %v4439, %v4567
        %v4696 = vadd.f32 %v4440, %v4568
        %v4697 = vadd.f32 %v4441, %v4569
        %v4698 = vadd.f32 %v4442, %v4570
        %v4699 = vadd.f32 %v4443, %v4571
        %v4700 = vadd.f32 %v4444, %v4572
        %v4701 = vadd.f32 %v4445, %v4573
        %v4702 = vadd.f32 %v4446, %v4574
        %v4703 = vadd.f32 %v4447, %v4575
        %v4704 = vadd.f32 %v4448, %v4576
        %v4705 = vadd.f32 %v4449, %v4577
        %v4706 = vadd.f32 %v4450, %v4578
        %v4707 = vadd.f32 %v4451, %v4579
        %v4708 = vadd.f32 %v4452, %v4580
        %v4709 = vadd.f32 %v4453, %v4581
        %v4710 = vadd.f32 %v4454, %v4582
        %v4711 = vadd.f32 %v4455, %v4583
        %v4712 = vadd.f32 %v4456, %v4584
        %v4713 = vadd.f32 %v4457, %v4585
        %v4714 = vadd.f32 %v4458, %v4586
        %v4715 = vadd.f32 %v4459, %v4587
        %v4716 = vadd.f32 %v4460, %v4588
        %v4717 = vadd.f32 %v4461, %v4589
        %v4718 = vadd.f32 %v4462, %v4590
        %v4719 = vadd.f32 %v4463, %v4591
        %v4720 = vadd.f32 %v4464, %v4592
        %v4721 = vrot.slane %v4401, 2
        %v4722 = vrot.slane %v4402, 2
        %v4723 = vrot.slane %v4403, 2
        %v4724 = vrot.slane %v4404, 2
        %v4725 = vrot.slane %v4405, 2
        %v4726 = vrot.slane %v4406, 2
        %v4727 = vrot.slane %v4407, 2
        %v4728 = vrot.slane %v4408, 2
        %v4729 = vrot.slane %v4409, 2
        %v4730 = vrot.slane %v4410, 2
        %v4731 = vrot.slane %v4411, 2
        %v4732 = vrot.slane %v4412, 2
        %v4733 = vrot.slane %v4413, 2
        %v4734 = vrot.slane %v4414, 2
        %v4735 = vrot.slane %v4415, 2
        %v4736 = vrot.slane %v4416, 2
        %v4737 = vrot.slane %v4417, 2
        %v4738 = vrot.slane %v4418, 2
        %v4739 = vrot.slane %v4419, 2
        %v4740 = vrot.slane %v4420, 2
        %v4741 = vrot.slane %v4421, 2
        %v4742 = vrot.slane %v4422, 2
        %v4743 = vrot.slane %v4423, 2
        %v4744 = vrot.slane %v4424, 2
        %v4745 = vrot.slane %v4425, 2
        %v4746 = vrot.slane %v4426, 2
        %v4747 = vrot.slane %v4427, 2
        %v4748 = vrot.slane %v4428, 2
        %v4749 = vrot.slane %v4429, 2
        %v4750 = vrot.slane %v4430, 2
        %v4751 = vrot.slane %v4431, 2
        %v4752 = vrot.slane %v4432, 2
        %v4753 = vrot.slane %v4433, 2
        %v4754 = vrot.slane %v4434, 2
        %v4755 = vrot.slane %v4435, 2
        %v4756 = vrot.slane %v4436, 2
        %v4757 = vrot.slane %v4437, 2
        %v4758 = vrot.slane %v4438, 2
        %v4759 = vrot.slane %v4439, 2
        %v4760 = vrot.slane %v4440, 2
        %v4761 = vrot.slane %v4441, 2
        %v4762 = vrot.slane %v4442, 2
        %v4763 = vrot.slane %v4443, 2
        %v4764 = vrot.slane %v4444, 2
        %v4765 = vrot.slane %v4445, 2
        %v4766 = vrot.slane %v4446, 2
        %v4767 = vrot.slane %v4447, 2
        %v4768 = vrot.slane %v4448, 2
        %v4769 = vrot.slane %v4449, 2
        %v4770 = vrot.slane %v4450, 2
        %v4771 = vrot.slane %v4451, 2
        %v4772 = vrot.slane %v4452, 2
        %v4773 = vrot.slane %v4453, 2
        %v4774 = vrot.slane %v4454, 2
        %v4775 = vrot.slane %v4455, 2
        %v4776 = vrot.slane %v4456, 2
        %v4777 = vrot.slane %v4457, 2
        %v4778 = vrot.slane %v4458, 2
        %v4779 = vrot.slane %v4459, 2
        %v4780 = vrot.slane %v4460, 2
        %v4781 = vrot.slane %v4461, 2
        %v4782 = vrot.slane %v4462, 2
        %v4783 = vrot.slane %v4463, 2
        %v4784 = vrot.slane %v4464, 2
        %v4849 = vadd.f32 %v4657, %v4721
        %v4850 = vadd.f32 %v4658, %v4722
        %v4851 = vadd.f32 %v4659, %v4723
        %v4852 = vadd.f32 %v4660, %v4724
        %v4853 = vadd.f32 %v4661, %v4725
        %v4854 = vadd.f32 %v4662, %v4726
        %v4855 = vadd.f32 %v4663, %v4727
        %v4856 = vadd.f32 %v4664, %v4728
        %v4857 = vadd.f32 %v4665, %v4729
        %v4858 = vadd.f32 %v4666, %v4730
        %v4859 = vadd.f32 %v4667, %v4731
        %v4860 = vadd.f32 %v4668, %v4732
        %v4861 = vadd.f32 %v4669, %v4733
        %v4862 = vadd.f32 %v4670, %v4734
        %v4863 = vadd.f32 %v4671, %v4735
        %v4864 = vadd.f32 %v4672, %v4736
        %v4865 = vadd.f32 %v4673, %v4737
        %v4866 = vadd.f32 %v4674, %v4738
        %v4867 = vadd.f32 %v4675, %v4739
        %v4868 = vadd.f32 %v4676, %v4740
        %v4869 = vadd.f32 %v4677, %v4741
        %v4870 = vadd.f32 %v4678, %v4742
        %v4871 = vadd.f32 %v4679, %v4743
        %v4872 = vadd.f32 %v4680, %v4744
        %v4873 = vadd.f32 %v4681, %v4745
        %v4874 = vadd.f32 %v4682, %v4746
        %v4875 = vadd.f32 %v4683, %v4747
        %v4876 = vadd.f32 %v4684, %v4748
        %v4877 = vadd.f32 %v4685, %v4749
        %v4878 = vadd.f32 %v4686, %v4750
        %v4879 = vadd.f32 %v4687, %v4751
        %v4880 = vadd.f32 %v4688, %v4752
        %v4881 = vadd.f32 %v4689, %v4753
        %v4882 = vadd.f32 %v4690, %v4754
        %v4883 = vadd.f32 %v4691, %v4755
        %v4884 = vadd.f32 %v4692, %v4756
        %v4885 = vadd.f32 %v4693, %v4757
        %v4886 = vadd.f32 %v4694, %v4758
        %v4887 = vadd.f32 %v4695, %v4759
        %v4888 = vadd.f32 %v4696, %v4760
        %v4889 = vadd.f32 %v4697, %v4761
        %v4890 = vadd.f32 %v4698, %v4762
        %v4891 = vadd.f32 %v4699, %v4763
        %v4892 = vadd.f32 %v4700, %v4764
        %v4893 = vadd.f32 %v4701, %v4765
        %v4894 = vadd.f32 %v4702, %v4766
        %v4895 = vadd.f32 %v4703, %v4767
        %v4896 = vadd.f32 %v4704, %v4768
        %v4897 = vadd.f32 %v4705, %v4769
        %v4898 = vadd.f32 %v4706, %v4770
        %v4899 = vadd.f32 %v4707, %v4771
        %v4900 = vadd.f32 %v4708, %v4772
        %v4901 = vadd.f32 %v4709, %v4773
        %v4902 = vadd.f32 %v4710, %v4774
        %v4903 = vadd.f32 %v4711, %v4775
        %v4904 = vadd.f32 %v4712, %v4776
        %v4905 = vadd.f32 %v4713, %v4777
        %v4906 = vadd.f32 %v4714, %v4778
        %v4907 = vadd.f32 %v4715, %v4779
        %v4908 = vadd.f32 %v4716, %v4780
        %v4909 = vadd.f32 %v4717, %v4781
        %v4910 = vadd.f32 %v4718, %v4782
        %v4911 = vadd.f32 %v4719, %v4783
        %v4912 = vadd.f32 %v4720, %v4784
        %v4913 = vpack.c.bf16 %v4849, %v4849
        %v4914 = vpack.c.bf16 %v4850, %v4850
        %v4915 = vpack.c.bf16 %v4851, %v4851
        %v4916 = vpack.c.bf16 %v4852, %v4852
        %v4917 = vpack.c.bf16 %v4853, %v4853
        %v4918 = vpack.c.bf16 %v4854, %v4854
        %v4919 = vpack.c.bf16 %v4855, %v4855
        %v4920 = vpack.c.bf16 %v4856, %v4856
        %v4921 = vpack.c.bf16 %v4857, %v4857
        %v4922 = vpack.c.bf16 %v4858, %v4858
        %v4923 = vpack.c.bf16 %v4859, %v4859
        %v4924 = vpack.c.bf16 %v4860, %v4860
        %v4925 = vpack.c.bf16 %v4861, %v4861
        %v4926 = vpack.c.bf16 %v4862, %v4862
        %v4927 = vpack.c.bf16 %v4863, %v4863
        %v4928 = vpack.c.bf16 %v4864, %v4864
        %v4929 = vpack.c.bf16 %v4865, %v4865
        %v4930 = vpack.c.bf16 %v4866, %v4866
        %v4931 = vpack.c.bf16 %v4867, %v4867
        %v4932 = vpack.c.bf16 %v4868, %v4868
        %v4933 = vpack.c.bf16 %v4869, %v4869
        %v4934 = vpack.c.bf16 %v4870, %v4870
        %v4935 = vpack.c.bf16 %v4871, %v4871
        %v4936 = vpack.c.bf16 %v4872, %v4872
        %v4937 = vpack.c.bf16 %v4873, %v4873
        %v4938 = vpack.c.bf16 %v4874, %v4874
        %v4939 = vpack.c.bf16 %v4875, %v4875
        %v4940 = vpack.c.bf16 %v4876, %v4876
        %v4941 = vpack.c.bf16 %v4877, %v4877
        %v4942 = vpack.c.bf16 %v4878, %v4878
        %v4943 = vpack.c.bf16 %v4879, %v4879
        %v4944 = vpack.c.bf16 %v4880, %v4880
        %v4945 = vpack.c.bf16 %v4881, %v4881
        %v4946 = vpack.c.bf16 %v4882, %v4882
        %v4947 = vpack.c.bf16 %v4883, %v4883
        %v4948 = vpack.c.bf16 %v4884, %v4884
        %v4949 = vpack.c.bf16 %v4885, %v4885
        %v4950 = vpack.c.bf16 %v4886, %v4886
        %v4951 = vpack.c.bf16 %v4887, %v4887
        %v4952 = vpack.c.bf16 %v4888, %v4888
        %v4953 = vpack.c.bf16 %v4889, %v4889
        %v4954 = vpack.c.bf16 %v4890, %v4890
        %v4955 = vpack.c.bf16 %v4891, %v4891
        %v4956 = vpack.c.bf16 %v4892, %v4892
        %v4957 = vpack.c.bf16 %v4893, %v4893
        %v4958 = vpack.c.bf16 %v4894, %v4894
        %v4959 = vpack.c.bf16 %v4895, %v4895
        %v4960 = vpack.c.bf16 %v4896, %v4896
        %v4961 = vpack.c.bf16 %v4897, %v4897
        %v4962 = vpack.c.bf16 %v4898, %v4898
        %v4963 = vpack.c.bf16 %v4899, %v4899
        %v4964 = vpack.c.bf16 %v4900, %v4900
        %v4965 = vpack.c.bf16 %v4901, %v4901
        %v4966 = vpack.c.bf16 %v4902, %v4902
        %v4967 = vpack.c.bf16 %v4903, %v4903
        %v4968 = vpack.c.bf16 %v4904, %v4904
        %v4969 = vpack.c.bf16 %v4905, %v4905
        %v4970 = vpack.c.bf16 %v4906, %v4906
        %v4971 = vpack.c.bf16 %v4907, %v4907
        %v4972 = vpack.c.bf16 %v4908, %v4908
        %v4973 = vpack.c.bf16 %v4909, %v4909
        %v4974 = vpack.c.bf16 %v4910, %v4910
        %v4975 = vpack.c.bf16 %v4911, %v4911
        %v4976 = vpack.c.bf16 %v4912, %v4912
        %v4977 = vld [vmem:[%s7] sm:$0xf]
        %v4978 = vld [vmem:[%s7 + $0x4] sm:$0xf]
        %v4979 = vld [vmem:[%s7 + $0x8] sm:$0xf]
        %v4980 = vld [vmem:[%s7 + $0xc] sm:$0xf]
        %v4981 = vld [vmem:[%s7 + $0x10] sm:$0xf]
        %v4982 = vld [vmem:[%s7 + $0x14] sm:$0xf]
        %v4983 = vld [vmem:[%s7 + $0x18] sm:$0xf]
        %v4984 = vld [vmem:[%s7 + $0x1c] sm:$0xf]
        %v4985 = vld [vmem:[%s7 + $0x20] sm:$0xf]
        %v4986 = vld [vmem:[%s7 + $0x24] sm:$0xf]
        %v4987 = vld [vmem:[%s7 + $0x28] sm:$0xf]
        %v4988 = vld [vmem:[%s7 + $0x2c] sm:$0xf]
        %v4989 = vld [vmem:[%s7 + $0x30] sm:$0xf]
        %v4990 = vld [vmem:[%s7 + $0x34] sm:$0xf]
        %v4991 = vld [vmem:[%s7 + $0x38] sm:$0xf]
        %v4992 = vld [vmem:[%s7 + $0x3c] sm:$0xf]
        %v4993 = vld [vmem:[%s7 + $0x40] sm:$0xf]
        %v4994 = vld [vmem:[%s7 + $0x44] sm:$0xf]
        %v4995 = vld [vmem:[%s7 + $0x48] sm:$0xf]
        %v4996 = vld [vmem:[%s7 + $0x4c] sm:$0xf]
        %v4997 = vld [vmem:[%s7 + $0x50] sm:$0xf]
        %v4998 = vld [vmem:[%s7 + $0x54] sm:$0xf]
        %v4999 = vld [vmem:[%s7 + $0x58] sm:$0xf]
        %v5000 = vld [vmem:[%s7 + $0x5c] sm:$0xf]
        %v5001 = vld [vmem:[%s7 + $0x60] sm:$0xf]
        %v5002 = vld [vmem:[%s7 + $0x64] sm:$0xf]
        %v5003 = vld [vmem:[%s7 + $0x68] sm:$0xf]
        %v5004 = vld [vmem:[%s7 + $0x6c] sm:$0xf]
        %v5005 = vld [vmem:[%s7 + $0x70] sm:$0xf]
        %v5006 = vld [vmem:[%s7 + $0x74] sm:$0xf]
        %v5007 = vld [vmem:[%s7 + $0x78] sm:$0xf]
        %v5008 = vld [vmem:[%s7 + $0x7c] sm:$0xf]
        %v5009 = vld [vmem:[%s7 + $0x80] sm:$0xf]
        %v5010 = vld [vmem:[%s7 + $0x84] sm:$0xf]
        %v5011 = vld [vmem:[%s7 + $0x88] sm:$0xf]
        %v5012 = vld [vmem:[%s7 + $0x8c] sm:$0xf]
        %v5013 = vld [vmem:[%s7 + $0x90] sm:$0xf]
        %v5014 = vld [vmem:[%s7 + $0x94] sm:$0xf]
        %v5015 = vld [vmem:[%s7 + $0x98] sm:$0xf]
        %v5016 = vld [vmem:[%s7 + $0x9c] sm:$0xf]
        %v5017 = vld [vmem:[%s7 + $0xa0] sm:$0xf]
        %v5018 = vld [vmem:[%s7 + $0xa4] sm:$0xf]
        %v5019 = vld [vmem:[%s7 + $0xa8] sm:$0xf]
        %v5020 = vld [vmem:[%s7 + $0xac] sm:$0xf]
        %v5021 = vld [vmem:[%s7 + $0xb0] sm:$0xf]
        %v5022 = vld [vmem:[%s7 + $0xb4] sm:$0xf]
        %v5023 = vld [vmem:[%s7 + $0xb8] sm:$0xf]
        %v5024 = vld [vmem:[%s7 + $0xbc] sm:$0xf]
        %v5025 = vld [vmem:[%s7 + $0xc0] sm:$0xf]
        %v5026 = vld [vmem:[%s7 + $0xc4] sm:$0xf]
        %v5027 = vld [vmem:[%s7 + $0xc8] sm:$0xf]
        %v5028 = vld [vmem:[%s7 + $0xcc] sm:$0xf]
        %v5029 = vld [vmem:[%s7 + $0xd0] sm:$0xf]
        %v5030 = vld [vmem:[%s7 + $0xd4] sm:$0xf]
        %v5031 = vld [vmem:[%s7 + $0xd8] sm:$0xf]
        %v5032 = vld [vmem:[%s7 + $0xdc] sm:$0xf]
        %v5033 = vld [vmem:[%s7 + $0xe0] sm:$0xf]
        %v5034 = vld [vmem:[%s7 + $0xe4] sm:$0xf]
        %v5035 = vld [vmem:[%s7 + $0xe8] sm:$0xf]
        %v5036 = vld [vmem:[%s7 + $0xec] sm:$0xf]
        %v5037 = vld [vmem:[%s7 + $0xf0] sm:$0xf]
        %v5038 = vld [vmem:[%s7 + $0xf4] sm:$0xf]
        %v5039 = vld [vmem:[%s7 + $0xf8] sm:$0xf]
        %v5040 = vld [vmem:[%s7 + $0xfc] sm:$0xf]
        %v5105 = vunpack.c.l.b16 %v4913
        %v5106 = vunpack.c.l.b16 %v4914
        %v5107 = vunpack.c.l.b16 %v4915
        %v5108 = vunpack.c.l.b16 %v4916
        %v5109 = vunpack.c.l.b16 %v4917
        %v5110 = vunpack.c.l.b16 %v4918
        %v5111 = vunpack.c.l.b16 %v4919
        %v5112 = vunpack.c.l.b16 %v4920
        %v5113 = vunpack.c.l.b16 %v4921
        %v5114 = vunpack.c.l.b16 %v4922
        %v5115 = vunpack.c.l.b16 %v4923
        %v5116 = vunpack.c.l.b16 %v4924
        %v5117 = vunpack.c.l.b16 %v4925
        %v5118 = vunpack.c.l.b16 %v4926
        %v5119 = vunpack.c.l.b16 %v4927
        %v5120 = vunpack.c.l.b16 %v4928
        %v5121 = vunpack.c.l.b16 %v4929
        %v5122 = vunpack.c.l.b16 %v4930
        %v5123 = vunpack.c.l.b16 %v4931
        %v5124 = vunpack.c.l.b16 %v4932
        %v5125 = vunpack.c.l.b16 %v4933
        %v5126 = vunpack.c.l.b16 %v4934
        %v5127 = vunpack.c.l.b16 %v4935
        %v5128 = vunpack.c.l.b16 %v4936
        %v5129 = vunpack.c.l.b16 %v4937
        %v5130 = vunpack.c.l.b16 %v4938
        %v5131 = vunpack.c.l.b16 %v4939
        %v5132 = vunpack.c.l.b16 %v4940
        %v5133 = vunpack.c.l.b16 %v4941
        %v5134 = vunpack.c.l.b16 %v4942
        %v5135 = vunpack.c.l.b16 %v4943
        %v5136 = vunpack.c.l.b16 %v4944
        %v5137 = vunpack.c.l.b16 %v4945
        %v5138 = vunpack.c.l.b16 %v4946
        %v5139 = vunpack.c.l.b16 %v4947
        %v5140 = vunpack.c.l.b16 %v4948
        %v5141 = vunpack.c.l.b16 %v4949
        %v5142 = vunpack.c.l.b16 %v4950
        %v5143 = vunpack.c.l.b16 %v4951
        %v5144 = vunpack.c.l.b16 %v4952
        %v5145 = vunpack.c.l.b16 %v4953
        %v5146 = vunpack.c.l.b16 %v4954
        %v5147 = vunpack.c.l.b16 %v4955
        %v5148 = vunpack.c.l.b16 %v4956
        %v5149 = vunpack.c.l.b16 %v4957
        %v5150 = vunpack.c.l.b16 %v4958
        %v5151 = vunpack.c.l.b16 %v4959
        %v5152 = vunpack.c.l.b16 %v4960
        %v5153 = vunpack.c.l.b16 %v4961
        %v5154 = vunpack.c.l.b16 %v4962
        %v5155 = vunpack.c.l.b16 %v4963
        %v5156 = vunpack.c.l.b16 %v4964
        %v5157 = vunpack.c.l.b16 %v4965
        %v5158 = vunpack.c.l.b16 %v4966
        %v5159 = vunpack.c.l.b16 %v4967
        %v5160 = vunpack.c.l.b16 %v4968
        %v5161 = vunpack.c.l.b16 %v4969
        %v5162 = vunpack.c.l.b16 %v4970
        %v5163 = vunpack.c.l.b16 %v4971
        %v5164 = vunpack.c.l.b16 %v4972
        %v5165 = vunpack.c.l.b16 %v4973
        %v5166 = vunpack.c.l.b16 %v4974
        %v5167 = vunpack.c.l.b16 %v4975
        %v5168 = vunpack.c.l.b16 %v4976
        %v5169 = vrot.slane %v5105, 3
        %v5170 = vrot.slane %v5107, 2
        %vm5171 = vcmask 1041409
        %v5172 = vsel %vm5171, %v5170, %v5169
        %v5173 = vrot.slane %v5109, 1
        %vm5174 = vcmask 1042434
        %v5175 = vsel %vm5174, %v5173, %v5172
        %vm5176 = vcmask 1043459
        %v5177 = vsel %vm5176, %v5111, %v5175
        %v5178 = vrot.slane %v5113, 7
        %vm5179 = vcmask 1044484
        %v5180 = vsel %vm5179, %v5178, %v5177
        %v5181 = vrot.slane %v5115, 6
        %vm5182 = vcmask 1045509
        %v5183 = vsel %vm5182, %v5181, %v5180
        %v5184 = vrot.slane %v5117, 5
        %vm5185 = vcmask 1046534
        %v5186 = vsel %vm5185, %v5184, %v5183
        %v5187 = vrot.slane %v5119, 4
        %vm5188 = vcmask 1047559
        %v5189 = vsel %vm5188, %v5187, %v5186
        %v5190 = vrot.slane %v5106, 3
        %v5191 = vrot.slane %v5108, 2
        %v5192 = vsel %vm5171, %v5191, %v5190
        %v5193 = vrot.slane %v5110, 1
        %v5194 = vsel %vm5174, %v5193, %v5192
        %v5195 = vsel %vm5176, %v5112, %v5194
        %v5196 = vrot.slane %v5114, 7
        %v5197 = vsel %vm5179, %v5196, %v5195
        %v5198 = vrot.slane %v5116, 6
        %v5199 = vsel %vm5182, %v5198, %v5197
        %v5200 = vrot.slane %v5118, 5
        %v5201 = vsel %vm5185, %v5200, %v5199
        %v5202 = vrot.slane %v5120, 4
        %v5203 = vsel %vm5188, %v5202, %v5201
        %v5204 = vrot.slane %v5121, 3
        %v5205 = vrot.slane %v5123, 2
        %v5206 = vsel %vm5171, %v5205, %v5204
        %v5207 = vrot.slane %v5125, 1
        %v5208 = vsel %vm5174, %v5207, %v5206
        %v5209 = vsel %vm5176, %v5127, %v5208
        %v5210 = vrot.slane %v5129, 7
        %v5211 = vsel %vm5179, %v5210, %v5209
        %v5212 = vrot.slane %v5131, 6
        %v5213 = vsel %vm5182, %v5212, %v5211
        %v5214 = vrot.slane %v5133, 5
        %v5215 = vsel %vm5185, %v5214, %v5213
        %v5216 = vrot.slane %v5135, 4
        %v5217 = vsel %vm5188, %v5216, %v5215
        %v5218 = vrot.slane %v5122, 3
        %v5219 = vrot.slane %v5124, 2
        %v5220 = vsel %vm5171, %v5219, %v5218
        %v5221 = vrot.slane %v5126, 1
        %v5222 = vsel %vm5174, %v5221, %v5220
        %v5223 = vsel %vm5176, %v5128, %v5222
        %v5224 = vrot.slane %v5130, 7
        %v5225 = vsel %vm5179, %v5224, %v5223
        %v5226 = vrot.slane %v5132, 6
        %v5227 = vsel %vm5182, %v5226, %v5225
        %v5228 = vrot.slane %v5134, 5
        %v5229 = vsel %vm5185, %v5228, %v5227
        %v5230 = vrot.slane %v5136, 4
        %v5231 = vsel %vm5188, %v5230, %v5229
        %v5232 = vrot.slane %v5137, 3
        %v5233 = vrot.slane %v5139, 2
        %v5234 = vsel %vm5171, %v5233, %v5232
        %v5235 = vrot.slane %v5141, 1
        %v5236 = vsel %vm5174, %v5235, %v5234
        %v5237 = vsel %vm5176, %v5143, %v5236
        %v5238 = vrot.slane %v5145, 7
        %v5239 = vsel %vm5179, %v5238, %v5237
        %v5240 = vrot.slane %v5147, 6
        %v5241 = vsel %vm5182, %v5240, %v5239
        %v5242 = vrot.slane %v5149, 5
        %v5243 = vsel %vm5185, %v5242, %v5241
        %v5244 = vrot.slane %v5151, 4
        %v5245 = vsel %vm5188, %v5244, %v5243
        %v5246 = vrot.slane %v5138, 3
        %v5247 = vrot.slane %v5140, 2
        %v5248 = vsel %vm5171, %v5247, %v5246
        %v5249 = vrot.slane %v5142, 1
        %v5250 = vsel %vm5174, %v5249, %v5248
        %v5251 = vsel %vm5176, %v5144, %v5250
        %v5252 = vrot.slane %v5146, 7
        %v5253 = vsel %vm5179, %v5252, %v5251
        %v5254 = vrot.slane %v5148, 6
        %v5255 = vsel %vm5182, %v5254, %v5253
        %v5256 = vrot.slane %v5150, 5
        %v5257 = vsel %vm5185, %v5256, %v5255
        %v5258 = vrot.slane %v5152, 4
        %v5259 = vsel %vm5188, %v5258, %v5257
        %v5260 = vrot.slane %v5153, 3
        %v5261 = vrot.slane %v5155, 2
        %v5262 = vsel %vm5171, %v5261, %v5260
        %v5263 = vrot.slane %v5157, 1
        %v5264 = vsel %vm5174, %v5263, %v5262
        %v5265 = vsel %vm5176, %v5159, %v5264
        %v5266 = vrot.slane %v5161, 7
        %v5267 = vsel %vm5179, %v5266, %v5265
        %v5268 = vrot.slane %v5163, 6
        %v5269 = vsel %vm5182, %v5268, %v5267
        %v5270 = vrot.slane %v5165, 5
        %v5271 = vsel %vm5185, %v5270, %v5269
        %v5272 = vrot.slane %v5167, 4
        %v5273 = vsel %vm5188, %v5272, %v5271
        %v5274 = vrot.slane %v5154, 3
        %v5275 = vrot.slane %v5156, 2
        %v5276 = vsel %vm5171, %v5275, %v5274
        %v5277 = vrot.slane %v5158, 1
        %v5278 = vsel %vm5174, %v5277, %v5276
        %v5279 = vsel %vm5176, %v5160, %v5278
        %v5280 = vrot.slane %v5162, 7
        %v5281 = vsel %vm5179, %v5280, %v5279
        %v5282 = vrot.slane %v5164, 6
        %v5283 = vsel %vm5182, %v5282, %v5281
        %v5284 = vrot.slane %v5166, 5
        %v5285 = vsel %vm5185, %v5284, %v5283
        %v5286 = vrot.slane %v5168, 4
        %v5287 = vsel %vm5188, %v5286, %v5285
        %v5288 = vpack.c.b16 %v5217, %v5189
        %v5289 = vpack.c.b16 %v5231, %v5203
        %v5290 = vpack.c.b16 %v5273, %v5245
        %v5291 = vpack.c.b16 %v5287, %v5259
        %v5328 = vunpack.c.l.b16 %v5009
        %v5329 = vunpack.c.l.b16 %v5010
        %v5330 = vunpack.c.l.b16 %v5011
        %v5331 = vunpack.c.l.b16 %v5012
        %v5332 = vunpack.c.l.b16 %v5013
        %v5333 = vunpack.c.l.b16 %v5014
        %v5334 = vunpack.c.l.b16 %v5015
        %v5335 = vunpack.c.l.b16 %v5016
        %v5336 = vunpack.c.l.b16 %v5017
        %v5337 = vunpack.c.l.b16 %v5018
        %v5338 = vunpack.c.l.b16 %v5019
        %v5339 = vunpack.c.l.b16 %v5020
        %v5340 = vunpack.c.l.b16 %v5021
        %v5341 = vunpack.c.l.b16 %v5022
        %v5342 = vunpack.c.l.b16 %v5023
        %v5343 = vunpack.c.l.b16 %v5024
        %v5344 = vunpack.c.l.b16 %v5025
        %v5345 = vunpack.c.l.b16 %v5026
        %v5346 = vunpack.c.l.b16 %v5027
        %v5347 = vunpack.c.l.b16 %v5028
        %v5348 = vunpack.c.l.b16 %v5029
        %v5349 = vunpack.c.l.b16 %v5030
        %v5350 = vunpack.c.l.b16 %v5031
        %v5351 = vunpack.c.l.b16 %v5032
        %v5352 = vunpack.c.l.b16 %v5033
        %v5353 = vunpack.c.l.b16 %v5034
        %v5354 = vunpack.c.l.b16 %v5035
        %v5355 = vunpack.c.l.b16 %v5036
        %v5356 = vunpack.c.l.b16 %v5037
        %v5357 = vunpack.c.l.b16 %v5038
        %v5358 = vunpack.c.l.b16 %v5039
        %v5359 = vunpack.c.l.b16 %v5040
        %v5360 = vpack.c.b16 %v5329, %v5328
        %v5361 = vpack.c.b16 %v5331, %v5330
        %v5362 = vpack.c.b16 %v5333, %v5332
        %v5363 = vpack.c.b16 %v5335, %v5334
        %v5364 = vpack.c.b16 %v5337, %v5336
        %v5365 = vpack.c.b16 %v5339, %v5338
        %v5366 = vpack.c.b16 %v5341, %v5340
        %v5367 = vpack.c.b16 %v5343, %v5342
        %v5368 = vpack.c.b16 %v5345, %v5344
        %v5369 = vpack.c.b16 %v5347, %v5346
        %v5370 = vpack.c.b16 %v5349, %v5348
        %v5371 = vpack.c.b16 %v5351, %v5350
        %v5372 = vpack.c.b16 %v5353, %v5352
        %v5373 = vpack.c.b16 %v5355, %v5354
        %v5374 = vpack.c.b16 %v5357, %v5356
        %v5375 = vpack.c.b16 %v5359, %v5358
        %5392 = vmatprep.subr.bf16.mxu0 0
        %5393 = vmatpush1.bf16.msra.mxu0 %v5360
        %5394 = vmatprep.subr.bf16.mxu0 0
        %5395 = vmatpush1.bf16.msra.mxu0 %v5361
        %5396 = vmatprep.subr.bf16.mxu0 0
        %5397 = vmatpush1.bf16.msra.mxu0 %v5362
        %5398 = vmatprep.subr.bf16.mxu0 0
        %5399 = vmatpush1.bf16.msra.mxu0 %v5363
        %5400 = vmatprep.subr.bf16.mxu0 0
        %5401 = vmatpush1.bf16.msra.mxu0 %v5364
        %5402 = vmatprep.subr.bf16.mxu0 0
        %5403 = vmatpush1.bf16.msra.mxu0 %v5365
        %5404 = vmatprep.subr.bf16.mxu0 0
        %5405 = vmatpush1.bf16.msra.mxu0 %v5366
        %5406 = vmatprep.subr.bf16.mxu0 0
        %5407 = vmatpush1.bf16.msra.mxu0 %v5367
        %5408 = vmatprep.subr.bf16.mxu0 0
        %5409 = vmatpush1.bf16.msra.mxu0 %v5368
        %5410 = vmatprep.subr.bf16.mxu0 0
        %5411 = vmatpush1.bf16.msra.mxu0 %v5369
        %5412 = vmatprep.subr.bf16.mxu0 0
        %5413 = vmatpush1.bf16.msra.mxu0 %v5370
        %5414 = vmatprep.subr.bf16.mxu0 0
        %5415 = vmatpush1.bf16.msra.mxu0 %v5371
        %5416 = vmatprep.subr.bf16.mxu0 0
        %5417 = vmatpush1.bf16.msra.mxu0 %v5372
        %5418 = vmatprep.subr.bf16.mxu0 0
        %5419 = vmatpush1.bf16.msra.mxu0 %v5373
        %5420 = vmatprep.subr.bf16.mxu0 0
        %5421 = vmatpush1.bf16.msra.mxu0 %v5374
        %5422 = vmatprep.subr.bf16.mxu0 0
        %5423 = vmatpush1.bf16.msra.mxu0 %v5375
        %5424 = vmatprep.mubr.bf16.mxu0 %v5289
        %5425 = vmatmul.mubr.bf16.gmra.mrb[0].mxu0 %v5288
        %v5426 = vpop.f32.mrb[0].mxu0
        %v5427 = vadd.f32 0.0, %v5426
        %v5428 = vpop.f32.mrb[0].mxu0
        %v5429 = vpop.f32.mrb[0].mxu0
        %v5430 = vadd.f32 0.0, %v5429
        %v5431 = vpop.f32.mrb[0].mxu0
        %5432 = vmatprep.mubr.bf16.mxu0 %v5291
        %5433 = vmatmul.mubr.bf16.gmra.mrb[0].mxu0 %v5290
        %v5434 = vpop.f32.mrb[0].mxu0
        %v5435 = vadd.f32 0.0, %v5434
        %v5436 = vpop.f32.mrb[0].mxu0
        %v5437 = vpop.f32.mrb[0].mxu0
        %v5438 = vadd.f32 0.0, %v5437
        %v5439 = vpop.f32.mrb[0].mxu0
        %5440 = vdwg.mxu0
        %v5441 = vrot.slane %v5107, 7
        %v5442 = vsel %vm5171, %v5441, %v5105
        %v5443 = vrot.slane %v5109, 6
        %v5444 = vsel %vm5174, %v5443, %v5442
        %v5445 = vrot.slane %v5111, 5
        %v5446 = vsel %vm5176, %v5445, %v5444
        %v5447 = vrot.slane %v5113, 4
        %v5448 = vsel %vm5179, %v5447, %v5446
        %v5449 = vrot.slane %v5115, 3
        %v5450 = vsel %vm5182, %v5449, %v5448
        %v5451 = vrot.slane %v5117, 2
        %v5452 = vsel %vm5185, %v5451, %v5450
        %v5453 = vrot.slane %v5119, 1
        %v5454 = vsel %vm5188, %v5453, %v5452
        %v5455 = vrot.slane %v5108, 7
        %v5456 = vsel %vm5171, %v5455, %v5106
        %v5457 = vrot.slane %v5110, 6
        %v5458 = vsel %vm5174, %v5457, %v5456
        %v5459 = vrot.slane %v5112, 5
        %v5460 = vsel %vm5176, %v5459, %v5458
        %v5461 = vrot.slane %v5114, 4
        %v5462 = vsel %vm5179, %v5461, %v5460
        %v5463 = vrot.slane %v5116, 3
        %v5464 = vsel %vm5182, %v5463, %v5462
        %v5465 = vrot.slane %v5118, 2
        %v5466 = vsel %vm5185, %v5465, %v5464
        %v5467 = vrot.slane %v5120, 1
        %v5468 = vsel %vm5188, %v5467, %v5466
        %v5469 = vrot.slane %v5123, 7
        %v5470 = vsel %vm5171, %v5469, %v5121
        %v5471 = vrot.slane %v5125, 6
        %v5472 = vsel %vm5174, %v5471, %v5470
        %v5473 = vrot.slane %v5127, 5
        %v5474 = vsel %vm5176, %v5473, %v5472
        %v5475 = vrot.slane %v5129, 4
        %v5476 = vsel %vm5179, %v5475, %v5474
        %v5477 = vrot.slane %v5131, 3
        %v5478 = vsel %vm5182, %v5477, %v5476
        %v5479 = vrot.slane %v5133, 2
        %v5480 = vsel %vm5185, %v5479, %v5478
        %v5481 = vrot.slane %v5135, 1
        %v5482 = vsel %vm5188, %v5481, %v5480
        %v5483 = vrot.slane %v5124, 7
        %v5484 = vsel %vm5171, %v5483, %v5122
        %v5485 = vrot.slane %v5126, 6
        %v5486 = vsel %vm5174, %v5485, %v5484
        %v5487 = vrot.slane %v5128, 5
        %v5488 = vsel %vm5176, %v5487, %v5486
        %v5489 = vrot.slane %v5130, 4
        %v5490 = vsel %vm5179, %v5489, %v5488
        %v5491 = vrot.slane %v5132, 3
        %v5492 = vsel %vm5182, %v5491, %v5490
        %v5493 = vrot.slane %v5134, 2
        %v5494 = vsel %vm5185, %v5493, %v5492
        %v5495 = vrot.slane %v5136, 1
        %v5496 = vsel %vm5188, %v5495, %v5494
        %v5497 = vrot.slane %v5139, 7
        %v5498 = vsel %vm5171, %v5497, %v5137
        %v5499 = vrot.slane %v5141, 6
        %v5500 = vsel %vm5174, %v5499, %v5498
        %v5501 = vrot.slane %v5143, 5
        %v5502 = vsel %vm5176, %v5501, %v5500
        %v5503 = vrot.slane %v5145, 4
        %v5504 = vsel %vm5179, %v5503, %v5502
        %v5505 = vrot.slane %v5147, 3
        %v5506 = vsel %vm5182, %v5505, %v5504
        %v5507 = vrot.slane %v5149, 2
        %v5508 = vsel %vm5185, %v5507, %v5506
        %v5509 = vrot.slane %v5151, 1
        %v5510 = vsel %vm5188, %v5509, %v5508
        %v5511 = vrot.slane %v5140, 7
        %v5512 = vsel %vm5171, %v5511, %v5138
        %v5513 = vrot.slane %v5142, 6
        %v5514 = vsel %vm5174, %v5513, %v5512
        %v5515 = vrot.slane %v5144, 5
        %v5516 = vsel %vm5176, %v5515, %v5514
        %v5517 = vrot.slane %v5146, 4
        %v5518 = vsel %vm5179, %v5517, %v5516
        %v5519 = vrot.slane %v5148, 3
        %v5520 = vsel %vm5182, %v5519, %v5518
        %v5521 = vrot.slane %v5150, 2
        %v5522 = vsel %vm5185, %v5521, %v5520
        %v5523 = vrot.slane %v5152, 1
        %v5524 = vsel %vm5188, %v5523, %v5522
        %v5525 = vrot.slane %v5155, 7
        %v5526 = vsel %vm5171, %v5525, %v5153
        %v5527 = vrot.slane %v5157, 6
        %v5528 = vsel %vm5174, %v5527, %v5526
        %v5529 = vrot.slane %v5159, 5
        %v5530 = vsel %vm5176, %v5529, %v5528
        %v5531 = vrot.slane %v5161, 4
        %v5532 = vsel %vm5179, %v5531, %v5530
        %v5533 = vrot.slane %v5163, 3
        %v5534 = vsel %vm5182, %v5533, %v5532
        %v5535 = vrot.slane %v5165, 2
        %v5536 = vsel %vm5185, %v5535, %v5534
        %v5537 = vrot.slane %v5167, 1
        %v5538 = vsel %vm5188, %v5537, %v5536
        %v5539 = vrot.slane %v5156, 7
        %v5540 = vsel %vm5171, %v5539, %v5154
        %v5541 = vrot.slane %v5158, 6
        %v5542 = vsel %vm5174, %v5541, %v5540
        %v5543 = vrot.slane %v5160, 5
        %v5544 = vsel %vm5176, %v5543, %v5542
        %v5545 = vrot.slane %v5162, 4
        %v5546 = vsel %vm5179, %v5545, %v5544
        %v5547 = vrot.slane %v5164, 3
        %v5548 = vsel %vm5182, %v5547, %v5546
        %v5549 = vrot.slane %v5166, 2
        %v5550 = vsel %vm5185, %v5549, %v5548
        %v5551 = vrot.slane %v5168, 1
        %v5552 = vsel %vm5188, %v5551, %v5550
        %v5553 = vpack.c.b16 %v5482, %v5454
        %v5554 = vpack.c.b16 %v5496, %v5468
        %v5555 = vpack.c.b16 %v5538, %v5510
        %v5556 = vpack.c.b16 %v5552, %v5524
        %v5593 = vunpack.c.l.b16 %v4977
        %v5594 = vunpack.c.l.b16 %v4978
        %v5595 = vunpack.c.l.b16 %v4979
        %v5596 = vunpack.c.l.b16 %v4980
        %v5597 = vunpack.c.l.b16 %v4981
        %v5598 = vunpack.c.l.b16 %v4982
        %v5599 = vunpack.c.l.b16 %v4983
        %v5600 = vunpack.c.l.b16 %v4984
        %v5601 = vunpack.c.l.b16 %v4985
        %v5602 = vunpack.c.l.b16 %v4986
        %v5603 = vunpack.c.l.b16 %v4987
        %v5604 = vunpack.c.l.b16 %v4988
        %v5605 = vunpack.c.l.b16 %v4989
        %v5606 = vunpack.c.l.b16 %v4990
        %v5607 = vunpack.c.l.b16 %v4991
        %v5608 = vunpack.c.l.b16 %v4992
        %v5609 = vunpack.c.l.b16 %v4993
        %v5610 = vunpack.c.l.b16 %v4994
        %v5611 = vunpack.c.l.b16 %v4995
        %v5612 = vunpack.c.l.b16 %v4996
        %v5613 = vunpack.c.l.b16 %v4997
        %v5614 = vunpack.c.l.b16 %v4998
        %v5615 = vunpack.c.l.b16 %v4999
        %v5616 = vunpack.c.l.b16 %v5000
        %v5617 = vunpack.c.l.b16 %v5001
        %v5618 = vunpack.c.l.b16 %v5002
        %v5619 = vunpack.c.l.b16 %v5003
        %v5620 = vunpack.c.l.b16 %v5004
        %v5621 = vunpack.c.l.b16 %v5005
        %v5622 = vunpack.c.l.b16 %v5006
        %v5623 = vunpack.c.l.b16 %v5007
        %v5624 = vunpack.c.l.b16 %v5008
        %v5625 = vpack.c.b16 %v5594, %v5593
        %v5626 = vpack.c.b16 %v5596, %v5595
        %v5627 = vpack.c.b16 %v5598, %v5597
        %v5628 = vpack.c.b16 %v5600, %v5599
        %v5629 = vpack.c.b16 %v5602, %v5601
        %v5630 = vpack.c.b16 %v5604, %v5603
        %v5631 = vpack.c.b16 %v5606, %v5605
        %v5632 = vpack.c.b16 %v5608, %v5607
        %v5633 = vpack.c.b16 %v5610, %v5609
        %v5634 = vpack.c.b16 %v5612, %v5611
        %v5635 = vpack.c.b16 %v5614, %v5613
        %v5636 = vpack.c.b16 %v5616, %v5615
        %v5637 = vpack.c.b16 %v5618, %v5617
        %v5638 = vpack.c.b16 %v5620, %v5619
        %v5639 = vpack.c.b16 %v5622, %v5621
        %v5640 = vpack.c.b16 %v5624, %v5623
        %5657 = vmatprep.subr.bf16.mxu0 0
        %5658 = vmatpush1.bf16.msra.mxu0 %v5625
        %5659 = vmatprep.subr.bf16.mxu0 0
        %5660 = vmatpush1.bf16.msra.mxu0 %v5626
        %5661 = vmatprep.subr.bf16.mxu0 0
        %5662 = vmatpush1.bf16.msra.mxu0 %v5627
        %5663 = vmatprep.subr.bf16.mxu0 0
        %5664 = vmatpush1.bf16.msra.mxu0 %v5628
        %5665 = vmatprep.subr.bf16.mxu0 0
        %5666 = vmatpush1.bf16.msra.mxu0 %v5629
        %5667 = vmatprep.subr.bf16.mxu0 0
        %5668 = vmatpush1.bf16.msra.mxu0 %v5630
        %5669 = vmatprep.subr.bf16.mxu0 0
        %5670 = vmatpush1.bf16.msra.mxu0 %v5631
        %5671 = vmatprep.subr.bf16.mxu0 0
        %5672 = vmatpush1.bf16.msra.mxu0 %v5632
        %5673 = vmatprep.subr.bf16.mxu0 0
        %5674 = vmatpush1.bf16.msra.mxu0 %v5633
        %5675 = vmatprep.subr.bf16.mxu0 0
        %5676 = vmatpush1.bf16.msra.mxu0 %v5634
        %5677 = vmatprep.subr.bf16.mxu0 0
        %5678 = vmatpush1.bf16.msra.mxu0 %v5635
        %5679 = vmatprep.subr.bf16.mxu0 0
        %5680 = vmatpush1.bf16.msra.mxu0 %v5636
        %5681 = vmatprep.subr.bf16.mxu0 0
        %5682 = vmatpush1.bf16.msra.mxu0 %v5637
        %5683 = vmatprep.subr.bf16.mxu0 0
        %5684 = vmatpush1.bf16.msra.mxu0 %v5638
        %5685 = vmatprep.subr.bf16.mxu0 0
        %5686 = vmatpush1.bf16.msra.mxu0 %v5639
        %5687 = vmatprep.subr.bf16.mxu0 0
        %5688 = vmatpush1.bf16.msra.mxu0 %v5640
        %5689 = vmatprep.mubr.bf16.mxu0 %v5554
        %5690 = vmatmul.mubr.bf16.gmra.mrb[0].mxu0 %v5553
        %v5691 = vpop.f32.mrb[0].mxu0
        %v5692 = vadd.f32 %v5427, %v5691
        %v5693 = vpop.f32.mrb[0].mxu0
        %v5694 = vpop.f32.mrb[0].mxu0
        %v5695 = vadd.f32 %v5430, %v5694
        %v5696 = vpop.f32.mrb[0].mxu0
        %5697 = vmatprep.mubr.bf16.mxu0 %v5556
        %5698 = vmatmul.mubr.bf16.gmra.mrb[0].mxu0 %v5555
        %v5699 = vpop.f32.mrb[0].mxu0
        %v5700 = vadd.f32 %v5435, %v5699
        %v5701 = vpop.f32.mrb[0].mxu0
        %v5702 = vpop.f32.mrb[0].mxu0
        %v5703 = vadd.f32 %v5438, %v5702
        %v5704 = vpop.f32.mrb[0].mxu0
        %5705 = vdwg.mxu0
        %v5706 = vld [vmem:[%s8] sm:$0x1]
        %v5708 = vlaneseq
        %v5709 = vshrl.u32 %v5708, 7
        %v5710 = vsub.s32 0, %v5709
        %v5711 = vrot.slane %v5706, %v5710
        %v5713 = vadd.f32 %v5692, %v5711
        %v5714 = vadd.f32 %v5695, %v5711
        %v5715 = vadd.f32 %v5700, %v5711
        %v5716 = vadd.f32 %v5703, %v5711
        %v5717 = vmax.f32 %v5713, 0.0
        %v5718 = vmax.f32 %v5714, 0.0
        %v5719 = vmax.f32 %v5715, 0.0
        %v5720 = vmax.f32 %v5716, 0.0
        %v5721 = vpack.c.bf16 %v5718, %v5717
        %v5722 = vpack.c.bf16 %v5720, %v5719
        %v5723 = vld [vmem:[%s9] sm:$0xf]
        %v5724 = vld [vmem:[%s9 + $0x4] sm:$0xf]
        %v5725 = vld [vmem:[%s9 + $0x8] sm:$0xf]
        %v5726 = vld [vmem:[%s9 + $0xc] sm:$0xf]
        %v5727 = vld [vmem:[%s9 + $0x10] sm:$0xf]
        %v5728 = vld [vmem:[%s9 + $0x14] sm:$0xf]
        %v5729 = vld [vmem:[%s9 + $0x18] sm:$0xf]
        %v5730 = vld [vmem:[%s9 + $0x1c] sm:$0xf]
        %v5731 = vld [vmem:[%s10] sm:$0x1]
        %v5733 = vlaneseq
        %v5734 = vshrl.u32 %v5733, 7
        %v5735 = vsub.s32 0, %v5734
        %v5736 = vrot.slane %v5731, %v5735
        %v5746 = vunpack.c.l.b16 %v5723
        %v5747 = vunpack.c.l.b16 %v5724
        %v5748 = vunpack.c.l.b16 %v5725
        %v5749 = vunpack.c.l.b16 %v5726
        %v5750 = vunpack.c.l.b16 %v5727
        %v5751 = vunpack.c.l.b16 %v5728
        %v5752 = vunpack.c.l.b16 %v5729
        %v5753 = vunpack.c.l.b16 %v5730
        %v5754 = vpack.c.b16 %v5747, %v5746
        %v5755 = vpack.c.b16 %v5749, %v5748
        %v5756 = vpack.c.b16 %v5751, %v5750
        %v5757 = vpack.c.b16 %v5753, %v5752
        %v5763 = vsel %vm2253, %v5721, 0
        %v5766 = vsel %vm2253, %v5722, 0
        %5768 = vmatprep.subr.bf16.mxu0 0
        %5769 = vmatpush1.bf16.msra.mxu0 %v5754
        %5770 = vmatprep.subr.bf16.mxu0 0
        %5771 = vmatpush1.bf16.msra.mxu0 %v5755
        %5772 = vmatprep.subr.bf16.mxu0 0
        %5773 = vmatpush1.bf16.msra.mxu0 %v5756
        %5774 = vmatprep.subr.bf16.mxu0 0
        %5775 = vmatpush1.bf16.msra.mxu0 %v5757
        %5776 = vmatprep.subr.bf16.mxu0 0
        %5777 = vmatpush1.bf16.msra.mxu0 0
        %5778 = vmatprep.subr.bf16.mxu0 0
        %5779 = vmatpush1.bf16.msra.mxu0 0
        %5780 = vmatprep.subr.bf16.mxu0 0
        %5781 = vmatpush1.bf16.msra.mxu0 0
        %5782 = vmatprep.subr.bf16.mxu0 0
        %5783 = vmatpush1.bf16.msra.mxu0 0
        %5784 = vmatprep.subr.bf16.mxu0 0
        %5785 = vmatpush1.bf16.msra.mxu0 0
        %5786 = vmatprep.subr.bf16.mxu0 0
        %5787 = vmatpush1.bf16.msra.mxu0 0
        %5788 = vmatprep.subr.bf16.mxu0 0
        %5789 = vmatpush1.bf16.msra.mxu0 0
        %5790 = vmatprep.subr.bf16.mxu0 0
        %5791 = vmatpush1.bf16.msra.mxu0 0
        %5792 = vmatprep.subr.bf16.mxu0 0
        %5793 = vmatpush1.bf16.msra.mxu0 0
        %5794 = vmatprep.subr.bf16.mxu0 0
        %5795 = vmatpush1.bf16.msra.mxu0 0
        %5796 = vmatprep.subr.bf16.mxu0 0
        %5797 = vmatpush1.bf16.msra.mxu0 0
        %5798 = vmatprep.subr.bf16.mxu0 0
        %5799 = vmatpush1.bf16.msra.mxu0 0
        %5800 = vmatprep.mubr.bf16.mxu0 0
        %5801 = vmatmul.mubr.bf16.gmra.mrb[0].mxu0 %v5763
        %v5802 = vpop.f32.mrb[0].mxu0
        %v5803 = vadd.f32 %v5736, %v5802
        %v5804 = vpop.f32.mrb[0].mxu0
        %v5805 = vpop.f32.mrb[0].mxu0
        %v5806 = vadd.f32 %v5736, %v5805
        %v5807 = vpop.f32.mrb[0].mxu0
        %5808 = vmatprep.mubr.bf16.mxu0 0
        %5809 = vmatmul.mubr.bf16.gmra.mrb[0].mxu0 %v5766
        %v5810 = vpop.f32.mrb[0].mxu0
        %v5811 = vadd.f32 %v5736, %v5810
        %v5812 = vpop.f32.mrb[0].mxu0
        %v5813 = vpop.f32.mrb[0].mxu0
        %v5814 = vadd.f32 %v5736, %v5813
        %v5815 = vpop.f32.mrb[0].mxu0
        %5816 = vdwg.mxu0
        %5817 = vmax.xlane.f32.xlu0 %v5803
        %v5818 = vpop.xlane.xlu0 %5817
        %5819 = vmax.xlane.f32.xlu0 %v5806
        %v5820 = vpop.xlane.xlu0 %5819
        %5821 = vmax.xlane.f32.xlu0 %v5811
        %v5822 = vpop.xlane.xlu0 %5821
        %5823 = vmax.xlane.f32.xlu0 %v5814
        %v5824 = vpop.xlane.xlu0 %5823
        %v5825 = vsub.f32 %v5803, %v5818
        %v5826 = vsub.f32 %v5806, %v5820
        %v5827 = vsub.f32 %v5811, %v5822
        %v5828 = vsub.f32 %v5814, %v5824
        %v5829 = vmul.f32 %v5825, 1.442695
        %v5830 = vpow.pop %v5829
        %v5831 = vmul.f32 %v5826, 1.442695
        %v5832 = vpow.pop %v5831
        %v5833 = vmul.f32 %v5827, 1.442695
        %v5834 = vpow.pop %v5833
        %v5835 = vmul.f32 %v5828, 1.442695
        %v5836 = vpow.pop %v5835
        %5837 = vadd.xlane.f32.xlu0 %v5830
        %v5838 = vpop.xlane.xlu0 %5837
        %5839 = vadd.xlane.f32.xlu0 %v5832
        %v5840 = vpop.xlane.xlu0 %5839
        %5841 = vadd.xlane.f32.xlu0 %v5834
        %v5842 = vpop.xlane.xlu0 %5841
        %5843 = vadd.xlane.f32.xlu0 %v5836
        %v5844 = vpop.xlane.xlu0 %5843
        %v5845 = vrcp.pop %v5838
        %v5846 = vrcp.pop %v5840
        %v5847 = vrcp.pop %v5842
        %v5848 = vrcp.pop %v5844
        %v5849 = vmul.f32 %v5830, %v5845
        %v5850 = vmul.f32 %v5832, %v5846
        %v5851 = vmul.f32 %v5834, %v5847
        %v5852 = vmul.f32 %v5836, %v5848
        %5853 = vst [vmem:[%s434] sm:$0xff] %v5849
        %5854 = vst [vmem:[%s434 + $0x8] sm:$0xff] %v5850
        %5855 = vst [vmem:[%s434 + $0x10] sm:$0xff] %v5851
        %5856 = vst [vmem:[%s434 + $0x18] sm:$0xff] %v5852
        %s5857 = sand.u32 %s313, 1
        %s5858 = scalar_lea.sflag [#allocation3], %s5857
        %s5859 = sand.u32 %s313, 1
        %s5860 = smul.addr %s5859, 32
        %s5861 = scalar_lea.vmem [#allocation2], %s5860
        // Predicated region
        $region73: #{tpu_custom_call.1} parent=71 // pred_check
          %p5862 = pneg %p323
        $region74: #{tpu_custom_call.1} parent=71 // pred_check_branch
          %5864 = sbr.rel (%p5862) target = $region76
        $region75: #{tpu_custom_call.1} parent=71 // pred_region
          %s5865 = smul.u32 4, %s27
          %s5867 = ssub.s32 512, 512
          %5868 = vsyncadd %s5858, %s5867
          %s5869 = smul.addr %s5865, 128
          %s5870 = scalar_lea.hbm %s13, %s5869
          %s5871 = sshll.u32 %s5861, 4
          %s5872 = int_to_ptr.vmem [resolvable:$true] %s5871
          %5877 = dma.vmem_to_hbm [thread:$0]  %s5872, 512, %s5870, %s5858, 128, 128, 8
        $region76: #{tpu_custom_call.1} parent=71 // pred_fallthru
          _
      $region72: #{tpu_custom_call.1} parent=5 // pred_fallthru
        _
      %p5878 = scmp.le.s32.totalorder 2, %s22
      // Predicated region
      $region77: #{tpu_custom_call.1} parent=5 // pred_check
        %p5879 = pneg %p5878
      $region78: #{tpu_custom_call.1} parent=5 // pred_check_branch
        %5881 = sbr.rel (%p5879) target = $region80
      $region79: #{tpu_custom_call.1} parent=5 // pred_region
        %s5882 = ssub.s32 %s22, 2
        // Predicated region
        $region81: #{tpu_custom_call.1} parent=79 // pred_check
          %p5883 = pneg %p329
        $region82: #{tpu_custom_call.1} parent=79 // pred_check_branch
          %5885 = sbr.rel (%p5883) target = $region84
        $region83: #{tpu_custom_call.1} parent=79 // pred_region
          %s5886 = sand.u32 %s314, 1
          %s5887 = scalar_lea.sflag [#allocation3], %s5886
          %s5888 = sand.u32 %s314, 1
          %s5889 = smul.addr %s5888, 32
          %s5890 = scalar_lea.vmem [#allocation2], %s5889
          %5891 = dma.done %s5887, 512
        $region84: #{tpu_custom_call.1} parent=79 // pred_fallthru
          _
      $region80: #{tpu_custom_call.1} parent=5 // pred_fallthru
        _
    $region6: #{tpu_custom_call.1} parent=1 // loop_footer
      %s26 = sadd.s32 1, %s22
    $region7: #{tpu_custom_call.1} parent=1 // loop_footer_branch
      %21 = sbr.rel target = $region3
    $region8: #{tpu_custom_call.1} parent=1 // loop_exit
      _
    %5892 = vsyncpa [#allocation3], 1
    %s5893 = scalar_lea.sflag [#allocation3], 1
    %5894 = vsyncpa %s5893, 1

</llo_original>
